<compile_context>
chip_gen: v7x
topology: tpu7x:2x2x1
jax: 0.10.0
libtpu: 0.0.40
codegen_flags: <defaults>
</compile_context>

<pallas_src>
import functools

import jax
import jax.numpy as jnp
from jax.experimental import pallas as pl
from jax.experimental.pallas import tpu as pltpu

LANE = 128  # TPU lane width; channel dims are zero-padded to this.


# ------------------------------ Pallas kernel ------------------------------ #

def _fused_conv3x3_kernel(x_ref, w_ref, b_ref, o_ref, *, H, W, apply_relu):
    """Fused 3x3 SAME conv + bias + (optional) ReLU for one image.

    x_ref: (H+2, W+2, LANE)  spatially + channel padded input tile (VMEM)
    w_ref: (9, LANE, LANE)   tap-major weights, channel padded (VMEM, resident)
    b_ref: (1, LANE)         channel-padded bias (VMEM)
    o_ref: (H*W, LANE)       lane-dense output slab (VMEM)
    """
    cp = o_ref.shape[-1]
    # Bias folded into the accumulator init; broadcast hoisted out of the loop.
    acc = jnp.broadcast_to(b_ref[...], (H * W, cp)).astype(jnp.float32)
    # In-kernel im2col: 9 shifted windows of the padded tile, one MXU dot each.
    for kh in range(3):
        for kw in range(3):
            win = x_ref[kh:kh + H, kw:kw + W, :]              # (H, W, cp)
            acc = acc + jnp.dot(win.reshape(H * W, cp),
                                w_ref[kh * 3 + kw],
                                preferred_element_type=jnp.float32)
    if apply_relu:
        acc = jnp.maximum(acc, 0.0)                           # free VPU epilogue
    o_ref[...] = acc.astype(o_ref.dtype)                      # full-width store


def _conv3x3_pallas(xp, w9, bp, *, H, W, apply_relu):
    """xp: (N, H+2, W+2, LANE) padded input -> (N, H*W, LANE) f32 output."""
    N = xp.shape[0]
    cp = xp.shape[-1]
    kernel = functools.partial(_fused_conv3x3_kernel, H=H, W=W,
                               apply_relu=apply_relu)
    return pl.pallas_call(
        kernel,
        out_shape=jax.ShapeDtypeStruct((N, H * W, cp), jnp.float32),
        grid=(N,),
        in_specs=[
            # one image per grid step (batch dim squeezed out of the kernel)
            pl.BlockSpec((None, H + 2, W + 2, cp), lambda n: (n, 0, 0, 0)),
            # constant index maps: weights / bias fetched once, stay resident
            pl.BlockSpec((9, cp, cp), lambda n: (0, 0, 0)),
            pl.BlockSpec((1, cp), lambda n: (0, 0)),
        ],
        out_specs=pl.BlockSpec((None, H * W, cp), lambda n: (n, 0, 0)),
        compiler_params=pltpu.CompilerParams(
            dimension_semantics=("parallel",)),   # shards over v7x's 2 TCs
    )(xp, w9, bp)


# ------------------------------ layer factory ------------------------------ #

def make_conv2d_3x3_same(w_hwio, b, *, apply_relu):
    """nn.Conv2d(Cin, Cout, 3, padding=1) (+ optional fused ReLU), NHWC.

    Parameters are channel-padded to the 128-lane width ONCE at construction
    time (not in the forward).  w_hwio: (3, 3, Cin, Cout), b: (Cout,).
    """
    kh, kw, cin, cout = w_hwio.shape
    assert (kh, kw) == (3, 3) and cin <= LANE and cout <= LANE
    w9 = jnp.zeros((9, LANE, LANE), jnp.float32)
    w9 = w9.at[:, :cin, :cout].set(
        w_hwio.reshape(9, cin, cout).astype(jnp.float32))
    bp = jnp.zeros((1, LANE), jnp.float32).at[0, :cout].set(
        b.astype(jnp.float32))

    def apply(x_nhwc):
        n, h, w_, c = x_nhwc.shape
        assert c == cin, (c, cin)
        # Single fused pad: spatial halo for SAME conv + channel pad to LANE.
        xp = jnp.pad(x_nhwc.astype(jnp.float32),
                     ((0, 0), (1, 1), (1, 1), (0, LANE - c)))
        out = _conv3x3_pallas(xp, w9, bp, H=h, W=w_, apply_relu=apply_relu)
        # Lane-dense kernel output -> real channels (cheap fused XLA slice).
        return out.reshape(n, h, w_, LANE)[..., :cout]

    return apply


# ------------------------------- Intermediary ------------------------------ #

class Intermediary:
    """Catches and returns outputs of target layers of a sequential stack.

    Layer iteration / early break is host-side Python control flow, exactly
    mirroring the PyTorch forward.  `.clone()` is a no-op for immutable JAX
    arrays, so appending the array itself preserves semantics.
    """

    def __init__(self, layers, targets):
        self.layers = list(layers)
        self.targets = set(targets)

    def __call__(self, x):
        output = []
        for i, layer in enumerate(self.layers):
            x = layer(x)
            if i in self.targets:
                output.append(x)
            if len(output) == len(self.targets):
                break
        return output


# ---------------------------------- main ----------------------------------- #

if __name__ == "__main__":
    key = jax.random.PRNGKey(0)
    kx, k0, k1, k2, kb0, kb1, kb2 = jax.random.split(key, 7)

    N, Cin, H, W = 2, 4, 16, 16
    C1, C2, C3 = 8, 8, 16

    # PyTorch-style NCHW input.
    x_nchw = jax.random.normal(kx, (N, Cin, H, W), jnp.float32)

    # Deterministic synthetic parameters (HWIO layout for the kernels).
    w0 = jax.random.normal(k0, (3, 3, Cin, C1), jnp.float32) * 0.1
    b0 = jax.random.normal(kb0, (C1,), jnp.float32) * 0.1
    w1 = jax.random.normal(k1, (3, 3, C1, C2), jnp.float32) * 0.1
    b1 = jax.random.normal(kb1, (C2,), jnp.float32) * 0.1
    w2 = jax.random.normal(k2, (3, 3, C2, C3), jnp.float32) * 0.1
    b2 = jax.random.normal(kb2, (C3,), jnp.float32) * 0.1

    layers = [
        make_conv2d_3x3_same(w0, b0, apply_relu=True),   # 0: conv0+ReLU <- target
        make_conv2d_3x3_same(w1, b1, apply_relu=True),   # 1: conv1+ReLU <- target
        make_conv2d_3x3_same(w2, b2, apply_relu=False),  # 2: conv2 (never runs)
    ]
    model = Intermediary(layers, targets=[0, 1])

    def forward_nchw(x):
        x_nhwc = jnp.transpose(x, (0, 2, 3, 1))               # NCHW -> NHWC
        outs = model(x_nhwc)
        return [jnp.transpose(o, (0, 3, 1, 2)) for o in outs]  # back to NCHW

    forward = jax.jit(forward_nchw)   # fuses all edge glue around the 2 kernels
    outs_nchw = forward(x_nchw)
    jax.block_until_ready(outs_nchw)

    # Pure-JAX reference (XLA conv) for correctness.
    def ref_conv(x, w, b):
        y = jax.lax.conv_general_dilated(
            x, w, window_strides=(1, 1), padding="SAME",
            dimension_numbers=("NHWC", "HWIO", "NHWC"))
        return y + b.reshape(1, 1, 1, -1)

    x_nhwc = jnp.transpose(x_nchw, (0, 2, 3, 1))
    r = x_nhwc
    refs = []
    r = jnp.maximum(ref_conv(r, w0, b0), 0.0); refs.append(r)   # original layer 1
    r = jnp.maximum(ref_conv(r, w1, b1), 0.0); refs.append(r)   # original layer 3
    refs_nchw = [jnp.transpose(t, (0, 3, 1, 2)) for t in refs]

    assert len(outs_nchw) == 2
    for got, want in zip(outs_nchw, refs_nchw):
        assert got.shape == want.shape, (got.shape, want.shape)
        assert got.dtype == want.dtype, (got.dtype, want.dtype)
        assert jnp.allclose(got, want, atol=5e-3, rtol=5e-3), (
            float(jnp.max(jnp.abs(got - want))))

    print("KERNEL_OK")
</pallas_src>

<mosaic_0001>
module attributes {stable_mosaic.version = 11 : i64} {
  func.func @_fused_conv3x3_kernel(%arg0: i32, %arg1: memref<1x18x18x128xf32, #tpu.memory_space<vmem>>, %arg2: memref<9x128x128xf32, #tpu.memory_space<vmem>>, %arg3: memref<1x128xf32, #tpu.memory_space<vmem>>, %arg4: memref<1x256x128xf32, #tpu.memory_space<vmem>>) attributes {dimension_semantics = [#tpu.dimension_semantics<parallel>], iteration_bounds = array<i64: 2>, scalar_prefetch = 0 : i64, scratch_operands = 0 : i64, tpu.core_type = #tpu.core_type<tc>, window_params = [{transform_indices = @transform_0, window_bounds = array<i64: 1, 18, 18, 128>}, {pipeline_mode = #tpu.pipeline_mode<synchronous>, transform_indices = @transform_1, window_bounds = array<i64: 9, 128, 128>}, {pipeline_mode = #tpu.pipeline_mode<synchronous>, transform_indices = @transform_2, window_bounds = array<i64: 1, 128>}, {transform_indices = @transform_3, window_bounds = array<i64: 1, 256, 128>}]} {
    %c0 = arith.constant 0 : index
    %c0_0 = arith.constant 0 : index
    %0 = vector.load %arg3[%c0, %c0_0] : memref<1x128xf32, #tpu.memory_space<vmem>>, vector<1x128xf32>
    %1 = vector.shape_cast %0 : vector<1x128xf32> to vector<1x128xf32>
    %2 = vector.broadcast %1 : vector<1x128xf32> to vector<256x128xf32>
    %c0_1 = arith.constant 0 : index
    %c0_2 = arith.constant 0 : index
    %c0_3 = arith.constant 0 : index
    %c0_4 = arith.constant 0 : index
    %3 = vector.load %arg1[%c0_1, %c0_2, %c0_3, %c0_4] : memref<1x18x18x128xf32, #tpu.memory_space<vmem>>, vector<1x16x16x128xf32>
    %4 = vector.shape_cast %3 : vector<1x16x16x128xf32> to vector<16x16x128xf32>
    %5 = vector.shape_cast %4 : vector<16x16x128xf32> to vector<256x128xf32>
    %c0_5 = arith.constant 0 : index
    %c0_6 = arith.constant 0 : index
    %c0_7 = arith.constant 0 : index
    %6 = vector.load %arg2[%c0_5, %c0_6, %c0_7] : memref<9x128x128xf32, #tpu.memory_space<vmem>>, vector<1x128x128xf32>
    %7 = vector.shape_cast %6 : vector<1x128x128xf32> to vector<128x128xf32>
    %cst = arith.constant dense<0.000000e+00> : vector<256x128xf32>
    %8 = tpu.matmul %5, %7, %cst {dimension_numbers = #tpu.dot_dimension_numbers<[1], [0], [0], [1], [0, 0, 1, 1], [], []>} : vector<256x128xf32>, vector<128x128xf32>, vector<256x128xf32> -> vector<256x128xf32>
    %9 = arith.addf %2, %8 : vector<256x128xf32>
    %c0_8 = arith.constant 0 : index
    %c0_9 = arith.constant 0 : index
    %c1 = arith.constant 1 : index
    %c0_10 = arith.constant 0 : index
    %10 = vector.load %arg1[%c0_8, %c0_9, %c1, %c0_10] : memref<1x18x18x128xf32, #tpu.memory_space<vmem>>, vector<1x16x16x128xf32>
    %11 = vector.shape_cast %10 : vector<1x16x16x128xf32> to vector<16x16x128xf32>
    %12 = vector.shape_cast %11 : vector<16x16x128xf32> to vector<256x128xf32>
    %c1_11 = arith.constant 1 : index
    %c0_12 = arith.constant 0 : index
    %c0_13 = arith.constant 0 : index
    %13 = vector.load %arg2[%c1_11, %c0_12, %c0_13] : memref<9x128x128xf32, #tpu.memory_space<vmem>>, vector<1x128x128xf32>
    %14 = vector.shape_cast %13 : vector<1x128x128xf32> to vector<128x128xf32>
    %cst_14 = arith.constant dense<0.000000e+00> : vector<256x128xf32>
    %15 = tpu.matmul %12, %14, %cst_14 {dimension_numbers = #tpu.dot_dimension_numbers<[1], [0], [0], [1], [0, 0, 1, 1], [], []>} : vector<256x128xf32>, vector<128x128xf32>, vector<256x128xf32> -> vector<256x128xf32>
    %16 = arith.addf %9, %15 : vector<256x128xf32>
    %c0_15 = arith.constant 0 : index
    %c0_16 = arith.constant 0 : index
    %c2 = arith.constant 2 : index
    %c0_17 = arith.constant 0 : index
    %17 = vector.load %arg1[%c0_15, %c0_16, %c2, %c0_17] : memref<1x18x18x128xf32, #tpu.memory_space<vmem>>, vector<1x16x16x128xf32>
    %18 = vector.shape_cast %17 : vector<1x16x16x128xf32> to vector<16x16x128xf32>
    %19 = vector.shape_cast %18 : vector<16x16x128xf32> to vector<256x128xf32>
    %c2_18 = arith.constant 2 : index
    %c0_19 = arith.constant 0 : index
    %c0_20 = arith.constant 0 : index
    %20 = vector.load %arg2[%c2_18, %c0_19, %c0_20] : memref<9x128x128xf32, #tpu.memory_space<vmem>>, vector<1x128x128xf32>
    %21 = vector.shape_cast %20 : vector<1x128x128xf32> to vector<128x128xf32>
    %cst_21 = arith.constant dense<0.000000e+00> : vector<256x128xf32>
    %22 = tpu.matmul %19, %21, %cst_21 {dimension_numbers = #tpu.dot_dimension_numbers<[1], [0], [0], [1], [0, 0, 1, 1], [], []>} : vector<256x128xf32>, vector<128x128xf32>, vector<256x128xf32> -> vector<256x128xf32>
    %23 = arith.addf %16, %22 : vector<256x128xf32>
    %c0_22 = arith.constant 0 : index
    %c1_23 = arith.constant 1 : index
    %c0_24 = arith.constant 0 : index
    %c0_25 = arith.constant 0 : index
    %24 = vector.load %arg1[%c0_22, %c1_23, %c0_24, %c0_25] : memref<1x18x18x128xf32, #tpu.memory_space<vmem>>, vector<1x16x16x128xf32>
    %25 = vector.shape_cast %24 : vector<1x16x16x128xf32> to vector<16x16x128xf32>
    %26 = vector.shape_cast %25 : vector<16x16x128xf32> to vector<256x128xf32>
    %c3 = arith.constant 3 : index
    %c0_26 = arith.constant 0 : index
    %c0_27 = arith.constant 0 : index
    %27 = vector.load %arg2[%c3, %c0_26, %c0_27] : memref<9x128x128xf32, #tpu.memory_space<vmem>>, vector<1x128x128xf32>
    %28 = vector.shape_cast %27 : vector<1x128x128xf32> to vector<128x128xf32>
    %cst_28 = arith.constant dense<0.000000e+00> : vector<256x128xf32>
    %29 = tpu.matmul %26, %28, %cst_28 {dimension_numbers = #tpu.dot_dimension_numbers<[1], [0], [0], [1], [0, 0, 1, 1], [], []>} : vector<256x128xf32>, vector<128x128xf32>, vector<256x128xf32> -> vector<256x128xf32>
    %30 = arith.addf %23, %29 : vector<256x128xf32>
    %c0_29 = arith.constant 0 : index
    %c1_30 = arith.constant 1 : index
    %c1_31 = arith.constant 1 : index
    %c0_32 = arith.constant 0 : index
    %31 = vector.load %arg1[%c0_29, %c1_30, %c1_31, %c0_32] : memref<1x18x18x128xf32, #tpu.memory_space<vmem>>, vector<1x16x16x128xf32>
    %32 = vector.shape_cast %31 : vector<1x16x16x128xf32> to vector<16x16x128xf32>
    %33 = vector.shape_cast %32 : vector<16x16x128xf32> to vector<256x128xf32>
    %c4 = arith.constant 4 : index
    %c0_33 = arith.constant 0 : index
    %c0_34 = arith.constant 0 : index
    %34 = vector.load %arg2[%c4, %c0_33, %c0_34] : memref<9x128x128xf32, #tpu.memory_space<vmem>>, vector<1x128x128xf32>
    %35 = vector.shape_cast %34 : vector<1x128x128xf32> to vector<128x128xf32>
    %cst_35 = arith.constant dense<0.000000e+00> : vector<256x128xf32>
    %36 = tpu.matmul %33, %35, %cst_35 {dimension_numbers = #tpu.dot_dimension_numbers<[1], [0], [0], [1], [0, 0, 1, 1], [], []>} : vector<256x128xf32>, vector<128x128xf32>, vector<256x128xf32> -> vector<256x128xf32>
    %37 = arith.addf %30, %36 : vector<256x128xf32>
    %c0_36 = arith.constant 0 : index
    %c1_37 = arith.constant 1 : index
    %c2_38 = arith.constant 2 : index
    %c0_39 = arith.constant 0 : index
    %38 = vector.load %arg1[%c0_36, %c1_37, %c2_38, %c0_39] : memref<1x18x18x128xf32, #tpu.memory_space<vmem>>, vector<1x16x16x128xf32>
    %39 = vector.shape_cast %38 : vector<1x16x16x128xf32> to vector<16x16x128xf32>
    %40 = vector.shape_cast %39 : vector<16x16x128xf32> to vector<256x128xf32>
    %c5 = arith.constant 5 : index
    %c0_40 = arith.constant 0 : index
    %c0_41 = arith.constant 0 : index
    %41 = vector.load %arg2[%c5, %c0_40, %c0_41] : memref<9x128x128xf32, #tpu.memory_space<vmem>>, vector<1x128x128xf32>
    %42 = vector.shape_cast %41 : vector<1x128x128xf32> to vector<128x128xf32>
    %cst_42 = arith.constant dense<0.000000e+00> : vector<256x128xf32>
    %43 = tpu.matmul %40, %42, %cst_42 {dimension_numbers = #tpu.dot_dimension_numbers<[1], [0], [0], [1], [0, 0, 1, 1], [], []>} : vector<256x128xf32>, vector<128x128xf32>, vector<256x128xf32> -> vector<256x128xf32>
    %44 = arith.addf %37, %43 : vector<256x128xf32>
    %c0_43 = arith.constant 0 : index
    %c2_44 = arith.constant 2 : index
    %c0_45 = arith.constant 0 : index
    %c0_46 = arith.constant 0 : index
    %45 = vector.load %arg1[%c0_43, %c2_44, %c0_45, %c0_46] : memref<1x18x18x128xf32, #tpu.memory_space<vmem>>, vector<1x16x16x128xf32>
    %46 = vector.shape_cast %45 : vector<1x16x16x128xf32> to vector<16x16x128xf32>
    %47 = vector.shape_cast %46 : vector<16x16x128xf32> to vector<256x128xf32>
    %c6 = arith.constant 6 : index
    %c0_47 = arith.constant 0 : index
    %c0_48 = arith.constant 0 : index
    %48 = vector.load %arg2[%c6, %c0_47, %c0_48] : memref<9x128x128xf32, #tpu.memory_space<vmem>>, vector<1x128x128xf32>
    %49 = vector.shape_cast %48 : vector<1x128x128xf32> to vector<128x128xf32>
    %cst_49 = arith.constant dense<0.000000e+00> : vector<256x128xf32>
    %50 = tpu.matmul %47, %49, %cst_49 {dimension_numbers = #tpu.dot_dimension_numbers<[1], [0], [0], [1], [0, 0, 1, 1], [], []>} : vector<256x128xf32>, vector<128x128xf32>, vector<256x128xf32> -> vector<256x128xf32>
    %51 = arith.addf %44, %50 : vector<256x128xf32>
    %c0_50 = arith.constant 0 : index
    %c2_51 = arith.constant 2 : index
    %c1_52 = arith.constant 1 : index
    %c0_53 = arith.constant 0 : index
    %52 = vector.load %arg1[%c0_50, %c2_51, %c1_52, %c0_53] : memref<1x18x18x128xf32, #tpu.memory_space<vmem>>, vector<1x16x16x128xf32>
    %53 = vector.shape_cast %52 : vector<1x16x16x128xf32> to vector<16x16x128xf32>
    %54 = vector.shape_cast %53 : vector<16x16x128xf32> to vector<256x128xf32>
    %c7 = arith.constant 7 : index
    %c0_54 = arith.constant 0 : index
    %c0_55 = arith.constant 0 : index
    %55 = vector.load %arg2[%c7, %c0_54, %c0_55] : memref<9x128x128xf32, #tpu.memory_space<vmem>>, vector<1x128x128xf32>
    %56 = vector.shape_cast %55 : vector<1x128x128xf32> to vector<128x128xf32>
    %cst_56 = arith.constant dense<0.000000e+00> : vector<256x128xf32>
    %57 = tpu.matmul %54, %56, %cst_56 {dimension_numbers = #tpu.dot_dimension_numbers<[1], [0], [0], [1], [0, 0, 1, 1], [], []>} : vector<256x128xf32>, vector<128x128xf32>, vector<256x128xf32> -> vector<256x128xf32>
    %58 = arith.addf %51, %57 : vector<256x128xf32>
    %c0_57 = arith.constant 0 : index
    %c2_58 = arith.constant 2 : index
    %c2_59 = arith.constant 2 : index
    %c0_60 = arith.constant 0 : index
    %59 = vector.load %arg1[%c0_57, %c2_58, %c2_59, %c0_60] : memref<1x18x18x128xf32, #tpu.memory_space<vmem>>, vector<1x16x16x128xf32>
    %60 = vector.shape_cast %59 : vector<1x16x16x128xf32> to vector<16x16x128xf32>
    %61 = vector.shape_cast %60 : vector<16x16x128xf32> to vector<256x128xf32>
    %c8 = arith.constant 8 : index
    %c0_61 = arith.constant 0 : index
    %c0_62 = arith.constant 0 : index
    %62 = vector.load %arg2[%c8, %c0_61, %c0_62] : memref<9x128x128xf32, #tpu.memory_space<vmem>>, vector<1x128x128xf32>
    %63 = vector.shape_cast %62 : vector<1x128x128xf32> to vector<128x128xf32>
    %cst_63 = arith.constant dense<0.000000e+00> : vector<256x128xf32>
    %64 = tpu.matmul %61, %63, %cst_63 {dimension_numbers = #tpu.dot_dimension_numbers<[1], [0], [0], [1], [0, 0, 1, 1], [], []>} : vector<256x128xf32>, vector<128x128xf32>, vector<256x128xf32> -> vector<256x128xf32>
    %65 = arith.addf %58, %64 : vector<256x128xf32>
    %cst_64 = arith.constant 0.000000e+00 : f32
    %66 = vector.broadcast %cst_64 : f32 to vector<256x128xf32>
    %67 = arith.maximumf %65, %66 : vector<256x128xf32>
    %c0_65 = arith.constant 0 : index
    %c0_66 = arith.constant 0 : index
    %c0_67 = arith.constant 0 : index
    %68 = vector.load %arg4[%c0_65, %c0_66, %c0_67] : memref<1x256x128xf32, #tpu.memory_space<vmem>>, vector<1x256x128xf32>
    %69 = vector.shape_cast %68 : vector<1x256x128xf32> to vector<256x128xf32>
    %70 = vector.shape_cast %67 : vector<256x128xf32> to vector<1x256x128xf32>
    tpu.vector_store %arg4[%c0_65, %c0_66, %c0_67], %70 {strides = array<i32>} : memref<1x256x128xf32, #tpu.memory_space<vmem>>, vector<1x256x128xf32>,
    return
  }
  func.func @transform_0(%arg0: i32) -> (i32, i32, i32, i32) {
    %c0_i32 = arith.constant 0 : i32
    %c0_i32_0 = arith.constant 0 : i32
    %c0_i32_1 = arith.constant 0 : i32
    %c0_i32_2 = arith.constant 0 : i32
    return %arg0, %c0_i32, %c0_i32_0, %c0_i32_1 : i32, i32, i32, i32
  }
  func.func @transform_1(%arg0: i32) -> (i32, i32, i32) {
    %c0_i32 = arith.constant 0 : i32
    %c0_i32_0 = arith.constant 0 : i32
    %c0_i32_1 = arith.constant 0 : i32
    %c0_i32_2 = arith.constant 0 : i32
    return %c0_i32, %c0_i32_0, %c0_i32_1 : i32, i32, i32
  }
  func.func @transform_2(%arg0: i32) -> (i32, i32) {
    %c0_i32 = arith.constant 0 : i32
    %c0_i32_0 = arith.constant 0 : i32
    %c0_i32_1 = arith.constant 0 : i32
    return %c0_i32, %c0_i32_0 : i32, i32
  }
  func.func @transform_3(%arg0: i32) -> (i32, i32, i32) {
    %c0_i32 = arith.constant 0 : i32
    %c0_i32_0 = arith.constant 0 : i32
    %c0_i32_1 = arith.constant 0 : i32
    return %arg0, %c0_i32, %c0_i32_0 : i32, i32, i32
  }
}

</mosaic_0001>

<llo_original>
// kernel: forward_nchw.2
$region0: #{forward_nchw.2}
  #allocation0 [shape = 'u32[]', space=smem, size = 0x4, offset = 0x4, fixed_abs, tag = 'smem constant byte address 0x4 - core index']
  #allocation1 [shape = 'u32[144,128]{1,0:T(1,128)}', space=vmem, size = 0x12000, scoped, tag = 'internal scratch']
  %s0 = inlined_call_operand.vmem [shape: f32[2,18,18,128], index: 0, kind: input, shape index: {}]
  %s1 = inlined_call_operand.vmem [shape: f32[9,128,128], index: 1, kind: input, shape index: {}]
  %s2 = inlined_call_operand.vmem [shape: f32[1,128], index: 2, kind: input, shape index: {}]
  %s3 = inlined_call_operand.vmem [shape: f32[2,256,128], index: 3, kind: output, shape index: {}]
  %s4 = sld [smem:[#allocation0]]
  $region45: #{forward_nchw.2} parent=0
    _
  %s6 = ssub.s32 1, %s4
  %s7 = scalar_select 0, %s6, %s4
  loop: start=0, step=1, limit=4
  $region2: #{forward_nchw.2} parent=0 // loop_pre_header
    _
  $region3: #{forward_nchw.2} parent=0 // loop_header
    %s9 = sphi 0, %s13
    %p10 = scmp.ge.s32.totalorder %s9, 4
    %s19 = sphi 0, %s21
    %s22 = sphi 0, %s19
    %s23 = sphi 0, %s22
    %s39 = sphi 0, %s23
    %s43 = sphi 0, %s43
    %s45 = sphi 0, %s43
    %s46 = sphi 0, %s45
    %s60 = sphi 0, %s46
    %s64 = sphi 0, %s64
    %s66 = sphi 0, %s64
    %s67 = sphi 0, %s66
    %s81 = sphi 0, %s67
    %s87 = sphi 0, %s89
    %s90 = sphi 0, %s87
    %s91 = sphi 0, %s90
    %s107 = sphi 0, %s91
  $region4: #{forward_nchw.2} parent=0 // loop_header_branch
    %12 = sbr.rel (%p10) target = $region8
  $region5: #{forward_nchw.2} parent=0 // loop_body
    %s14 = ssub.s32 %s9, 1
    %s15 = ssub.s32 %s9, 2
    %s16 = sadd.s32 %s9, 1
    %s17 = ssub.s32 %s9, %s16
    %p18 = scmp.eq.s32.totalorder %s17, 0
    %s20 = sadd.s32 %s19, 1
    %s21 = scalar_select %p18, %s19, %s20
    %p24 = pneg %p18
    %p25 = scmp.eq.s32.totalorder %s9, 1
    %p26 = por %p24, %p25
    %p27 = scmp.ne.s32.totalorder %s19, %s22
    %p28 = scmp.eq.s32.totalorder %s9, 0
    %p29 = por %p27, %p28
    %p30 = scmp.ne.s32.totalorder %s19, %s22
    %p31 = scmp.eq.s32.totalorder %s14, 1
    %p32 = por %p30, %p31
    %p33 = scmp.ne.s32.totalorder %s22, %s23
    %p34 = scmp.eq.s32.totalorder %s14, 0
    %p35 = por %p33, %p34
    %p36 = scmp.ne.s32.totalorder %s22, %s23
    %p37 = scmp.eq.s32.totalorder %s15, 1
    %p38 = por %p36, %p37
    %p40 = scmp.ne.s32.totalorder %s23, %s39
    %p41 = scmp.eq.s32.totalorder %s15, 0
    %p42 = por %p40, %p41
    %s44 = sadd.s32 %s43, 1
    %p47 = scmp.eq.s32.totalorder %s9, 1
    %p48 = scmp.ne.s32.totalorder %s43, %s45
    %p49 = scmp.eq.s32.totalorder %s9, 0
    %p50 = por %p48, %p49
    %p51 = scmp.ne.s32.totalorder %s43, %s45
    %p52 = scmp.eq.s32.totalorder %s14, 1
    %p53 = por %p51, %p52
    %p54 = scmp.ne.s32.totalorder %s45, %s46
    %p55 = scmp.eq.s32.totalorder %s14, 0
    %p56 = por %p54, %p55
    %p57 = scmp.ne.s32.totalorder %s45, %s46
    %p58 = scmp.eq.s32.totalorder %s15, 1
    %p59 = por %p57, %p58
    %p61 = scmp.ne.s32.totalorder %s46, %s60
    %p62 = scmp.eq.s32.totalorder %s15, 0
    %p63 = por %p61, %p62
    %s65 = sadd.s32 %s64, 1
    %p68 = scmp.eq.s32.totalorder %s9, 1
    %p69 = scmp.ne.s32.totalorder %s64, %s66
    %p70 = scmp.eq.s32.totalorder %s9, 0
    %p71 = por %p69, %p70
    %p72 = scmp.ne.s32.totalorder %s64, %s66
    %p73 = scmp.eq.s32.totalorder %s14, 1
    %p74 = por %p72, %p73
    %p75 = scmp.ne.s32.totalorder %s66, %s67
    %p76 = scmp.eq.s32.totalorder %s14, 0
    %p77 = por %p75, %p76
    %p78 = scmp.ne.s32.totalorder %s66, %s67
    %p79 = scmp.eq.s32.totalorder %s15, 1
    %p80 = por %p78, %p79
    %p82 = scmp.ne.s32.totalorder %s67, %s81
    %p83 = scmp.eq.s32.totalorder %s15, 0
    %p84 = por %p82, %p83
    %s85 = ssub.s32 %s9, %s16
    %p86 = scmp.eq.s32.totalorder %s85, 0
    %s88 = sadd.s32 %s87, 1
    %s89 = scalar_select %p86, %s87, %s88
    %p92 = pneg %p86
    %p93 = scmp.eq.s32.totalorder %s9, 1
    %p94 = por %p92, %p93
    %p95 = scmp.ne.s32.totalorder %s87, %s90
    %p96 = scmp.eq.s32.totalorder %s9, 0
    %p97 = por %p95, %p96
    %p98 = scmp.ne.s32.totalorder %s87, %s90
    %p99 = scmp.eq.s32.totalorder %s14, 1
    %p100 = por %p98, %p99
    %p101 = scmp.ne.s32.totalorder %s90, %s91
    %p102 = scmp.eq.s32.totalorder %s14, 0
    %p103 = por %p101, %p102
    %p104 = scmp.ne.s32.totalorder %s90, %s91
    %p105 = scmp.eq.s32.totalorder %s15, 1
    %p106 = por %p104, %p105
    %p108 = scmp.ne.s32.totalorder %s91, %s107
    %p109 = scmp.eq.s32.totalorder %s15, 0
    %p110 = por %p108, %p109
    %p111 = scmp.le.s32.totalorder 1, %s9
    %p112 = scmp.lt.s32.totalorder %s9, 3
    %p113 = pnand %p111, %p112
    %p114 = pneg %p113
    // Predicated region
    $region9: #{forward_nchw.2} parent=5 // pred_check
      _
    $region10: #{forward_nchw.2} parent=5 // pred_check_branch
      %116 = sbr.rel (%p113) target = $region12
    $region11: #{forward_nchw.2} parent=5 // pred_region
      %s117 = ssub.s32 %s9, 1
      // Predicated region
      $region13: #{forward_nchw.2} parent=11 // pred_check
        %p118 = pneg %p56
      $region14: #{forward_nchw.2} parent=11 // pred_check_branch
        %120 = sbr.rel (%p118) target = $region16
      $region15: #{forward_nchw.2} parent=11 // pred_region
        _
      $region16: #{forward_nchw.2} parent=11 // pred_fallthru
        _
      // Predicated region
      $region17: #{forward_nchw.2} parent=11 // pred_check
        %p121 = pneg %p77
      $region18: #{forward_nchw.2} parent=11 // pred_check_branch
        %123 = sbr.rel (%p121) target = $region20
      $region19: #{forward_nchw.2} parent=11 // pred_region
        _
      $region20: #{forward_nchw.2} parent=11 // pred_fallthru
        _
    $region12: #{forward_nchw.2} parent=5 // pred_fallthru
      _
    %p124 = scmp.lt.s32.totalorder %s9, 2
    // Predicated region
    $region21: #{forward_nchw.2} parent=5 // pred_check
      %p125 = pneg %p124
    $region22: #{forward_nchw.2} parent=5 // pred_check_branch
      %127 = sbr.rel (%p125) target = $region24
    $region23: #{forward_nchw.2} parent=5 // pred_region
      // Predicated region
      $region25: #{forward_nchw.2} parent=23 // pred_check
        %p128 = pneg %p29
      $region26: #{forward_nchw.2} parent=23 // pred_check_branch
        %130 = sbr.rel (%p128) target = $region28
      $region27: #{forward_nchw.2} parent=23 // pred_region
        %p131 = scmp.lt.s32.totalorder %s9, 1
        %s132 = scalar_select %p131, %s9, 1
        %s133 = smul.addr %s132, 54
        %s134 = smul.addr %s133, 8
        %s135 = scalar_lea.vmem %s0, %s134
      $region28: #{forward_nchw.2} parent=23 // pred_fallthru
        _
    $region24: #{forward_nchw.2} parent=5 // pred_fallthru
      _
    %p136 = scmp.le.s32.totalorder 1, %s9
    %p137 = scmp.lt.s32.totalorder %s9, 3
    %p138 = pnand %p136, %p137
    %p139 = pneg %p138
    // Predicated region
    $region29: #{forward_nchw.2} parent=5 // pred_check
      _
    $region30: #{forward_nchw.2} parent=5 // pred_check_branch
      %141 = sbr.rel (%p138) target = $region32
    $region31: #{forward_nchw.2} parent=5 // pred_region
      %s142 = ssub.s32 %s9, 1
      %p143 = scmp.lt.s32.totalorder %s14, 1
      %s144 = scalar_select %p143, %s14, 1
      %s145 = smul.addr %s144, 54
      %s146 = smul.addr %s145, 8
      %s147 = scalar_lea.vmem %s0, %s146
      %p148 = pneg %p35
      %p149 = pneg %p32
      %p150 = pneg %p56
      %p151 = pneg %p53
      %p152 = pneg %p77
      %p153 = pneg %p74
      %p154 = pneg %p103
      %p155 = pneg %p100
      %p156 = scmp.lt.s32.totalorder %s14, 1
      %s157 = scalar_select %p156, %s14, 1
      %s158 = smul.addr %s157, 32
      %s159 = smul.addr %s158, 8
      %s160 = scalar_lea.vmem %s3, %s159
      %p161 = scmp.lt.s32.totalorder %s14, 1
      %s162 = scalar_select %p161, %s14, 1
      %s163 = smul.addr %s162, 54
      %s164 = smul.addr %s163, 8
      %s165 = scalar_lea.vmem %s0, %s164
      %p166 = scmp.lt.s32.totalorder %s14, 1
      %s167 = scalar_select %p166, %s14, 1
      %s168 = smul.addr %s167, 32
      %s169 = smul.addr %s168, 8
      %s170 = scalar_lea.vmem %s3, %s169
      %v171 = vld [vmem:[%s2] sm:$0x1]
      %v173 = vlaneseq
      %v174 = vshrl.u32 %v173, 7
      %v175 = vsub.s32 0, %v174
      %v176 = vrot.slane %v171, %v175
      %v178 = vld [vmem:[%s165] sm:$0xff]
      %v179 = vld [vmem:[%s165 + $0x8] sm:$0xff]
      %v180 = vld [vmem:[%s165 + $0x18] sm:$0xff]
      %v181 = vld [vmem:[%s165 + $0x20] sm:$0xff]
      %v182 = vld [vmem:[%s165 + $0x30] sm:$0xff]
      %v183 = vld [vmem:[%s165 + $0x38] sm:$0xff]
      %v184 = vld [vmem:[%s165 + $0x48] sm:$0xff]
      %v185 = vld [vmem:[%s165 + $0x50] sm:$0xff]
      %v186 = vld [vmem:[%s165 + $0x60] sm:$0xff]
      %v187 = vld [vmem:[%s165 + $0x68] sm:$0xff]
      %v188 = vld [vmem:[%s165 + $0x78] sm:$0xff]
      %v189 = vld [vmem:[%s165 + $0x80] sm:$0xff]
      %v190 = vld [vmem:[%s165 + $0x90] sm:$0xff]
      %v191 = vld [vmem:[%s165 + $0x98] sm:$0xff]
      %v192 = vld [vmem:[%s165 + $0xa8] sm:$0xff]
      %v193 = vld [vmem:[%s165 + $0xb0] sm:$0xff]
      %v194 = vld [vmem:[%s165 + $0xc0] sm:$0xff]
      %v195 = vld [vmem:[%s165 + $0xc8] sm:$0xff]
      %v196 = vld [vmem:[%s165 + $0xd8] sm:$0xff]
      %v197 = vld [vmem:[%s165 + $0xe0] sm:$0xff]
      %v198 = vld [vmem:[%s165 + $0xf0] sm:$0xff]
      %v199 = vld [vmem:[%s165 + $0xf8] sm:$0xff]
      %v200 = vld [vmem:[%s165 + $0x108] sm:$0xff]
      %v201 = vld [vmem:[%s165 + $0x110] sm:$0xff]
      %v202 = vld [vmem:[%s165 + $0x120] sm:$0xff]
      %v203 = vld [vmem:[%s165 + $0x128] sm:$0xff]
      %v204 = vld [vmem:[%s165 + $0x138] sm:$0xff]
      %v205 = vld [vmem:[%s165 + $0x140] sm:$0xff]
      %v206 = vld [vmem:[%s165 + $0x150] sm:$0xff]
      %v207 = vld [vmem:[%s165 + $0x158] sm:$0xff]
      %v208 = vld [vmem:[%s165 + $0x168] sm:$0xff]
      %v209 = vld [vmem:[%s165 + $0x170] sm:$0xff]
      %v210 = vld [vmem:[%s1] sm:$0xff]
      %v211 = vld [vmem:[%s1 + $0x8] sm:$0xff]
      %v212 = vld [vmem:[%s1 + $0x10] sm:$0xff]
      %v213 = vld [vmem:[%s1 + $0x18] sm:$0xff]
      %v214 = vld [vmem:[%s1 + $0x20] sm:$0xff]
      %v215 = vld [vmem:[%s1 + $0x28] sm:$0xff]
      %v216 = vld [vmem:[%s1 + $0x30] sm:$0xff]
      %v217 = vld [vmem:[%s1 + $0x38] sm:$0xff]
      %v218 = vld [vmem:[%s1 + $0x40] sm:$0xff]
      %v219 = vld [vmem:[%s1 + $0x48] sm:$0xff]
      %v220 = vld [vmem:[%s1 + $0x50] sm:$0xff]
      %v221 = vld [vmem:[%s1 + $0x58] sm:$0xff]
      %v222 = vld [vmem:[%s1 + $0x60] sm:$0xff]
      %v223 = vld [vmem:[%s1 + $0x68] sm:$0xff]
      %v224 = vld [vmem:[%s1 + $0x70] sm:$0xff]
      %v225 = vld [vmem:[%s1 + $0x78] sm:$0xff]
      %226 = vmatprep.subr.mxu0 0.0
      %227 = vmatpush1.msra.mxu0 %v210
      %228 = vmatprep.subr.mxu0 0.0
      %229 = vmatpush1.msra.mxu0 %v211
      %230 = vmatprep.subr.mxu0 0.0
      %231 = vmatpush1.msra.mxu0 %v212
      %232 = vmatprep.subr.mxu0 0.0
      %233 = vmatpush1.msra.mxu0 %v213
      %234 = vmatprep.subr.mxu0 0.0
      %235 = vmatpush1.msra.mxu0 %v214
      %236 = vmatprep.subr.mxu0 0.0
      %237 = vmatpush1.msra.mxu0 %v215
      %238 = vmatprep.subr.mxu0 0.0
      %239 = vmatpush1.msra.mxu0 %v216
      %240 = vmatprep.subr.mxu0 0.0
      %241 = vmatpush1.msra.mxu0 %v217
      %242 = vmatprep.subr.mxu0 0.0
      %243 = vmatpush1.msra.mxu0 %v218
      %244 = vmatprep.subr.mxu0 0.0
      %245 = vmatpush1.msra.mxu0 %v219
      %246 = vmatprep.subr.mxu0 0.0
      %247 = vmatpush1.msra.mxu0 %v220
      %248 = vmatprep.subr.mxu0 0.0
      %249 = vmatpush1.msra.mxu0 %v221
      %250 = vmatprep.subr.mxu0 0.0
      %251 = vmatpush1.msra.mxu0 %v222
      %252 = vmatprep.subr.mxu0 0.0
      %253 = vmatpush1.msra.mxu0 %v223
      %254 = vmatprep.subr.mxu0 0.0
      %255 = vmatpush1.msra.mxu0 %v224
      %256 = vmatprep.subr.mxu0 0.0
      %257 = vmatpush1.msra.mxu0 %v225
      %258 = vmatprep.subr.mxu0 0.0
      %259 = vmatpush1.msra.mxu0 0.0
      %260 = vmatprep.subr.mxu0 0.0
      %261 = vmatpush1.msra.mxu0 0.0
      %262 = vmatprep.subr.mxu0 0.0
      %263 = vmatpush1.msra.mxu0 0.0
      %264 = vmatprep.subr.mxu0 0.0
      %265 = vmatpush1.msra.mxu0 0.0
      %266 = vmatprep.subr.mxu0 0.0
      %267 = vmatpush1.msra.mxu0 0.0
      %268 = vmatprep.subr.mxu0 0.0
      %269 = vmatpush1.msra.mxu0 0.0
      %270 = vmatprep.subr.mxu0 0.0
      %271 = vmatpush1.msra.mxu0 0.0
      %272 = vmatprep.subr.mxu0 0.0
      %273 = vmatpush1.msra.mxu0 0.0
      %274 = vmatprep.subr.mxu0 0.0
      %275 = vmatpush1.msra.mxu0 0.0
      %276 = vmatprep.subr.mxu0 0.0
      %277 = vmatpush1.msra.mxu0 0.0
      %278 = vmatprep.subr.mxu0 0.0
      %279 = vmatpush1.msra.mxu0 0.0
      %280 = vmatprep.subr.mxu0 0.0
      %281 = vmatpush1.msra.mxu0 0.0
      %282 = vmatprep.subr.mxu0 0.0
      %283 = vmatpush1.msra.mxu0 0.0
      %284 = vmatprep.subr.mxu0 0.0
      %285 = vmatpush1.msra.mxu0 0.0
      %286 = vmatprep.subr.mxu0 0.0
      %287 = vmatpush1.msra.mxu0 0.0
      %288 = vmatprep.subr.mxu0 0.0
      %289 = vmatpush1.msra.mxu0 0.0
      %290 = vmatprep.mubr.f32.mxu0 0.0
      %291 = vmatmul.mubr.f32.gmra.mrb[0].mxu0 %v178
      %v292 = vpop.f32.mrb[0].mxu0
      %v293 = vadd.f32 0.0, %v292
      %v294 = vpop.f32.mrb[0].mxu0
      %295 = vmatprep.mubr.f32.mxu0 0.0
      %296 = vmatmul.mubr.f32.gmra.mrb[0].mxu0 %v179
      %v297 = vpop.f32.mrb[0].mxu0
      %v298 = vadd.f32 0.0, %v297
      %v299 = vpop.f32.mrb[0].mxu0
      %300 = vmatprep.mubr.f32.mxu0 0.0
      %301 = vmatmul.mubr.f32.gmra.mrb[0].mxu0 %v180
      %v302 = vpop.f32.mrb[0].mxu0
      %v303 = vadd.f32 0.0, %v302
      %v304 = vpop.f32.mrb[0].mxu0
      %305 = vmatprep.mubr.f32.mxu0 0.0
      %306 = vmatmul.mubr.f32.gmra.mrb[0].mxu0 %v181
      %v307 = vpop.f32.mrb[0].mxu0
      %v308 = vadd.f32 0.0, %v307
      %v309 = vpop.f32.mrb[0].mxu0
      %310 = vmatprep.mubr.f32.mxu0 0.0
      %311 = vmatmul.mubr.f32.gmra.mrb[0].mxu0 %v182
      %v312 = vpop.f32.mrb[0].mxu0
      %v313 = vadd.f32 0.0, %v312
      %v314 = vpop.f32.mrb[0].mxu0
      %315 = vmatprep.mubr.f32.mxu0 0.0
      %316 = vmatmul.mubr.f32.gmra.mrb[0].mxu0 %v183
      %v317 = vpop.f32.mrb[0].mxu0
      %v318 = vadd.f32 0.0, %v317
      %v319 = vpop.f32.mrb[0].mxu0
      %320 = vmatprep.mubr.f32.mxu0 0.0
      %321 = vmatmul.mubr.f32.gmra.mrb[0].mxu0 %v184
      %v322 = vpop.f32.mrb[0].mxu0
      %v323 = vadd.f32 0.0, %v322
      %v324 = vpop.f32.mrb[0].mxu0
      %325 = vmatprep.mubr.f32.mxu0 0.0
      %326 = vmatmul.mubr.f32.gmra.mrb[0].mxu0 %v185
      %v327 = vpop.f32.mrb[0].mxu0
      %v328 = vadd.f32 0.0, %v327
      %v329 = vpop.f32.mrb[0].mxu0
      %330 = vmatprep.mubr.f32.mxu0 0.0
      %331 = vmatmul.mubr.f32.gmra.mrb[0].mxu0 %v186
      %v332 = vpop.f32.mrb[0].mxu0
      %v333 = vadd.f32 0.0, %v332
      %v334 = vpop.f32.mrb[0].mxu0
      %335 = vmatprep.mubr.f32.mxu0 0.0
      %336 = vmatmul.mubr.f32.gmra.mrb[0].mxu0 %v187
      %v337 = vpop.f32.mrb[0].mxu0
      %v338 = vadd.f32 0.0, %v337
      %v339 = vpop.f32.mrb[0].mxu0
      %340 = vmatprep.mubr.f32.mxu0 0.0
      %341 = vmatmul.mubr.f32.gmra.mrb[0].mxu0 %v188
      %v342 = vpop.f32.mrb[0].mxu0
      %v343 = vadd.f32 0.0, %v342
      %v344 = vpop.f32.mrb[0].mxu0
      %345 = vmatprep.mubr.f32.mxu0 0.0
      %346 = vmatmul.mubr.f32.gmra.mrb[0].mxu0 %v189
      %v347 = vpop.f32.mrb[0].mxu0
      %v348 = vadd.f32 0.0, %v347
      %v349 = vpop.f32.mrb[0].mxu0
      %350 = vmatprep.mubr.f32.mxu0 0.0
      %351 = vmatmul.mubr.f32.gmra.mrb[0].mxu0 %v190
      %v352 = vpop.f32.mrb[0].mxu0
      %v353 = vadd.f32 0.0, %v352
      %v354 = vpop.f32.mrb[0].mxu0
      %355 = vmatprep.mubr.f32.mxu0 0.0
      %356 = vmatmul.mubr.f32.gmra.mrb[0].mxu0 %v191
      %v357 = vpop.f32.mrb[0].mxu0
      %v358 = vadd.f32 0.0, %v357
      %v359 = vpop.f32.mrb[0].mxu0
      %360 = vmatprep.mubr.f32.mxu0 0.0
      %361 = vmatmul.mubr.f32.gmra.mrb[0].mxu0 %v192
      %v362 = vpop.f32.mrb[0].mxu0
      %v363 = vadd.f32 0.0, %v362
      %v364 = vpop.f32.mrb[0].mxu0
      %365 = vmatprep.mubr.f32.mxu0 0.0
      %366 = vmatmul.mubr.f32.gmra.mrb[0].mxu0 %v193
      %v367 = vpop.f32.mrb[0].mxu0
      %v368 = vadd.f32 0.0, %v367
      %v369 = vpop.f32.mrb[0].mxu0
      %370 = vmatprep.mubr.f32.mxu0 0.0
      %371 = vmatmul.mubr.f32.gmra.mrb[0].mxu0 %v194
      %v372 = vpop.f32.mrb[0].mxu0
      %v373 = vadd.f32 0.0, %v372
      %v374 = vpop.f32.mrb[0].mxu0
      %375 = vmatprep.mubr.f32.mxu0 0.0
      %376 = vmatmul.mubr.f32.gmra.mrb[0].mxu0 %v195
      %v377 = vpop.f32.mrb[0].mxu0
      %v378 = vadd.f32 0.0, %v377
      %v379 = vpop.f32.mrb[0].mxu0
      %380 = vmatprep.mubr.f32.mxu0 0.0
      %381 = vmatmul.mubr.f32.gmra.mrb[0].mxu0 %v196
      %v382 = vpop.f32.mrb[0].mxu0
      %v383 = vadd.f32 0.0, %v382
      %v384 = vpop.f32.mrb[0].mxu0
      %385 = vmatprep.mubr.f32.mxu0 0.0
      %386 = vmatmul.mubr.f32.gmra.mrb[0].mxu0 %v197
      %v387 = vpop.f32.mrb[0].mxu0
      %v388 = vadd.f32 0.0, %v387
      %v389 = vpop.f32.mrb[0].mxu0
      %390 = vmatprep.mubr.f32.mxu0 0.0
      %391 = vmatmul.mubr.f32.gmra.mrb[0].mxu0 %v198
      %v392 = vpop.f32.mrb[0].mxu0
      %v393 = vadd.f32 0.0, %v392
      %v394 = vpop.f32.mrb[0].mxu0
      %395 = vmatprep.mubr.f32.mxu0 0.0
      %396 = vmatmul.mubr.f32.gmra.mrb[0].mxu0 %v199
      %v397 = vpop.f32.mrb[0].mxu0
      %v398 = vadd.f32 0.0, %v397
      %v399 = vpop.f32.mrb[0].mxu0
      %400 = vmatprep.mubr.f32.mxu0 0.0
      %401 = vmatmul.mubr.f32.gmra.mrb[0].mxu0 %v200
      %v402 = vpop.f32.mrb[0].mxu0
      %v403 = vadd.f32 0.0, %v402
      %v404 = vpop.f32.mrb[0].mxu0
      %405 = vmatprep.mubr.f32.mxu0 0.0
      %406 = vmatmul.mubr.f32.gmra.mrb[0].mxu0 %v201
      %v407 = vpop.f32.mrb[0].mxu0
      %v408 = vadd.f32 0.0, %v407
      %v409 = vpop.f32.mrb[0].mxu0
      %410 = vmatprep.mubr.f32.mxu0 0.0
      %411 = vmatmul.mubr.f32.gmra.mrb[0].mxu0 %v202
      %v412 = vpop.f32.mrb[0].mxu0
      %v413 = vadd.f32 0.0, %v412
      %v414 = vpop.f32.mrb[0].mxu0
      %415 = vmatprep.mubr.f32.mxu0 0.0
      %416 = vmatmul.mubr.f32.gmra.mrb[0].mxu0 %v203
      %v417 = vpop.f32.mrb[0].mxu0
      %v418 = vadd.f32 0.0, %v417
      %v419 = vpop.f32.mrb[0].mxu0
      %420 = vmatprep.mubr.f32.mxu0 0.0
      %421 = vmatmul.mubr.f32.gmra.mrb[0].mxu0 %v204
      %v422 = vpop.f32.mrb[0].mxu0
      %v423 = vadd.f32 0.0, %v422
      %v424 = vpop.f32.mrb[0].mxu0
      %425 = vmatprep.mubr.f32.mxu0 0.0
      %426 = vmatmul.mubr.f32.gmra.mrb[0].mxu0 %v205
      %v427 = vpop.f32.mrb[0].mxu0
      %v428 = vadd.f32 0.0, %v427
      %v429 = vpop.f32.mrb[0].mxu0
      %430 = vmatprep.mubr.f32.mxu0 0.0
      %431 = vmatmul.mubr.f32.gmra.mrb[0].mxu0 %v206
      %v432 = vpop.f32.mrb[0].mxu0
      %v433 = vadd.f32 0.0, %v432
      %v434 = vpop.f32.mrb[0].mxu0
      %435 = vmatprep.mubr.f32.mxu0 0.0
      %436 = vmatmul.mubr.f32.gmra.mrb[0].mxu0 %v207
      %v437 = vpop.f32.mrb[0].mxu0
      %v438 = vadd.f32 0.0, %v437
      %v439 = vpop.f32.mrb[0].mxu0
      %440 = vmatprep.mubr.f32.mxu0 0.0
      %441 = vmatmul.mubr.f32.gmra.mrb[0].mxu0 %v208
      %v442 = vpop.f32.mrb[0].mxu0
      %v443 = vadd.f32 0.0, %v442
      %v444 = vpop.f32.mrb[0].mxu0
      %445 = vmatprep.mubr.f32.mxu0 0.0
      %446 = vmatmul.mubr.f32.gmra.mrb[0].mxu0 %v209
      %v447 = vpop.f32.mrb[0].mxu0
      %v448 = vadd.f32 0.0, %v447
      %v449 = vpop.f32.mrb[0].mxu0
      %450 = vdwg.mxu0
      %v451 = vadd.f32 %v176, %v293
      %v452 = vadd.f32 %v176, %v298
      %v453 = vadd.f32 %v176, %v303
      %v454 = vadd.f32 %v176, %v308
      %v455 = vadd.f32 %v176, %v313
      %v456 = vadd.f32 %v176, %v318
      %v457 = vadd.f32 %v176, %v323
      %v458 = vadd.f32 %v176, %v328
      %v459 = vadd.f32 %v176, %v333
      %v460 = vadd.f32 %v176, %v338
      %v461 = vadd.f32 %v176, %v343
      %v462 = vadd.f32 %v176, %v348
      %v463 = vadd.f32 %v176, %v353
      %v464 = vadd.f32 %v176, %v358
      %v465 = vadd.f32 %v176, %v363
      %v466 = vadd.f32 %v176, %v368
      %v467 = vadd.f32 %v176, %v373
      %v468 = vadd.f32 %v176, %v378
      %v469 = vadd.f32 %v176, %v383
      %v470 = vadd.f32 %v176, %v388
      %v471 = vadd.f32 %v176, %v393
      %v472 = vadd.f32 %v176, %v398
      %v473 = vadd.f32 %v176, %v403
      %v474 = vadd.f32 %v176, %v408
      %v475 = vadd.f32 %v176, %v413
      %v476 = vadd.f32 %v176, %v418
      %v477 = vadd.f32 %v176, %v423
      %v478 = vadd.f32 %v176, %v428
      %v479 = vadd.f32 %v176, %v433
      %v480 = vadd.f32 %v176, %v438
      %v481 = vadd.f32 %v176, %v443
      %v482 = vadd.f32 %v176, %v448
      %v483 = vld [vmem:[%s165 + $0x1] sm:$0xff]
      %v484 = vld [vmem:[%s165 + $0x9] sm:$0xff]
      %v485 = vld [vmem:[%s165 + $0x19] sm:$0xff]
      %v486 = vld [vmem:[%s165 + $0x21] sm:$0xff]
      %v487 = vld [vmem:[%s165 + $0x31] sm:$0xff]
      %v488 = vld [vmem:[%s165 + $0x39] sm:$0xff]
      %v489 = vld [vmem:[%s165 + $0x49] sm:$0xff]
      %v490 = vld [vmem:[%s165 + $0x51] sm:$0xff]
      %v491 = vld [vmem:[%s165 + $0x61] sm:$0xff]
      %v492 = vld [vmem:[%s165 + $0x69] sm:$0xff]
      %v493 = vld [vmem:[%s165 + $0x79] sm:$0xff]
      %v494 = vld [vmem:[%s165 + $0x81] sm:$0xff]
      %v495 = vld [vmem:[%s165 + $0x91] sm:$0xff]
      %v496 = vld [vmem:[%s165 + $0x99] sm:$0xff]
      %v497 = vld [vmem:[%s165 + $0xa9] sm:$0xff]
      %v498 = vld [vmem:[%s165 + $0xb1] sm:$0xff]
      %v499 = vld [vmem:[%s165 + $0xc1] sm:$0xff]
      %v500 = vld [vmem:[%s165 + $0xc9] sm:$0xff]
      %v501 = vld [vmem:[%s165 + $0xd9] sm:$0xff]
      %v502 = vld [vmem:[%s165 + $0xe1] sm:$0xff]
      %v503 = vld [vmem:[%s165 + $0xf1] sm:$0xff]
      %v504 = vld [vmem:[%s165 + $0xf9] sm:$0xff]
      %v505 = vld [vmem:[%s165 + $0x109] sm:$0xff]
      %v506 = vld [vmem:[%s165 + $0x111] sm:$0xff]
      %v507 = vld [vmem:[%s165 + $0x121] sm:$0xff]
      %v508 = vld [vmem:[%s165 + $0x129] sm:$0xff]
      %v509 = vld [vmem:[%s165 + $0x139] sm:$0xff]
      %v510 = vld [vmem:[%s165 + $0x141] sm:$0xff]
      %v511 = vld [vmem:[%s165 + $0x151] sm:$0xff]
      %v512 = vld [vmem:[%s165 + $0x159] sm:$0xff]
      %v513 = vld [vmem:[%s165 + $0x169] sm:$0xff]
      %v514 = vld [vmem:[%s165 + $0x171] sm:$0xff]
      %s515 = scalar_lea.vmem %s1, 128
      %v516 = vld [vmem:[%s515] sm:$0xff]
      %v517 = vld [vmem:[%s515 + $0x8] sm:$0xff]
      %v518 = vld [vmem:[%s515 + $0x10] sm:$0xff]
      %v519 = vld [vmem:[%s515 + $0x18] sm:$0xff]
      %v520 = vld [vmem:[%s515 + $0x20] sm:$0xff]
      %v521 = vld [vmem:[%s515 + $0x28] sm:$0xff]
      %v522 = vld [vmem:[%s515 + $0x30] sm:$0xff]
      %v523 = vld [vmem:[%s515 + $0x38] sm:$0xff]
      %v524 = vld [vmem:[%s515 + $0x40] sm:$0xff]
      %v525 = vld [vmem:[%s515 + $0x48] sm:$0xff]
      %v526 = vld [vmem:[%s515 + $0x50] sm:$0xff]
      %v527 = vld [vmem:[%s515 + $0x58] sm:$0xff]
      %v528 = vld [vmem:[%s515 + $0x60] sm:$0xff]
      %v529 = vld [vmem:[%s515 + $0x68] sm:$0xff]
      %v530 = vld [vmem:[%s515 + $0x70] sm:$0xff]
      %v531 = vld [vmem:[%s515 + $0x78] sm:$0xff]
      %532 = vmatprep.subr.mxu0 0.0
      %533 = vmatpush1.msra.mxu0 %v516
      %534 = vmatprep.subr.mxu0 0.0
      %535 = vmatpush1.msra.mxu0 %v517
      %536 = vmatprep.subr.mxu0 0.0
      %537 = vmatpush1.msra.mxu0 %v518
      %538 = vmatprep.subr.mxu0 0.0
      %539 = vmatpush1.msra.mxu0 %v519
      %540 = vmatprep.subr.mxu0 0.0
      %541 = vmatpush1.msra.mxu0 %v520
      %542 = vmatprep.subr.mxu0 0.0
      %543 = vmatpush1.msra.mxu0 %v521
      %544 = vmatprep.subr.mxu0 0.0
      %545 = vmatpush1.msra.mxu0 %v522
      %546 = vmatprep.subr.mxu0 0.0
      %547 = vmatpush1.msra.mxu0 %v523
      %548 = vmatprep.subr.mxu0 0.0
      %549 = vmatpush1.msra.mxu0 %v524
      %550 = vmatprep.subr.mxu0 0.0
      %551 = vmatpush1.msra.mxu0 %v525
      %552 = vmatprep.subr.mxu0 0.0
      %553 = vmatpush1.msra.mxu0 %v526
      %554 = vmatprep.subr.mxu0 0.0
      %555 = vmatpush1.msra.mxu0 %v527
      %556 = vmatprep.subr.mxu0 0.0
      %557 = vmatpush1.msra.mxu0 %v528
      %558 = vmatprep.subr.mxu0 0.0
      %559 = vmatpush1.msra.mxu0 %v529
      %560 = vmatprep.subr.mxu0 0.0
      %561 = vmatpush1.msra.mxu0 %v530
      %562 = vmatprep.subr.mxu0 0.0
      %563 = vmatpush1.msra.mxu0 %v531
      %564 = vmatprep.subr.mxu0 0.0
      %565 = vmatpush1.msra.mxu0 0.0
      %566 = vmatprep.subr.mxu0 0.0
      %567 = vmatpush1.msra.mxu0 0.0
      %568 = vmatprep.subr.mxu0 0.0
      %569 = vmatpush1.msra.mxu0 0.0
      %570 = vmatprep.subr.mxu0 0.0
      %571 = vmatpush1.msra.mxu0 0.0
      %572 = vmatprep.subr.mxu0 0.0
      %573 = vmatpush1.msra.mxu0 0.0
      %574 = vmatprep.subr.mxu0 0.0
      %575 = vmatpush1.msra.mxu0 0.0
      %576 = vmatprep.subr.mxu0 0.0
      %577 = vmatpush1.msra.mxu0 0.0
      %578 = vmatprep.subr.mxu0 0.0
      %579 = vmatpush1.msra.mxu0 0.0
      %580 = vmatprep.subr.mxu0 0.0
      %581 = vmatpush1.msra.mxu0 0.0
      %582 = vmatprep.subr.mxu0 0.0
      %583 = vmatpush1.msra.mxu0 0.0
      %584 = vmatprep.subr.mxu0 0.0
      %585 = vmatpush1.msra.mxu0 0.0
      %586 = vmatprep.subr.mxu0 0.0
      %587 = vmatpush1.msra.mxu0 0.0
      %588 = vmatprep.subr.mxu0 0.0
      %589 = vmatpush1.msra.mxu0 0.0
      %590 = vmatprep.subr.mxu0 0.0
      %591 = vmatpush1.msra.mxu0 0.0
      %592 = vmatprep.subr.mxu0 0.0
      %593 = vmatpush1.msra.mxu0 0.0
      %594 = vmatprep.subr.mxu0 0.0
      %595 = vmatpush1.msra.mxu0 0.0
      %596 = vmatprep.mubr.f32.mxu0 0.0
      %597 = vmatmul.mubr.f32.gmra.mrb[0].mxu0 %v483
      %v598 = vpop.f32.mrb[0].mxu0
      %v599 = vadd.f32 0.0, %v598
      %v600 = vpop.f32.mrb[0].mxu0
      %601 = vmatprep.mubr.f32.mxu0 0.0
      %602 = vmatmul.mubr.f32.gmra.mrb[0].mxu0 %v484
      %v603 = vpop.f32.mrb[0].mxu0
      %v604 = vadd.f32 0.0, %v603
      %v605 = vpop.f32.mrb[0].mxu0
      %606 = vmatprep.mubr.f32.mxu0 0.0
      %607 = vmatmul.mubr.f32.gmra.mrb[0].mxu0 %v485
      %v608 = vpop.f32.mrb[0].mxu0
      %v609 = vadd.f32 0.0, %v608
      %v610 = vpop.f32.mrb[0].mxu0
      %611 = vmatprep.mubr.f32.mxu0 0.0
      %612 = vmatmul.mubr.f32.gmra.mrb[0].mxu0 %v486
      %v613 = vpop.f32.mrb[0].mxu0
      %v614 = vadd.f32 0.0, %v613
      %v615 = vpop.f32.mrb[0].mxu0
      %616 = vmatprep.mubr.f32.mxu0 0.0
      %617 = vmatmul.mubr.f32.gmra.mrb[0].mxu0 %v487
      %v618 = vpop.f32.mrb[0].mxu0
      %v619 = vadd.f32 0.0, %v618
      %v620 = vpop.f32.mrb[0].mxu0
      %621 = vmatprep.mubr.f32.mxu0 0.0
      %622 = vmatmul.mubr.f32.gmra.mrb[0].mxu0 %v488
      %v623 = vpop.f32.mrb[0].mxu0
      %v624 = vadd.f32 0.0, %v623
      %v625 = vpop.f32.mrb[0].mxu0
      %626 = vmatprep.mubr.f32.mxu0 0.0
      %627 = vmatmul.mubr.f32.gmra.mrb[0].mxu0 %v489
      %v628 = vpop.f32.mrb[0].mxu0
      %v629 = vadd.f32 0.0, %v628
      %v630 = vpop.f32.mrb[0].mxu0
      %631 = vmatprep.mubr.f32.mxu0 0.0
      %632 = vmatmul.mubr.f32.gmra.mrb[0].mxu0 %v490
      %v633 = vpop.f32.mrb[0].mxu0
      %v634 = vadd.f32 0.0, %v633
      %v635 = vpop.f32.mrb[0].mxu0
      %636 = vmatprep.mubr.f32.mxu0 0.0
      %637 = vmatmul.mubr.f32.gmra.mrb[0].mxu0 %v491
      %v638 = vpop.f32.mrb[0].mxu0
      %v639 = vadd.f32 0.0, %v638
      %v640 = vpop.f32.mrb[0].mxu0
      %641 = vmatprep.mubr.f32.mxu0 0.0
      %642 = vmatmul.mubr.f32.gmra.mrb[0].mxu0 %v492
      %v643 = vpop.f32.mrb[0].mxu0
      %v644 = vadd.f32 0.0, %v643
      %v645 = vpop.f32.mrb[0].mxu0
      %646 = vmatprep.mubr.f32.mxu0 0.0
      %647 = vmatmul.mubr.f32.gmra.mrb[0].mxu0 %v493
      %v648 = vpop.f32.mrb[0].mxu0
      %v649 = vadd.f32 0.0, %v648
      %v650 = vpop.f32.mrb[0].mxu0
      %651 = vmatprep.mubr.f32.mxu0 0.0
      %652 = vmatmul.mubr.f32.gmra.mrb[0].mxu0 %v494
      %v653 = vpop.f32.mrb[0].mxu0
      %v654 = vadd.f32 0.0, %v653
      %v655 = vpop.f32.mrb[0].mxu0
      %656 = vmatprep.mubr.f32.mxu0 0.0
      %657 = vmatmul.mubr.f32.gmra.mrb[0].mxu0 %v495
      %v658 = vpop.f32.mrb[0].mxu0
      %v659 = vadd.f32 0.0, %v658
      %v660 = vpop.f32.mrb[0].mxu0
      %661 = vmatprep.mubr.f32.mxu0 0.0
      %662 = vmatmul.mubr.f32.gmra.mrb[0].mxu0 %v496
      %v663 = vpop.f32.mrb[0].mxu0
      %v664 = vadd.f32 0.0, %v663
      %v665 = vpop.f32.mrb[0].mxu0
      %666 = vmatprep.mubr.f32.mxu0 0.0
      %667 = vmatmul.mubr.f32.gmra.mrb[0].mxu0 %v497
      %v668 = vpop.f32.mrb[0].mxu0
      %v669 = vadd.f32 0.0, %v668
      %v670 = vpop.f32.mrb[0].mxu0
      %671 = vmatprep.mubr.f32.mxu0 0.0
      %672 = vmatmul.mubr.f32.gmra.mrb[0].mxu0 %v498
      %v673 = vpop.f32.mrb[0].mxu0
      %v674 = vadd.f32 0.0, %v673
      %v675 = vpop.f32.mrb[0].mxu0
      %676 = vmatprep.mubr.f32.mxu0 0.0
      %677 = vmatmul.mubr.f32.gmra.mrb[0].mxu0 %v499
      %v678 = vpop.f32.mrb[0].mxu0
      %v679 = vadd.f32 0.0, %v678
      %v680 = vpop.f32.mrb[0].mxu0
      %681 = vmatprep.mubr.f32.mxu0 0.0
      %682 = vmatmul.mubr.f32.gmra.mrb[0].mxu0 %v500
      %v683 = vpop.f32.mrb[0].mxu0
      %v684 = vadd.f32 0.0, %v683
      %v685 = vpop.f32.mrb[0].mxu0
      %686 = vmatprep.mubr.f32.mxu0 0.0
      %687 = vmatmul.mubr.f32.gmra.mrb[0].mxu0 %v501
      %v688 = vpop.f32.mrb[0].mxu0
      %v689 = vadd.f32 0.0, %v688
      %v690 = vpop.f32.mrb[0].mxu0
      %691 = vmatprep.mubr.f32.mxu0 0.0
      %692 = vmatmul.mubr.f32.gmra.mrb[0].mxu0 %v502
      %v693 = vpop.f32.mrb[0].mxu0
      %v694 = vadd.f32 0.0, %v693
      %v695 = vpop.f32.mrb[0].mxu0
      %696 = vmatprep.mubr.f32.mxu0 0.0
      %697 = vmatmul.mubr.f32.gmra.mrb[0].mxu0 %v503
      %v698 = vpop.f32.mrb[0].mxu0
      %v699 = vadd.f32 0.0, %v698
      %v700 = vpop.f32.mrb[0].mxu0
      %701 = vmatprep.mubr.f32.mxu0 0.0
      %702 = vmatmul.mubr.f32.gmra.mrb[0].mxu0 %v504
      %v703 = vpop.f32.mrb[0].mxu0
      %v704 = vadd.f32 0.0, %v703
      %v705 = vpop.f32.mrb[0].mxu0
      %706 = vmatprep.mubr.f32.mxu0 0.0
      %707 = vmatmul.mubr.f32.gmra.mrb[0].mxu0 %v505
      %v708 = vpop.f32.mrb[0].mxu0
      %v709 = vadd.f32 0.0, %v708
      %v710 = vpop.f32.mrb[0].mxu0
      %711 = vmatprep.mubr.f32.mxu0 0.0
      %712 = vmatmul.mubr.f32.gmra.mrb[0].mxu0 %v506
      %v713 = vpop.f32.mrb[0].mxu0
      %v714 = vadd.f32 0.0, %v713
      %v715 = vpop.f32.mrb[0].mxu0
      %716 = vmatprep.mubr.f32.mxu0 0.0
      %717 = vmatmul.mubr.f32.gmra.mrb[0].mxu0 %v507
      %v718 = vpop.f32.mrb[0].mxu0
      %v719 = vadd.f32 0.0, %v718
      %v720 = vpop.f32.mrb[0].mxu0
      %721 = vmatprep.mubr.f32.mxu0 0.0
      %722 = vmatmul.mubr.f32.gmra.mrb[0].mxu0 %v508
      %v723 = vpop.f32.mrb[0].mxu0
      %v724 = vadd.f32 0.0, %v723
      %v725 = vpop.f32.mrb[0].mxu0
      %726 = vmatprep.mubr.f32.mxu0 0.0
      %727 = vmatmul.mubr.f32.gmra.mrb[0].mxu0 %v509
      %v728 = vpop.f32.mrb[0].mxu0
      %v729 = vadd.f32 0.0, %v728
      %v730 = vpop.f32.mrb[0].mxu0
      %731 = vmatprep.mubr.f32.mxu0 0.0
      %732 = vmatmul.mubr.f32.gmra.mrb[0].mxu0 %v510
      %v733 = vpop.f32.mrb[0].mxu0
      %v734 = vadd.f32 0.0, %v733
      %v735 = vpop.f32.mrb[0].mxu0
      %736 = vmatprep.mubr.f32.mxu0 0.0
      %737 = vmatmul.mubr.f32.gmra.mrb[0].mxu0 %v511
      %v738 = vpop.f32.mrb[0].mxu0
      %v739 = vadd.f32 0.0, %v738
      %v740 = vpop.f32.mrb[0].mxu0
      %741 = vmatprep.mubr.f32.mxu0 0.0
      %742 = vmatmul.mubr.f32.gmra.mrb[0].mxu0 %v512
      %v743 = vpop.f32.mrb[0].mxu0
      %v744 = vadd.f32 0.0, %v743
      %v745 = vpop.f32.mrb[0].mxu0
      %746 = vmatprep.mubr.f32.mxu0 0.0
      %747 = vmatmul.mubr.f32.gmra.mrb[0].mxu0 %v513
      %v748 = vpop.f32.mrb[0].mxu0
      %v749 = vadd.f32 0.0, %v748
      %v750 = vpop.f32.mrb[0].mxu0
      %751 = vmatprep.mubr.f32.mxu0 0.0
      %752 = vmatmul.mubr.f32.gmra.mrb[0].mxu0 %v514
      %v753 = vpop.f32.mrb[0].mxu0
      %v754 = vadd.f32 0.0, %v753
      %v755 = vpop.f32.mrb[0].mxu0
      %756 = vdwg.mxu0
      %v757 = vadd.f32 %v451, %v599
      %v758 = vadd.f32 %v452, %v604
      %v759 = vadd.f32 %v453, %v609
      %v760 = vadd.f32 %v454, %v614
      %v761 = vadd.f32 %v455, %v619
      %v762 = vadd.f32 %v456, %v624
      %v763 = vadd.f32 %v457, %v629
      %v764 = vadd.f32 %v458, %v634
      %v765 = vadd.f32 %v459, %v639
      %v766 = vadd.f32 %v460, %v644
      %v767 = vadd.f32 %v461, %v649
      %v768 = vadd.f32 %v462, %v654
      %v769 = vadd.f32 %v463, %v659
      %v770 = vadd.f32 %v464, %v664
      %v771 = vadd.f32 %v465, %v669
      %v772 = vadd.f32 %v466, %v674
      %v773 = vadd.f32 %v467, %v679
      %v774 = vadd.f32 %v468, %v684
      %v775 = vadd.f32 %v469, %v689
      %v776 = vadd.f32 %v470, %v694
      %v777 = vadd.f32 %v471, %v699
      %v778 = vadd.f32 %v472, %v704
      %v779 = vadd.f32 %v473, %v709
      %v780 = vadd.f32 %v474, %v714
      %v781 = vadd.f32 %v475, %v719
      %v782 = vadd.f32 %v476, %v724
      %v783 = vadd.f32 %v477, %v729
      %v784 = vadd.f32 %v478, %v734
      %v785 = vadd.f32 %v479, %v739
      %v786 = vadd.f32 %v480, %v744
      %v787 = vadd.f32 %v481, %v749
      %v788 = vadd.f32 %v482, %v754
      %v789 = vld [vmem:[%s165 + $0x2] sm:$0xff]
      %v790 = vld [vmem:[%s165 + $0xa] sm:$0xff]
      %v791 = vld [vmem:[%s165 + $0x1a] sm:$0xff]
      %v792 = vld [vmem:[%s165 + $0x22] sm:$0xff]
      %v793 = vld [vmem:[%s165 + $0x32] sm:$0xff]
      %v794 = vld [vmem:[%s165 + $0x3a] sm:$0xff]
      %v795 = vld [vmem:[%s165 + $0x4a] sm:$0xff]
      %v796 = vld [vmem:[%s165 + $0x52] sm:$0xff]
      %v797 = vld [vmem:[%s165 + $0x62] sm:$0xff]
      %v798 = vld [vmem:[%s165 + $0x6a] sm:$0xff]
      %v799 = vld [vmem:[%s165 + $0x7a] sm:$0xff]
      %v800 = vld [vmem:[%s165 + $0x82] sm:$0xff]
      %v801 = vld [vmem:[%s165 + $0x92] sm:$0xff]
      %v802 = vld [vmem:[%s165 + $0x9a] sm:$0xff]
      %v803 = vld [vmem:[%s165 + $0xaa] sm:$0xff]
      %v804 = vld [vmem:[%s165 + $0xb2] sm:$0xff]
      %v805 = vld [vmem:[%s165 + $0xc2] sm:$0xff]
      %v806 = vld [vmem:[%s165 + $0xca] sm:$0xff]
      %v807 = vld [vmem:[%s165 + $0xda] sm:$0xff]
      %v808 = vld [vmem:[%s165 + $0xe2] sm:$0xff]
      %v809 = vld [vmem:[%s165 + $0xf2] sm:$0xff]
      %v810 = vld [vmem:[%s165 + $0xfa] sm:$0xff]
      %v811 = vld [vmem:[%s165 + $0x10a] sm:$0xff]
      %v812 = vld [vmem:[%s165 + $0x112] sm:$0xff]
      %v813 = vld [vmem:[%s165 + $0x122] sm:$0xff]
      %v814 = vld [vmem:[%s165 + $0x12a] sm:$0xff]
      %v815 = vld [vmem:[%s165 + $0x13a] sm:$0xff]
      %v816 = vld [vmem:[%s165 + $0x142] sm:$0xff]
      %v817 = vld [vmem:[%s165 + $0x152] sm:$0xff]
      %v818 = vld [vmem:[%s165 + $0x15a] sm:$0xff]
      %v819 = vld [vmem:[%s165 + $0x16a] sm:$0xff]
      %v820 = vld [vmem:[%s165 + $0x172] sm:$0xff]
      %s821 = scalar_lea.vmem %s1, 256
      %v822 = vld [vmem:[%s821] sm:$0xff]
      %v823 = vld [vmem:[%s821 + $0x8] sm:$0xff]
      %v824 = vld [vmem:[%s821 + $0x10] sm:$0xff]
      %v825 = vld [vmem:[%s821 + $0x18] sm:$0xff]
      %v826 = vld [vmem:[%s821 + $0x20] sm:$0xff]
      %v827 = vld [vmem:[%s821 + $0x28] sm:$0xff]
      %v828 = vld [vmem:[%s821 + $0x30] sm:$0xff]
      %v829 = vld [vmem:[%s821 + $0x38] sm:$0xff]
      %v830 = vld [vmem:[%s821 + $0x40] sm:$0xff]
      %v831 = vld [vmem:[%s821 + $0x48] sm:$0xff]
      %v832 = vld [vmem:[%s821 + $0x50] sm:$0xff]
      %v833 = vld [vmem:[%s821 + $0x58] sm:$0xff]
      %v834 = vld [vmem:[%s821 + $0x60] sm:$0xff]
      %v835 = vld [vmem:[%s821 + $0x68] sm:$0xff]
      %v836 = vld [vmem:[%s821 + $0x70] sm:$0xff]
      %v837 = vld [vmem:[%s821 + $0x78] sm:$0xff]
      %838 = vmatprep.subr.mxu0 0.0
      %839 = vmatpush1.msra.mxu0 %v822
      %840 = vmatprep.subr.mxu0 0.0
      %841 = vmatpush1.msra.mxu0 %v823
      %842 = vmatprep.subr.mxu0 0.0
      %843 = vmatpush1.msra.mxu0 %v824
      %844 = vmatprep.subr.mxu0 0.0
      %845 = vmatpush1.msra.mxu0 %v825
      %846 = vmatprep.subr.mxu0 0.0
      %847 = vmatpush1.msra.mxu0 %v826
      %848 = vmatprep.subr.mxu0 0.0
      %849 = vmatpush1.msra.mxu0 %v827
      %850 = vmatprep.subr.mxu0 0.0
      %851 = vmatpush1.msra.mxu0 %v828
      %852 = vmatprep.subr.mxu0 0.0
      %853 = vmatpush1.msra.mxu0 %v829
      %854 = vmatprep.subr.mxu0 0.0
      %855 = vmatpush1.msra.mxu0 %v830
      %856 = vmatprep.subr.mxu0 0.0
      %857 = vmatpush1.msra.mxu0 %v831
      %858 = vmatprep.subr.mxu0 0.0
      %859 = vmatpush1.msra.mxu0 %v832
      %860 = vmatprep.subr.mxu0 0.0
      %861 = vmatpush1.msra.mxu0 %v833
      %862 = vmatprep.subr.mxu0 0.0
      %863 = vmatpush1.msra.mxu0 %v834
      %864 = vmatprep.subr.mxu0 0.0
      %865 = vmatpush1.msra.mxu0 %v835
      %866 = vmatprep.subr.mxu0 0.0
      %867 = vmatpush1.msra.mxu0 %v836
      %868 = vmatprep.subr.mxu0 0.0
      %869 = vmatpush1.msra.mxu0 %v837
      %870 = vmatprep.subr.mxu0 0.0
      %871 = vmatpush1.msra.mxu0 0.0
      %872 = vmatprep.subr.mxu0 0.0
      %873 = vmatpush1.msra.mxu0 0.0
      %874 = vmatprep.subr.mxu0 0.0
      %875 = vmatpush1.msra.mxu0 0.0
      %876 = vmatprep.subr.mxu0 0.0
      %877 = vmatpush1.msra.mxu0 0.0
      %878 = vmatprep.subr.mxu0 0.0
      %879 = vmatpush1.msra.mxu0 0.0
      %880 = vmatprep.subr.mxu0 0.0
      %881 = vmatpush1.msra.mxu0 0.0
      %882 = vmatprep.subr.mxu0 0.0
      %883 = vmatpush1.msra.mxu0 0.0
      %884 = vmatprep.subr.mxu0 0.0
      %885 = vmatpush1.msra.mxu0 0.0
      %886 = vmatprep.subr.mxu0 0.0
      %887 = vmatpush1.msra.mxu0 0.0
      %888 = vmatprep.subr.mxu0 0.0
      %889 = vmatpush1.msra.mxu0 0.0
      %890 = vmatprep.subr.mxu0 0.0
      %891 = vmatpush1.msra.mxu0 0.0
      %892 = vmatprep.subr.mxu0 0.0
      %893 = vmatpush1.msra.mxu0 0.0
      %894 = vmatprep.subr.mxu0 0.0
      %895 = vmatpush1.msra.mxu0 0.0
      %896 = vmatprep.subr.mxu0 0.0
      %897 = vmatpush1.msra.mxu0 0.0
      %898 = vmatprep.subr.mxu0 0.0
      %899 = vmatpush1.msra.mxu0 0.0
      %900 = vmatprep.subr.mxu0 0.0
      %901 = vmatpush1.msra.mxu0 0.0
      %902 = vmatprep.mubr.f32.mxu0 0.0
      %903 = vmatmul.mubr.f32.gmra.mrb[0].mxu0 %v789
      %v904 = vpop.f32.mrb[0].mxu0
      %v905 = vadd.f32 0.0, %v904
      %v906 = vpop.f32.mrb[0].mxu0
      %907 = vmatprep.mubr.f32.mxu0 0.0
      %908 = vmatmul.mubr.f32.gmra.mrb[0].mxu0 %v790
      %v909 = vpop.f32.mrb[0].mxu0
      %v910 = vadd.f32 0.0, %v909
      %v911 = vpop.f32.mrb[0].mxu0
      %912 = vmatprep.mubr.f32.mxu0 0.0
      %913 = vmatmul.mubr.f32.gmra.mrb[0].mxu0 %v791
      %v914 = vpop.f32.mrb[0].mxu0
      %v915 = vadd.f32 0.0, %v914
      %v916 = vpop.f32.mrb[0].mxu0
      %917 = vmatprep.mubr.f32.mxu0 0.0
      %918 = vmatmul.mubr.f32.gmra.mrb[0].mxu0 %v792
      %v919 = vpop.f32.mrb[0].mxu0
      %v920 = vadd.f32 0.0, %v919
      %v921 = vpop.f32.mrb[0].mxu0
      %922 = vmatprep.mubr.f32.mxu0 0.0
      %923 = vmatmul.mubr.f32.gmra.mrb[0].mxu0 %v793
      %v924 = vpop.f32.mrb[0].mxu0
      %v925 = vadd.f32 0.0, %v924
      %v926 = vpop.f32.mrb[0].mxu0
      %927 = vmatprep.mubr.f32.mxu0 0.0
      %928 = vmatmul.mubr.f32.gmra.mrb[0].mxu0 %v794
      %v929 = vpop.f32.mrb[0].mxu0
      %v930 = vadd.f32 0.0, %v929
      %v931 = vpop.f32.mrb[0].mxu0
      %932 = vmatprep.mubr.f32.mxu0 0.0
      %933 = vmatmul.mubr.f32.gmra.mrb[0].mxu0 %v795
      %v934 = vpop.f32.mrb[0].mxu0
      %v935 = vadd.f32 0.0, %v934
      %v936 = vpop.f32.mrb[0].mxu0
      %937 = vmatprep.mubr.f32.mxu0 0.0
      %938 = vmatmul.mubr.f32.gmra.mrb[0].mxu0 %v796
      %v939 = vpop.f32.mrb[0].mxu0
      %v940 = vadd.f32 0.0, %v939
      %v941 = vpop.f32.mrb[0].mxu0
      %942 = vmatprep.mubr.f32.mxu0 0.0
      %943 = vmatmul.mubr.f32.gmra.mrb[0].mxu0 %v797
      %v944 = vpop.f32.mrb[0].mxu0
      %v945 = vadd.f32 0.0, %v944
      %v946 = vpop.f32.mrb[0].mxu0
      %947 = vmatprep.mubr.f32.mxu0 0.0
      %948 = vmatmul.mubr.f32.gmra.mrb[0].mxu0 %v798
      %v949 = vpop.f32.mrb[0].mxu0
      %v950 = vadd.f32 0.0, %v949
      %v951 = vpop.f32.mrb[0].mxu0
      %952 = vmatprep.mubr.f32.mxu0 0.0
      %953 = vmatmul.mubr.f32.gmra.mrb[0].mxu0 %v799
      %v954 = vpop.f32.mrb[0].mxu0
      %v955 = vadd.f32 0.0, %v954
      %v956 = vpop.f32.mrb[0].mxu0
      %957 = vmatprep.mubr.f32.mxu0 0.0
      %958 = vmatmul.mubr.f32.gmra.mrb[0].mxu0 %v800
      %v959 = vpop.f32.mrb[0].mxu0
      %v960 = vadd.f32 0.0, %v959
      %v961 = vpop.f32.mrb[0].mxu0
      %962 = vmatprep.mubr.f32.mxu0 0.0
      %963 = vmatmul.mubr.f32.gmra.mrb[0].mxu0 %v801
      %v964 = vpop.f32.mrb[0].mxu0
      %v965 = vadd.f32 0.0, %v964
      %v966 = vpop.f32.mrb[0].mxu0
      %967 = vmatprep.mubr.f32.mxu0 0.0
      %968 = vmatmul.mubr.f32.gmra.mrb[0].mxu0 %v802
      %v969 = vpop.f32.mrb[0].mxu0
      %v970 = vadd.f32 0.0, %v969
      %v971 = vpop.f32.mrb[0].mxu0
      %972 = vmatprep.mubr.f32.mxu0 0.0
      %973 = vmatmul.mubr.f32.gmra.mrb[0].mxu0 %v803
      %v974 = vpop.f32.mrb[0].mxu0
      %v975 = vadd.f32 0.0, %v974
      %v976 = vpop.f32.mrb[0].mxu0
      %977 = vmatprep.mubr.f32.mxu0 0.0
      %978 = vmatmul.mubr.f32.gmra.mrb[0].mxu0 %v804
      %v979 = vpop.f32.mrb[0].mxu0
      %v980 = vadd.f32 0.0, %v979
      %v981 = vpop.f32.mrb[0].mxu0
      %982 = vmatprep.mubr.f32.mxu0 0.0
      %983 = vmatmul.mubr.f32.gmra.mrb[0].mxu0 %v805
      %v984 = vpop.f32.mrb[0].mxu0
      %v985 = vadd.f32 0.0, %v984
      %v986 = vpop.f32.mrb[0].mxu0
      %987 = vmatprep.mubr.f32.mxu0 0.0
      %988 = vmatmul.mubr.f32.gmra.mrb[0].mxu0 %v806
      %v989 = vpop.f32.mrb[0].mxu0
      %v990 = vadd.f32 0.0, %v989
      %v991 = vpop.f32.mrb[0].mxu0
      %992 = vmatprep.mubr.f32.mxu0 0.0
      %993 = vmatmul.mubr.f32.gmra.mrb[0].mxu0 %v807
      %v994 = vpop.f32.mrb[0].mxu0
      %v995 = vadd.f32 0.0, %v994
      %v996 = vpop.f32.mrb[0].mxu0
      %997 = vmatprep.mubr.f32.mxu0 0.0
      %998 = vmatmul.mubr.f32.gmra.mrb[0].mxu0 %v808
      %v999 = vpop.f32.mrb[0].mxu0
      %v1000 = vadd.f32 0.0, %v999
      %v1001 = vpop.f32.mrb[0].mxu0
      %1002 = vmatprep.mubr.f32.mxu0 0.0
      %1003 = vmatmul.mubr.f32.gmra.mrb[0].mxu0 %v809
      %v1004 = vpop.f32.mrb[0].mxu0
      %v1005 = vadd.f32 0.0, %v1004
      %v1006 = vpop.f32.mrb[0].mxu0
      %1007 = vmatprep.mubr.f32.mxu0 0.0
      %1008 = vmatmul.mubr.f32.gmra.mrb[0].mxu0 %v810
      %v1009 = vpop.f32.mrb[0].mxu0
      %v1010 = vadd.f32 0.0, %v1009
      %v1011 = vpop.f32.mrb[0].mxu0
      %1012 = vmatprep.mubr.f32.mxu0 0.0
      %1013 = vmatmul.mubr.f32.gmra.mrb[0].mxu0 %v811
      %v1014 = vpop.f32.mrb[0].mxu0
      %v1015 = vadd.f32 0.0, %v1014
      %v1016 = vpop.f32.mrb[0].mxu0
      %1017 = vmatprep.mubr.f32.mxu0 0.0
      %1018 = vmatmul.mubr.f32.gmra.mrb[0].mxu0 %v812
      %v1019 = vpop.f32.mrb[0].mxu0
      %v1020 = vadd.f32 0.0, %v1019
      %v1021 = vpop.f32.mrb[0].mxu0
      %1022 = vmatprep.mubr.f32.mxu0 0.0
      %1023 = vmatmul.mubr.f32.gmra.mrb[0].mxu0 %v813
      %v1024 = vpop.f32.mrb[0].mxu0
      %v1025 = vadd.f32 0.0, %v1024
      %v1026 = vpop.f32.mrb[0].mxu0
      %1027 = vmatprep.mubr.f32.mxu0 0.0
      %1028 = vmatmul.mubr.f32.gmra.mrb[0].mxu0 %v814
      %v1029 = vpop.f32.mrb[0].mxu0
      %v1030 = vadd.f32 0.0, %v1029
      %v1031 = vpop.f32.mrb[0].mxu0
      %1032 = vmatprep.mubr.f32.mxu0 0.0
      %1033 = vmatmul.mubr.f32.gmra.mrb[0].mxu0 %v815
      %v1034 = vpop.f32.mrb[0].mxu0
      %v1035 = vadd.f32 0.0, %v1034
      %v1036 = vpop.f32.mrb[0].mxu0
      %1037 = vmatprep.mubr.f32.mxu0 0.0
      %1038 = vmatmul.mubr.f32.gmra.mrb[0].mxu0 %v816
      %v1039 = vpop.f32.mrb[0].mxu0
      %v1040 = vadd.f32 0.0, %v1039
      %v1041 = vpop.f32.mrb[0].mxu0
      %1042 = vmatprep.mubr.f32.mxu0 0.0
      %1043 = vmatmul.mubr.f32.gmra.mrb[0].mxu0 %v817
      %v1044 = vpop.f32.mrb[0].mxu0
      %v1045 = vadd.f32 0.0, %v1044
      %v1046 = vpop.f32.mrb[0].mxu0
      %1047 = vmatprep.mubr.f32.mxu0 0.0
      %1048 = vmatmul.mubr.f32.gmra.mrb[0].mxu0 %v818
      %v1049 = vpop.f32.mrb[0].mxu0
      %v1050 = vadd.f32 0.0, %v1049
      %v1051 = vpop.f32.mrb[0].mxu0
      %1052 = vmatprep.mubr.f32.mxu0 0.0
      %1053 = vmatmul.mubr.f32.gmra.mrb[0].mxu0 %v819
      %v1054 = vpop.f32.mrb[0].mxu0
      %v1055 = vadd.f32 0.0, %v1054
      %v1056 = vpop.f32.mrb[0].mxu0
      %1057 = vmatprep.mubr.f32.mxu0 0.0
      %1058 = vmatmul.mubr.f32.gmra.mrb[0].mxu0 %v820
      %v1059 = vpop.f32.mrb[0].mxu0
      %v1060 = vadd.f32 0.0, %v1059
      %v1061 = vpop.f32.mrb[0].mxu0
      %1062 = vdwg.mxu0
      %v1063 = vadd.f32 %v757, %v905
      %v1064 = vadd.f32 %v758, %v910
      %v1065 = vadd.f32 %v759, %v915
      %v1066 = vadd.f32 %v760, %v920
      %v1067 = vadd.f32 %v761, %v925
      %v1068 = vadd.f32 %v762, %v930
      %v1069 = vadd.f32 %v763, %v935
      %v1070 = vadd.f32 %v764, %v940
      %v1071 = vadd.f32 %v765, %v945
      %v1072 = vadd.f32 %v766, %v950
      %v1073 = vadd.f32 %v767, %v955
      %v1074 = vadd.f32 %v768, %v960
      %v1075 = vadd.f32 %v769, %v965
      %v1076 = vadd.f32 %v770, %v970
      %v1077 = vadd.f32 %v771, %v975
      %v1078 = vadd.f32 %v772, %v980
      %v1079 = vadd.f32 %v773, %v985
      %v1080 = vadd.f32 %v774, %v990
      %v1081 = vadd.f32 %v775, %v995
      %v1082 = vadd.f32 %v776, %v1000
      %v1083 = vadd.f32 %v777, %v1005
      %v1084 = vadd.f32 %v778, %v1010
      %v1085 = vadd.f32 %v779, %v1015
      %v1086 = vadd.f32 %v780, %v1020
      %v1087 = vadd.f32 %v781, %v1025
      %v1088 = vadd.f32 %v782, %v1030
      %v1089 = vadd.f32 %v783, %v1035
      %v1090 = vadd.f32 %v784, %v1040
      %v1091 = vadd.f32 %v785, %v1045
      %v1092 = vadd.f32 %v786, %v1050
      %v1093 = vadd.f32 %v787, %v1055
      %v1094 = vadd.f32 %v788, %v1060
      %s1095 = scalar_lea.vmem %s165, 24
      %v1096 = vld [vmem:[%s1095] sm:$0xff]
      %v1097 = vld [vmem:[%s1095 + $0x8] sm:$0xff]
      %v1098 = vld [vmem:[%s1095 + $0x18] sm:$0xff]
      %v1099 = vld [vmem:[%s1095 + $0x20] sm:$0xff]
      %v1100 = vld [vmem:[%s1095 + $0x30] sm:$0xff]
      %v1101 = vld [vmem:[%s1095 + $0x38] sm:$0xff]
      %v1102 = vld [vmem:[%s1095 + $0x48] sm:$0xff]
      %v1103 = vld [vmem:[%s1095 + $0x50] sm:$0xff]
      %v1104 = vld [vmem:[%s1095 + $0x60] sm:$0xff]
      %v1105 = vld [vmem:[%s1095 + $0x68] sm:$0xff]
      %v1106 = vld [vmem:[%s1095 + $0x78] sm:$0xff]
      %v1107 = vld [vmem:[%s1095 + $0x80] sm:$0xff]
      %v1108 = vld [vmem:[%s1095 + $0x90] sm:$0xff]
      %v1109 = vld [vmem:[%s1095 + $0x98] sm:$0xff]
      %v1110 = vld [vmem:[%s1095 + $0xa8] sm:$0xff]
      %v1111 = vld [vmem:[%s1095 + $0xb0] sm:$0xff]
      %v1112 = vld [vmem:[%s1095 + $0xc0] sm:$0xff]
      %v1113 = vld [vmem:[%s1095 + $0xc8] sm:$0xff]
      %v1114 = vld [vmem:[%s1095 + $0xd8] sm:$0xff]
      %v1115 = vld [vmem:[%s1095 + $0xe0] sm:$0xff]
      %v1116 = vld [vmem:[%s1095 + $0xf0] sm:$0xff]
      %v1117 = vld [vmem:[%s1095 + $0xf8] sm:$0xff]
      %v1118 = vld [vmem:[%s1095 + $0x108] sm:$0xff]
      %v1119 = vld [vmem:[%s1095 + $0x110] sm:$0xff]
      %v1120 = vld [vmem:[%s1095 + $0x120] sm:$0xff]
      %v1121 = vld [vmem:[%s1095 + $0x128] sm:$0xff]
      %v1122 = vld [vmem:[%s1095 + $0x138] sm:$0xff]
      %v1123 = vld [vmem:[%s1095 + $0x140] sm:$0xff]
      %v1124 = vld [vmem:[%s1095 + $0x150] sm:$0xff]
      %v1125 = vld [vmem:[%s1095 + $0x158] sm:$0xff]
      %v1126 = vld [vmem:[%s1095 + $0x168] sm:$0xff]
      %v1127 = vld [vmem:[%s1095 + $0x170] sm:$0xff]
      %s1128 = scalar_lea.vmem %s1, 384
      %v1129 = vld [vmem:[%s1128] sm:$0xff]
      %v1130 = vld [vmem:[%s1128 + $0x8] sm:$0xff]
      %v1131 = vld [vmem:[%s1128 + $0x10] sm:$0xff]
      %v1132 = vld [vmem:[%s1128 + $0x18] sm:$0xff]
      %v1133 = vld [vmem:[%s1128 + $0x20] sm:$0xff]
      %v1134 = vld [vmem:[%s1128 + $0x28] sm:$0xff]
      %v1135 = vld [vmem:[%s1128 + $0x30] sm:$0xff]
      %v1136 = vld [vmem:[%s1128 + $0x38] sm:$0xff]
      %v1137 = vld [vmem:[%s1128 + $0x40] sm:$0xff]
      %v1138 = vld [vmem:[%s1128 + $0x48] sm:$0xff]
      %v1139 = vld [vmem:[%s1128 + $0x50] sm:$0xff]
      %v1140 = vld [vmem:[%s1128 + $0x58] sm:$0xff]
      %v1141 = vld [vmem:[%s1128 + $0x60] sm:$0xff]
      %v1142 = vld [vmem:[%s1128 + $0x68] sm:$0xff]
      %v1143 = vld [vmem:[%s1128 + $0x70] sm:$0xff]
      %v1144 = vld [vmem:[%s1128 + $0x78] sm:$0xff]
      %1145 = vmatprep.subr.mxu0 0.0
      %1146 = vmatpush1.msra.mxu0 %v1129
      %1147 = vmatprep.subr.mxu0 0.0
      %1148 = vmatpush1.msra.mxu0 %v1130
      %1149 = vmatprep.subr.mxu0 0.0
      %1150 = vmatpush1.msra.mxu0 %v1131
      %1151 = vmatprep.subr.mxu0 0.0
      %1152 = vmatpush1.msra.mxu0 %v1132
      %1153 = vmatprep.subr.mxu0 0.0
      %1154 = vmatpush1.msra.mxu0 %v1133
      %1155 = vmatprep.subr.mxu0 0.0
      %1156 = vmatpush1.msra.mxu0 %v1134
      %1157 = vmatprep.subr.mxu0 0.0
      %1158 = vmatpush1.msra.mxu0 %v1135
      %1159 = vmatprep.subr.mxu0 0.0
      %1160 = vmatpush1.msra.mxu0 %v1136
      %1161 = vmatprep.subr.mxu0 0.0
      %1162 = vmatpush1.msra.mxu0 %v1137
      %1163 = vmatprep.subr.mxu0 0.0
      %1164 = vmatpush1.msra.mxu0 %v1138
      %1165 = vmatprep.subr.mxu0 0.0
      %1166 = vmatpush1.msra.mxu0 %v1139
      %1167 = vmatprep.subr.mxu0 0.0
      %1168 = vmatpush1.msra.mxu0 %v1140
      %1169 = vmatprep.subr.mxu0 0.0
      %1170 = vmatpush1.msra.mxu0 %v1141
      %1171 = vmatprep.subr.mxu0 0.0
      %1172 = vmatpush1.msra.mxu0 %v1142
      %1173 = vmatprep.subr.mxu0 0.0
      %1174 = vmatpush1.msra.mxu0 %v1143
      %1175 = vmatprep.subr.mxu0 0.0
      %1176 = vmatpush1.msra.mxu0 %v1144
      %1177 = vmatprep.subr.mxu0 0.0
      %1178 = vmatpush1.msra.mxu0 0.0
      %1179 = vmatprep.subr.mxu0 0.0
      %1180 = vmatpush1.msra.mxu0 0.0
      %1181 = vmatprep.subr.mxu0 0.0
      %1182 = vmatpush1.msra.mxu0 0.0
      %1183 = vmatprep.subr.mxu0 0.0
      %1184 = vmatpush1.msra.mxu0 0.0
      %1185 = vmatprep.subr.mxu0 0.0
      %1186 = vmatpush1.msra.mxu0 0.0
      %1187 = vmatprep.subr.mxu0 0.0
      %1188 = vmatpush1.msra.mxu0 0.0
      %1189 = vmatprep.subr.mxu0 0.0
      %1190 = vmatpush1.msra.mxu0 0.0
      %1191 = vmatprep.subr.mxu0 0.0
      %1192 = vmatpush1.msra.mxu0 0.0
      %1193 = vmatprep.subr.mxu0 0.0
      %1194 = vmatpush1.msra.mxu0 0.0
      %1195 = vmatprep.subr.mxu0 0.0
      %1196 = vmatpush1.msra.mxu0 0.0
      %1197 = vmatprep.subr.mxu0 0.0
      %1198 = vmatpush1.msra.mxu0 0.0
      %1199 = vmatprep.subr.mxu0 0.0
      %1200 = vmatpush1.msra.mxu0 0.0
      %1201 = vmatprep.subr.mxu0 0.0
      %1202 = vmatpush1.msra.mxu0 0.0
      %1203 = vmatprep.subr.mxu0 0.0
      %1204 = vmatpush1.msra.mxu0 0.0
      %1205 = vmatprep.subr.mxu0 0.0
      %1206 = vmatpush1.msra.mxu0 0.0
      %1207 = vmatprep.subr.mxu0 0.0
      %1208 = vmatpush1.msra.mxu0 0.0
      %1209 = vmatprep.mubr.f32.mxu0 0.0
      %1210 = vmatmul.mubr.f32.gmra.mrb[0].mxu0 %v1096
      %v1211 = vpop.f32.mrb[0].mxu0
      %v1212 = vadd.f32 0.0, %v1211
      %v1213 = vpop.f32.mrb[0].mxu0
      %1214 = vmatprep.mubr.f32.mxu0 0.0
      %1215 = vmatmul.mubr.f32.gmra.mrb[0].mxu0 %v1097
      %v1216 = vpop.f32.mrb[0].mxu0
      %v1217 = vadd.f32 0.0, %v1216
      %v1218 = vpop.f32.mrb[0].mxu0
      %1219 = vmatprep.mubr.f32.mxu0 0.0
      %1220 = vmatmul.mubr.f32.gmra.mrb[0].mxu0 %v1098
      %v1221 = vpop.f32.mrb[0].mxu0
      %v1222 = vadd.f32 0.0, %v1221
      %v1223 = vpop.f32.mrb[0].mxu0
      %1224 = vmatprep.mubr.f32.mxu0 0.0
      %1225 = vmatmul.mubr.f32.gmra.mrb[0].mxu0 %v1099
      %v1226 = vpop.f32.mrb[0].mxu0
      %v1227 = vadd.f32 0.0, %v1226
      %v1228 = vpop.f32.mrb[0].mxu0
      %1229 = vmatprep.mubr.f32.mxu0 0.0
      %1230 = vmatmul.mubr.f32.gmra.mrb[0].mxu0 %v1100
      %v1231 = vpop.f32.mrb[0].mxu0
      %v1232 = vadd.f32 0.0, %v1231
      %v1233 = vpop.f32.mrb[0].mxu0
      %1234 = vmatprep.mubr.f32.mxu0 0.0
      %1235 = vmatmul.mubr.f32.gmra.mrb[0].mxu0 %v1101
      %v1236 = vpop.f32.mrb[0].mxu0
      %v1237 = vadd.f32 0.0, %v1236
      %v1238 = vpop.f32.mrb[0].mxu0
      %1239 = vmatprep.mubr.f32.mxu0 0.0
      %1240 = vmatmul.mubr.f32.gmra.mrb[0].mxu0 %v1102
      %v1241 = vpop.f32.mrb[0].mxu0
      %v1242 = vadd.f32 0.0, %v1241
      %v1243 = vpop.f32.mrb[0].mxu0
      %1244 = vmatprep.mubr.f32.mxu0 0.0
      %1245 = vmatmul.mubr.f32.gmra.mrb[0].mxu0 %v1103
      %v1246 = vpop.f32.mrb[0].mxu0
      %v1247 = vadd.f32 0.0, %v1246
      %v1248 = vpop.f32.mrb[0].mxu0
      %1249 = vmatprep.mubr.f32.mxu0 0.0
      %1250 = vmatmul.mubr.f32.gmra.mrb[0].mxu0 %v1104
      %v1251 = vpop.f32.mrb[0].mxu0
      %v1252 = vadd.f32 0.0, %v1251
      %v1253 = vpop.f32.mrb[0].mxu0
      %1254 = vmatprep.mubr.f32.mxu0 0.0
      %1255 = vmatmul.mubr.f32.gmra.mrb[0].mxu0 %v1105
      %v1256 = vpop.f32.mrb[0].mxu0
      %v1257 = vadd.f32 0.0, %v1256
      %v1258 = vpop.f32.mrb[0].mxu0
      %1259 = vmatprep.mubr.f32.mxu0 0.0
      %1260 = vmatmul.mubr.f32.gmra.mrb[0].mxu0 %v1106
      %v1261 = vpop.f32.mrb[0].mxu0
      %v1262 = vadd.f32 0.0, %v1261
      %v1263 = vpop.f32.mrb[0].mxu0
      %1264 = vmatprep.mubr.f32.mxu0 0.0
      %1265 = vmatmul.mubr.f32.gmra.mrb[0].mxu0 %v1107
      %v1266 = vpop.f32.mrb[0].mxu0
      %v1267 = vadd.f32 0.0, %v1266
      %v1268 = vpop.f32.mrb[0].mxu0
      %1269 = vmatprep.mubr.f32.mxu0 0.0
      %1270 = vmatmul.mubr.f32.gmra.mrb[0].mxu0 %v1108
      %v1271 = vpop.f32.mrb[0].mxu0
      %v1272 = vadd.f32 0.0, %v1271
      %v1273 = vpop.f32.mrb[0].mxu0
      %1274 = vmatprep.mubr.f32.mxu0 0.0
      %1275 = vmatmul.mubr.f32.gmra.mrb[0].mxu0 %v1109
      %v1276 = vpop.f32.mrb[0].mxu0
      %v1277 = vadd.f32 0.0, %v1276
      %v1278 = vpop.f32.mrb[0].mxu0
      %1279 = vmatprep.mubr.f32.mxu0 0.0
      %1280 = vmatmul.mubr.f32.gmra.mrb[0].mxu0 %v1110
      %v1281 = vpop.f32.mrb[0].mxu0
      %v1282 = vadd.f32 0.0, %v1281
      %v1283 = vpop.f32.mrb[0].mxu0
      %1284 = vmatprep.mubr.f32.mxu0 0.0
      %1285 = vmatmul.mubr.f32.gmra.mrb[0].mxu0 %v1111
      %v1286 = vpop.f32.mrb[0].mxu0
      %v1287 = vadd.f32 0.0, %v1286
      %v1288 = vpop.f32.mrb[0].mxu0
      %1289 = vmatprep.mubr.f32.mxu0 0.0
      %1290 = vmatmul.mubr.f32.gmra.mrb[0].mxu0 %v1112
      %v1291 = vpop.f32.mrb[0].mxu0
      %v1292 = vadd.f32 0.0, %v1291
      %v1293 = vpop.f32.mrb[0].mxu0
      %1294 = vmatprep.mubr.f32.mxu0 0.0
      %1295 = vmatmul.mubr.f32.gmra.mrb[0].mxu0 %v1113
      %v1296 = vpop.f32.mrb[0].mxu0
      %v1297 = vadd.f32 0.0, %v1296
      %v1298 = vpop.f32.mrb[0].mxu0
      %1299 = vmatprep.mubr.f32.mxu0 0.0
      %1300 = vmatmul.mubr.f32.gmra.mrb[0].mxu0 %v1114
      %v1301 = vpop.f32.mrb[0].mxu0
      %v1302 = vadd.f32 0.0, %v1301
      %v1303 = vpop.f32.mrb[0].mxu0
      %1304 = vmatprep.mubr.f32.mxu0 0.0
      %1305 = vmatmul.mubr.f32.gmra.mrb[0].mxu0 %v1115
      %v1306 = vpop.f32.mrb[0].mxu0
      %v1307 = vadd.f32 0.0, %v1306
      %v1308 = vpop.f32.mrb[0].mxu0
      %1309 = vmatprep.mubr.f32.mxu0 0.0
      %1310 = vmatmul.mubr.f32.gmra.mrb[0].mxu0 %v1116
      %v1311 = vpop.f32.mrb[0].mxu0
      %v1312 = vadd.f32 0.0, %v1311
      %v1313 = vpop.f32.mrb[0].mxu0
      %1314 = vmatprep.mubr.f32.mxu0 0.0
      %1315 = vmatmul.mubr.f32.gmra.mrb[0].mxu0 %v1117
      %v1316 = vpop.f32.mrb[0].mxu0
      %v1317 = vadd.f32 0.0, %v1316
      %v1318 = vpop.f32.mrb[0].mxu0
      %1319 = vmatprep.mubr.f32.mxu0 0.0
      %1320 = vmatmul.mubr.f32.gmra.mrb[0].mxu0 %v1118
      %v1321 = vpop.f32.mrb[0].mxu0
      %v1322 = vadd.f32 0.0, %v1321
      %v1323 = vpop.f32.mrb[0].mxu0
      %1324 = vmatprep.mubr.f32.mxu0 0.0
      %1325 = vmatmul.mubr.f32.gmra.mrb[0].mxu0 %v1119
      %v1326 = vpop.f32.mrb[0].mxu0
      %v1327 = vadd.f32 0.0, %v1326
      %v1328 = vpop.f32.mrb[0].mxu0
      %1329 = vmatprep.mubr.f32.mxu0 0.0
      %1330 = vmatmul.mubr.f32.gmra.mrb[0].mxu0 %v1120
      %v1331 = vpop.f32.mrb[0].mxu0
      %v1332 = vadd.f32 0.0, %v1331
      %v1333 = vpop.f32.mrb[0].mxu0
      %1334 = vmatprep.mubr.f32.mxu0 0.0
      %1335 = vmatmul.mubr.f32.gmra.mrb[0].mxu0 %v1121
      %v1336 = vpop.f32.mrb[0].mxu0
      %v1337 = vadd.f32 0.0, %v1336
      %v1338 = vpop.f32.mrb[0].mxu0
      %1339 = vmatprep.mubr.f32.mxu0 0.0
      %1340 = vmatmul.mubr.f32.gmra.mrb[0].mxu0 %v1122
      %v1341 = vpop.f32.mrb[0].mxu0
      %v1342 = vadd.f32 0.0, %v1341
      %v1343 = vpop.f32.mrb[0].mxu0
      %1344 = vmatprep.mubr.f32.mxu0 0.0
      %1345 = vmatmul.mubr.f32.gmra.mrb[0].mxu0 %v1123
      %v1346 = vpop.f32.mrb[0].mxu0
      %v1347 = vadd.f32 0.0, %v1346
      %v1348 = vpop.f32.mrb[0].mxu0
      %1349 = vmatprep.mubr.f32.mxu0 0.0
      %1350 = vmatmul.mubr.f32.gmra.mrb[0].mxu0 %v1124
      %v1351 = vpop.f32.mrb[0].mxu0
      %v1352 = vadd.f32 0.0, %v1351
      %v1353 = vpop.f32.mrb[0].mxu0
      %1354 = vmatprep.mubr.f32.mxu0 0.0
      %1355 = vmatmul.mubr.f32.gmra.mrb[0].mxu0 %v1125
      %v1356 = vpop.f32.mrb[0].mxu0
      %v1357 = vadd.f32 0.0, %v1356
      %v1358 = vpop.f32.mrb[0].mxu0
      %1359 = vmatprep.mubr.f32.mxu0 0.0
      %1360 = vmatmul.mubr.f32.gmra.mrb[0].mxu0 %v1126
      %v1361 = vpop.f32.mrb[0].mxu0
      %v1362 = vadd.f32 0.0, %v1361
      %v1363 = vpop.f32.mrb[0].mxu0
      %1364 = vmatprep.mubr.f32.mxu0 0.0
      %1365 = vmatmul.mubr.f32.gmra.mrb[0].mxu0 %v1127
      %v1366 = vpop.f32.mrb[0].mxu0
      %v1367 = vadd.f32 0.0, %v1366
      %v1368 = vpop.f32.mrb[0].mxu0
      %1369 = vdwg.mxu0
      %v1370 = vadd.f32 %v1063, %v1212
      %v1371 = vadd.f32 %v1064, %v1217
      %v1372 = vadd.f32 %v1065, %v1222
      %v1373 = vadd.f32 %v1066, %v1227
      %v1374 = vadd.f32 %v1067, %v1232
      %v1375 = vadd.f32 %v1068, %v1237
      %v1376 = vadd.f32 %v1069, %v1242
      %v1377 = vadd.f32 %v1070, %v1247
      %v1378 = vadd.f32 %v1071, %v1252
      %v1379 = vadd.f32 %v1072, %v1257
      %v1380 = vadd.f32 %v1073, %v1262
      %v1381 = vadd.f32 %v1074, %v1267
      %v1382 = vadd.f32 %v1075, %v1272
      %v1383 = vadd.f32 %v1076, %v1277
      %v1384 = vadd.f32 %v1077, %v1282
      %v1385 = vadd.f32 %v1078, %v1287
      %v1386 = vadd.f32 %v1079, %v1292
      %v1387 = vadd.f32 %v1080, %v1297
      %v1388 = vadd.f32 %v1081, %v1302
      %v1389 = vadd.f32 %v1082, %v1307
      %v1390 = vadd.f32 %v1083, %v1312
      %v1391 = vadd.f32 %v1084, %v1317
      %v1392 = vadd.f32 %v1085, %v1322
      %v1393 = vadd.f32 %v1086, %v1327
      %v1394 = vadd.f32 %v1087, %v1332
      %v1395 = vadd.f32 %v1088, %v1337
      %v1396 = vadd.f32 %v1089, %v1342
      %v1397 = vadd.f32 %v1090, %v1347
      %v1398 = vadd.f32 %v1091, %v1352
      %v1399 = vadd.f32 %v1092, %v1357
      %v1400 = vadd.f32 %v1093, %v1362
      %v1401 = vadd.f32 %v1094, %v1367
      %v1402 = vld [vmem:[%s1095 + $0x1] sm:$0xff]
      %v1403 = vld [vmem:[%s1095 + $0x9] sm:$0xff]
      %v1404 = vld [vmem:[%s1095 + $0x19] sm:$0xff]
      %v1405 = vld [vmem:[%s1095 + $0x21] sm:$0xff]
      %v1406 = vld [vmem:[%s1095 + $0x31] sm:$0xff]
      %v1407 = vld [vmem:[%s1095 + $0x39] sm:$0xff]
      %v1408 = vld [vmem:[%s1095 + $0x49] sm:$0xff]
      %v1409 = vld [vmem:[%s1095 + $0x51] sm:$0xff]
      %v1410 = vld [vmem:[%s1095 + $0x61] sm:$0xff]
      %v1411 = vld [vmem:[%s1095 + $0x69] sm:$0xff]
      %v1412 = vld [vmem:[%s1095 + $0x79] sm:$0xff]
      %v1413 = vld [vmem:[%s1095 + $0x81] sm:$0xff]
      %v1414 = vld [vmem:[%s1095 + $0x91] sm:$0xff]
      %v1415 = vld [vmem:[%s1095 + $0x99] sm:$0xff]
      %v1416 = vld [vmem:[%s1095 + $0xa9] sm:$0xff]
      %v1417 = vld [vmem:[%s1095 + $0xb1] sm:$0xff]
      %v1418 = vld [vmem:[%s1095 + $0xc1] sm:$0xff]
      %v1419 = vld [vmem:[%s1095 + $0xc9] sm:$0xff]
      %v1420 = vld [vmem:[%s1095 + $0xd9] sm:$0xff]
      %v1421 = vld [vmem:[%s1095 + $0xe1] sm:$0xff]
      %v1422 = vld [vmem:[%s1095 + $0xf1] sm:$0xff]
      %v1423 = vld [vmem:[%s1095 + $0xf9] sm:$0xff]
      %v1424 = vld [vmem:[%s1095 + $0x109] sm:$0xff]
      %v1425 = vld [vmem:[%s1095 + $0x111] sm:$0xff]
      %v1426 = vld [vmem:[%s1095 + $0x121] sm:$0xff]
      %v1427 = vld [vmem:[%s1095 + $0x129] sm:$0xff]
      %v1428 = vld [vmem:[%s1095 + $0x139] sm:$0xff]
      %v1429 = vld [vmem:[%s1095 + $0x141] sm:$0xff]
      %v1430 = vld [vmem:[%s1095 + $0x151] sm:$0xff]
      %v1431 = vld [vmem:[%s1095 + $0x159] sm:$0xff]
      %v1432 = vld [vmem:[%s1095 + $0x169] sm:$0xff]
      %v1433 = vld [vmem:[%s1095 + $0x171] sm:$0xff]
      %s1434 = scalar_lea.vmem %s1, 512
      %v1435 = vld [vmem:[%s1434] sm:$0xff]
      %v1436 = vld [vmem:[%s1434 + $0x8] sm:$0xff]
      %v1437 = vld [vmem:[%s1434 + $0x10] sm:$0xff]
      %v1438 = vld [vmem:[%s1434 + $0x18] sm:$0xff]
      %v1439 = vld [vmem:[%s1434 + $0x20] sm:$0xff]
      %v1440 = vld [vmem:[%s1434 + $0x28] sm:$0xff]
      %v1441 = vld [vmem:[%s1434 + $0x30] sm:$0xff]
      %v1442 = vld [vmem:[%s1434 + $0x38] sm:$0xff]
      %v1443 = vld [vmem:[%s1434 + $0x40] sm:$0xff]
      %v1444 = vld [vmem:[%s1434 + $0x48] sm:$0xff]
      %v1445 = vld [vmem:[%s1434 + $0x50] sm:$0xff]
      %v1446 = vld [vmem:[%s1434 + $0x58] sm:$0xff]
      %v1447 = vld [vmem:[%s1434 + $0x60] sm:$0xff]
      %v1448 = vld [vmem:[%s1434 + $0x68] sm:$0xff]
      %v1449 = vld [vmem:[%s1434 + $0x70] sm:$0xff]
      %v1450 = vld [vmem:[%s1434 + $0x78] sm:$0xff]
      %1451 = vmatprep.subr.mxu0 0.0
      %1452 = vmatpush1.msra.mxu0 %v1435
      %1453 = vmatprep.subr.mxu0 0.0
      %1454 = vmatpush1.msra.mxu0 %v1436
      %1455 = vmatprep.subr.mxu0 0.0
      %1456 = vmatpush1.msra.mxu0 %v1437
      %1457 = vmatprep.subr.mxu0 0.0
      %1458 = vmatpush1.msra.mxu0 %v1438
      %1459 = vmatprep.subr.mxu0 0.0
      %1460 = vmatpush1.msra.mxu0 %v1439
      %1461 = vmatprep.subr.mxu0 0.0
      %1462 = vmatpush1.msra.mxu0 %v1440
      %1463 = vmatprep.subr.mxu0 0.0
      %1464 = vmatpush1.msra.mxu0 %v1441
      %1465 = vmatprep.subr.mxu0 0.0
      %1466 = vmatpush1.msra.mxu0 %v1442
      %1467 = vmatprep.subr.mxu0 0.0
      %1468 = vmatpush1.msra.mxu0 %v1443
      %1469 = vmatprep.subr.mxu0 0.0
      %1470 = vmatpush1.msra.mxu0 %v1444
      %1471 = vmatprep.subr.mxu0 0.0
      %1472 = vmatpush1.msra.mxu0 %v1445
      %1473 = vmatprep.subr.mxu0 0.0
      %1474 = vmatpush1.msra.mxu0 %v1446
      %1475 = vmatprep.subr.mxu0 0.0
      %1476 = vmatpush1.msra.mxu0 %v1447
      %1477 = vmatprep.subr.mxu0 0.0
      %1478 = vmatpush1.msra.mxu0 %v1448
      %1479 = vmatprep.subr.mxu0 0.0
      %1480 = vmatpush1.msra.mxu0 %v1449
      %1481 = vmatprep.subr.mxu0 0.0
      %1482 = vmatpush1.msra.mxu0 %v1450
      %1483 = vmatprep.subr.mxu0 0.0
      %1484 = vmatpush1.msra.mxu0 0.0
      %1485 = vmatprep.subr.mxu0 0.0
      %1486 = vmatpush1.msra.mxu0 0.0
      %1487 = vmatprep.subr.mxu0 0.0
      %1488 = vmatpush1.msra.mxu0 0.0
      %1489 = vmatprep.subr.mxu0 0.0
      %1490 = vmatpush1.msra.mxu0 0.0
      %1491 = vmatprep.subr.mxu0 0.0
      %1492 = vmatpush1.msra.mxu0 0.0
      %1493 = vmatprep.subr.mxu0 0.0
      %1494 = vmatpush1.msra.mxu0 0.0
      %1495 = vmatprep.subr.mxu0 0.0
      %1496 = vmatpush1.msra.mxu0 0.0
      %1497 = vmatprep.subr.mxu0 0.0
      %1498 = vmatpush1.msra.mxu0 0.0
      %1499 = vmatprep.subr.mxu0 0.0
      %1500 = vmatpush1.msra.mxu0 0.0
      %1501 = vmatprep.subr.mxu0 0.0
      %1502 = vmatpush1.msra.mxu0 0.0
      %1503 = vmatprep.subr.mxu0 0.0
      %1504 = vmatpush1.msra.mxu0 0.0
      %1505 = vmatprep.subr.mxu0 0.0
      %1506 = vmatpush1.msra.mxu0 0.0
      %1507 = vmatprep.subr.mxu0 0.0
      %1508 = vmatpush1.msra.mxu0 0.0
      %1509 = vmatprep.subr.mxu0 0.0
      %1510 = vmatpush1.msra.mxu0 0.0
      %1511 = vmatprep.subr.mxu0 0.0
      %1512 = vmatpush1.msra.mxu0 0.0
      %1513 = vmatprep.subr.mxu0 0.0
      %1514 = vmatpush1.msra.mxu0 0.0
      %1515 = vmatprep.mubr.f32.mxu0 0.0
      %1516 = vmatmul.mubr.f32.gmra.mrb[0].mxu0 %v1402
      %v1517 = vpop.f32.mrb[0].mxu0
      %v1518 = vadd.f32 0.0, %v1517
      %v1519 = vpop.f32.mrb[0].mxu0
      %1520 = vmatprep.mubr.f32.mxu0 0.0
      %1521 = vmatmul.mubr.f32.gmra.mrb[0].mxu0 %v1403
      %v1522 = vpop.f32.mrb[0].mxu0
      %v1523 = vadd.f32 0.0, %v1522
      %v1524 = vpop.f32.mrb[0].mxu0
      %1525 = vmatprep.mubr.f32.mxu0 0.0
      %1526 = vmatmul.mubr.f32.gmra.mrb[0].mxu0 %v1404
      %v1527 = vpop.f32.mrb[0].mxu0
      %v1528 = vadd.f32 0.0, %v1527
      %v1529 = vpop.f32.mrb[0].mxu0
      %1530 = vmatprep.mubr.f32.mxu0 0.0
      %1531 = vmatmul.mubr.f32.gmra.mrb[0].mxu0 %v1405
      %v1532 = vpop.f32.mrb[0].mxu0
      %v1533 = vadd.f32 0.0, %v1532
      %v1534 = vpop.f32.mrb[0].mxu0
      %1535 = vmatprep.mubr.f32.mxu0 0.0
      %1536 = vmatmul.mubr.f32.gmra.mrb[0].mxu0 %v1406
      %v1537 = vpop.f32.mrb[0].mxu0
      %v1538 = vadd.f32 0.0, %v1537
      %v1539 = vpop.f32.mrb[0].mxu0
      %1540 = vmatprep.mubr.f32.mxu0 0.0
      %1541 = vmatmul.mubr.f32.gmra.mrb[0].mxu0 %v1407
      %v1542 = vpop.f32.mrb[0].mxu0
      %v1543 = vadd.f32 0.0, %v1542
      %v1544 = vpop.f32.mrb[0].mxu0
      %1545 = vmatprep.mubr.f32.mxu0 0.0
      %1546 = vmatmul.mubr.f32.gmra.mrb[0].mxu0 %v1408
      %v1547 = vpop.f32.mrb[0].mxu0
      %v1548 = vadd.f32 0.0, %v1547
      %v1549 = vpop.f32.mrb[0].mxu0
      %1550 = vmatprep.mubr.f32.mxu0 0.0
      %1551 = vmatmul.mubr.f32.gmra.mrb[0].mxu0 %v1409
      %v1552 = vpop.f32.mrb[0].mxu0
      %v1553 = vadd.f32 0.0, %v1552
      %v1554 = vpop.f32.mrb[0].mxu0
      %1555 = vmatprep.mubr.f32.mxu0 0.0
      %1556 = vmatmul.mubr.f32.gmra.mrb[0].mxu0 %v1410
      %v1557 = vpop.f32.mrb[0].mxu0
      %v1558 = vadd.f32 0.0, %v1557
      %v1559 = vpop.f32.mrb[0].mxu0
      %1560 = vmatprep.mubr.f32.mxu0 0.0
      %1561 = vmatmul.mubr.f32.gmra.mrb[0].mxu0 %v1411
      %v1562 = vpop.f32.mrb[0].mxu0
      %v1563 = vadd.f32 0.0, %v1562
      %v1564 = vpop.f32.mrb[0].mxu0
      %1565 = vmatprep.mubr.f32.mxu0 0.0
      %1566 = vmatmul.mubr.f32.gmra.mrb[0].mxu0 %v1412
      %v1567 = vpop.f32.mrb[0].mxu0
      %v1568 = vadd.f32 0.0, %v1567
      %v1569 = vpop.f32.mrb[0].mxu0
      %1570 = vmatprep.mubr.f32.mxu0 0.0
      %1571 = vmatmul.mubr.f32.gmra.mrb[0].mxu0 %v1413
      %v1572 = vpop.f32.mrb[0].mxu0
      %v1573 = vadd.f32 0.0, %v1572
      %v1574 = vpop.f32.mrb[0].mxu0
      %1575 = vmatprep.mubr.f32.mxu0 0.0
      %1576 = vmatmul.mubr.f32.gmra.mrb[0].mxu0 %v1414
      %v1577 = vpop.f32.mrb[0].mxu0
      %v1578 = vadd.f32 0.0, %v1577
      %v1579 = vpop.f32.mrb[0].mxu0
      %1580 = vmatprep.mubr.f32.mxu0 0.0
      %1581 = vmatmul.mubr.f32.gmra.mrb[0].mxu0 %v1415
      %v1582 = vpop.f32.mrb[0].mxu0
      %v1583 = vadd.f32 0.0, %v1582
      %v1584 = vpop.f32.mrb[0].mxu0
      %1585 = vmatprep.mubr.f32.mxu0 0.0
      %1586 = vmatmul.mubr.f32.gmra.mrb[0].mxu0 %v1416
      %v1587 = vpop.f32.mrb[0].mxu0
      %v1588 = vadd.f32 0.0, %v1587
      %v1589 = vpop.f32.mrb[0].mxu0
      %1590 = vmatprep.mubr.f32.mxu0 0.0
      %1591 = vmatmul.mubr.f32.gmra.mrb[0].mxu0 %v1417
      %v1592 = vpop.f32.mrb[0].mxu0
      %v1593 = vadd.f32 0.0, %v1592
      %v1594 = vpop.f32.mrb[0].mxu0
      %1595 = vmatprep.mubr.f32.mxu0 0.0
      %1596 = vmatmul.mubr.f32.gmra.mrb[0].mxu0 %v1418
      %v1597 = vpop.f32.mrb[0].mxu0
      %v1598 = vadd.f32 0.0, %v1597
      %v1599 = vpop.f32.mrb[0].mxu0
      %1600 = vmatprep.mubr.f32.mxu0 0.0
      %1601 = vmatmul.mubr.f32.gmra.mrb[0].mxu0 %v1419
      %v1602 = vpop.f32.mrb[0].mxu0
      %v1603 = vadd.f32 0.0, %v1602
      %v1604 = vpop.f32.mrb[0].mxu0
      %1605 = vmatprep.mubr.f32.mxu0 0.0
      %1606 = vmatmul.mubr.f32.gmra.mrb[0].mxu0 %v1420
      %v1607 = vpop.f32.mrb[0].mxu0
      %v1608 = vadd.f32 0.0, %v1607
      %v1609 = vpop.f32.mrb[0].mxu0
      %1610 = vmatprep.mubr.f32.mxu0 0.0
      %1611 = vmatmul.mubr.f32.gmra.mrb[0].mxu0 %v1421
      %v1612 = vpop.f32.mrb[0].mxu0
      %v1613 = vadd.f32 0.0, %v1612
      %v1614 = vpop.f32.mrb[0].mxu0
      %1615 = vmatprep.mubr.f32.mxu0 0.0
      %1616 = vmatmul.mubr.f32.gmra.mrb[0].mxu0 %v1422
      %v1617 = vpop.f32.mrb[0].mxu0
      %v1618 = vadd.f32 0.0, %v1617
      %v1619 = vpop.f32.mrb[0].mxu0
      %1620 = vmatprep.mubr.f32.mxu0 0.0
      %1621 = vmatmul.mubr.f32.gmra.mrb[0].mxu0 %v1423
      %v1622 = vpop.f32.mrb[0].mxu0
      %v1623 = vadd.f32 0.0, %v1622
      %v1624 = vpop.f32.mrb[0].mxu0
      %1625 = vmatprep.mubr.f32.mxu0 0.0
      %1626 = vmatmul.mubr.f32.gmra.mrb[0].mxu0 %v1424
      %v1627 = vpop.f32.mrb[0].mxu0
      %v1628 = vadd.f32 0.0, %v1627
      %v1629 = vpop.f32.mrb[0].mxu0
      %1630 = vmatprep.mubr.f32.mxu0 0.0
      %1631 = vmatmul.mubr.f32.gmra.mrb[0].mxu0 %v1425
      %v1632 = vpop.f32.mrb[0].mxu0
      %v1633 = vadd.f32 0.0, %v1632
      %v1634 = vpop.f32.mrb[0].mxu0
      %1635 = vmatprep.mubr.f32.mxu0 0.0
      %1636 = vmatmul.mubr.f32.gmra.mrb[0].mxu0 %v1426
      %v1637 = vpop.f32.mrb[0].mxu0
      %v1638 = vadd.f32 0.0, %v1637
      %v1639 = vpop.f32.mrb[0].mxu0
      %1640 = vmatprep.mubr.f32.mxu0 0.0
      %1641 = vmatmul.mubr.f32.gmra.mrb[0].mxu0 %v1427
      %v1642 = vpop.f32.mrb[0].mxu0
      %v1643 = vadd.f32 0.0, %v1642
      %v1644 = vpop.f32.mrb[0].mxu0
      %1645 = vmatprep.mubr.f32.mxu0 0.0
      %1646 = vmatmul.mubr.f32.gmra.mrb[0].mxu0 %v1428
      %v1647 = vpop.f32.mrb[0].mxu0
      %v1648 = vadd.f32 0.0, %v1647
      %v1649 = vpop.f32.mrb[0].mxu0
      %1650 = vmatprep.mubr.f32.mxu0 0.0
      %1651 = vmatmul.mubr.f32.gmra.mrb[0].mxu0 %v1429
      %v1652 = vpop.f32.mrb[0].mxu0
      %v1653 = vadd.f32 0.0, %v1652
      %v1654 = vpop.f32.mrb[0].mxu0
      %1655 = vmatprep.mubr.f32.mxu0 0.0
      %1656 = vmatmul.mubr.f32.gmra.mrb[0].mxu0 %v1430
      %v1657 = vpop.f32.mrb[0].mxu0
      %v1658 = vadd.f32 0.0, %v1657
      %v1659 = vpop.f32.mrb[0].mxu0
      %1660 = vmatprep.mubr.f32.mxu0 0.0
      %1661 = vmatmul.mubr.f32.gmra.mrb[0].mxu0 %v1431
      %v1662 = vpop.f32.mrb[0].mxu0
      %v1663 = vadd.f32 0.0, %v1662
      %v1664 = vpop.f32.mrb[0].mxu0
      %1665 = vmatprep.mubr.f32.mxu0 0.0
      %1666 = vmatmul.mubr.f32.gmra.mrb[0].mxu0 %v1432
      %v1667 = vpop.f32.mrb[0].mxu0
      %v1668 = vadd.f32 0.0, %v1667
      %v1669 = vpop.f32.mrb[0].mxu0
      %1670 = vmatprep.mubr.f32.mxu0 0.0
      %1671 = vmatmul.mubr.f32.gmra.mrb[0].mxu0 %v1433
      %v1672 = vpop.f32.mrb[0].mxu0
      %v1673 = vadd.f32 0.0, %v1672
      %v1674 = vpop.f32.mrb[0].mxu0
      %1675 = vdwg.mxu0
      %v1676 = vadd.f32 %v1370, %v1518
      %v1677 = vadd.f32 %v1371, %v1523
      %v1678 = vadd.f32 %v1372, %v1528
      %v1679 = vadd.f32 %v1373, %v1533
      %v1680 = vadd.f32 %v1374, %v1538
      %v1681 = vadd.f32 %v1375, %v1543
      %v1682 = vadd.f32 %v1376, %v1548
      %v1683 = vadd.f32 %v1377, %v1553
      %v1684 = vadd.f32 %v1378, %v1558
      %v1685 = vadd.f32 %v1379, %v1563
      %v1686 = vadd.f32 %v1380, %v1568
      %v1687 = vadd.f32 %v1381, %v1573
      %v1688 = vadd.f32 %v1382, %v1578
      %v1689 = vadd.f32 %v1383, %v1583
      %v1690 = vadd.f32 %v1384, %v1588
      %v1691 = vadd.f32 %v1385, %v1593
      %v1692 = vadd.f32 %v1386, %v1598
      %v1693 = vadd.f32 %v1387, %v1603
      %v1694 = vadd.f32 %v1388, %v1608
      %v1695 = vadd.f32 %v1389, %v1613
      %v1696 = vadd.f32 %v1390, %v1618
      %v1697 = vadd.f32 %v1391, %v1623
      %v1698 = vadd.f32 %v1392, %v1628
      %v1699 = vadd.f32 %v1393, %v1633
      %v1700 = vadd.f32 %v1394, %v1638
      %v1701 = vadd.f32 %v1395, %v1643
      %v1702 = vadd.f32 %v1396, %v1648
      %v1703 = vadd.f32 %v1397, %v1653
      %v1704 = vadd.f32 %v1398, %v1658
      %v1705 = vadd.f32 %v1399, %v1663
      %v1706 = vadd.f32 %v1400, %v1668
      %v1707 = vadd.f32 %v1401, %v1673
      %v1708 = vld [vmem:[%s1095 + $0x2] sm:$0xff]
      %v1709 = vld [vmem:[%s1095 + $0xa] sm:$0xff]
      %v1710 = vld [vmem:[%s1095 + $0x1a] sm:$0xff]
      %v1711 = vld [vmem:[%s1095 + $0x22] sm:$0xff]
      %v1712 = vld [vmem:[%s1095 + $0x32] sm:$0xff]
      %v1713 = vld [vmem:[%s1095 + $0x3a] sm:$0xff]
      %v1714 = vld [vmem:[%s1095 + $0x4a] sm:$0xff]
      %v1715 = vld [vmem:[%s1095 + $0x52] sm:$0xff]
      %v1716 = vld [vmem:[%s1095 + $0x62] sm:$0xff]
      %v1717 = vld [vmem:[%s1095 + $0x6a] sm:$0xff]
      %v1718 = vld [vmem:[%s1095 + $0x7a] sm:$0xff]
      %v1719 = vld [vmem:[%s1095 + $0x82] sm:$0xff]
      %v1720 = vld [vmem:[%s1095 + $0x92] sm:$0xff]
      %v1721 = vld [vmem:[%s1095 + $0x9a] sm:$0xff]
      %v1722 = vld [vmem:[%s1095 + $0xaa] sm:$0xff]
      %v1723 = vld [vmem:[%s1095 + $0xb2] sm:$0xff]
      %v1724 = vld [vmem:[%s1095 + $0xc2] sm:$0xff]
      %v1725 = vld [vmem:[%s1095 + $0xca] sm:$0xff]
      %v1726 = vld [vmem:[%s1095 + $0xda] sm:$0xff]
      %v1727 = vld [vmem:[%s1095 + $0xe2] sm:$0xff]
      %v1728 = vld [vmem:[%s1095 + $0xf2] sm:$0xff]
      %v1729 = vld [vmem:[%s1095 + $0xfa] sm:$0xff]
      %v1730 = vld [vmem:[%s1095 + $0x10a] sm:$0xff]
      %v1731 = vld [vmem:[%s1095 + $0x112] sm:$0xff]
      %v1732 = vld [vmem:[%s1095 + $0x122] sm:$0xff]
      %v1733 = vld [vmem:[%s1095 + $0x12a] sm:$0xff]
      %v1734 = vld [vmem:[%s1095 + $0x13a] sm:$0xff]
      %v1735 = vld [vmem:[%s1095 + $0x142] sm:$0xff]
      %v1736 = vld [vmem:[%s1095 + $0x152] sm:$0xff]
      %v1737 = vld [vmem:[%s1095 + $0x15a] sm:$0xff]
      %v1738 = vld [vmem:[%s1095 + $0x16a] sm:$0xff]
      %v1739 = vld [vmem:[%s1095 + $0x172] sm:$0xff]
      %s1740 = scalar_lea.vmem %s1, 640
      %v1741 = vld [vmem:[%s1740] sm:$0xff]
      %v1742 = vld [vmem:[%s1740 + $0x8] sm:$0xff]
      %v1743 = vld [vmem:[%s1740 + $0x10] sm:$0xff]
      %v1744 = vld [vmem:[%s1740 + $0x18] sm:$0xff]
      %v1745 = vld [vmem:[%s1740 + $0x20] sm:$0xff]
      %v1746 = vld [vmem:[%s1740 + $0x28] sm:$0xff]
      %v1747 = vld [vmem:[%s1740 + $0x30] sm:$0xff]
      %v1748 = vld [vmem:[%s1740 + $0x38] sm:$0xff]
      %v1749 = vld [vmem:[%s1740 + $0x40] sm:$0xff]
      %v1750 = vld [vmem:[%s1740 + $0x48] sm:$0xff]
      %v1751 = vld [vmem:[%s1740 + $0x50] sm:$0xff]
      %v1752 = vld [vmem:[%s1740 + $0x58] sm:$0xff]
      %v1753 = vld [vmem:[%s1740 + $0x60] sm:$0xff]
      %v1754 = vld [vmem:[%s1740 + $0x68] sm:$0xff]
      %v1755 = vld [vmem:[%s1740 + $0x70] sm:$0xff]
      %v1756 = vld [vmem:[%s1740 + $0x78] sm:$0xff]
      %1757 = vmatprep.subr.mxu0 0.0
      %1758 = vmatpush1.msra.mxu0 %v1741
      %1759 = vmatprep.subr.mxu0 0.0
      %1760 = vmatpush1.msra.mxu0 %v1742
      %1761 = vmatprep.subr.mxu0 0.0
      %1762 = vmatpush1.msra.mxu0 %v1743
      %1763 = vmatprep.subr.mxu0 0.0
      %1764 = vmatpush1.msra.mxu0 %v1744
      %1765 = vmatprep.subr.mxu0 0.0
      %1766 = vmatpush1.msra.mxu0 %v1745
      %1767 = vmatprep.subr.mxu0 0.0
      %1768 = vmatpush1.msra.mxu0 %v1746
      %1769 = vmatprep.subr.mxu0 0.0
      %1770 = vmatpush1.msra.mxu0 %v1747
      %1771 = vmatprep.subr.mxu0 0.0
      %1772 = vmatpush1.msra.mxu0 %v1748
      %1773 = vmatprep.subr.mxu0 0.0
      %1774 = vmatpush1.msra.mxu0 %v1749
      %1775 = vmatprep.subr.mxu0 0.0
      %1776 = vmatpush1.msra.mxu0 %v1750
      %1777 = vmatprep.subr.mxu0 0.0
      %1778 = vmatpush1.msra.mxu0 %v1751
      %1779 = vmatprep.subr.mxu0 0.0
      %1780 = vmatpush1.msra.mxu0 %v1752
      %1781 = vmatprep.subr.mxu0 0.0
      %1782 = vmatpush1.msra.mxu0 %v1753
      %1783 = vmatprep.subr.mxu0 0.0
      %1784 = vmatpush1.msra.mxu0 %v1754
      %1785 = vmatprep.subr.mxu0 0.0
      %1786 = vmatpush1.msra.mxu0 %v1755
      %1787 = vmatprep.subr.mxu0 0.0
      %1788 = vmatpush1.msra.mxu0 %v1756
      %1789 = vmatprep.subr.mxu0 0.0
      %1790 = vmatpush1.msra.mxu0 0.0
      %1791 = vmatprep.subr.mxu0 0.0
      %1792 = vmatpush1.msra.mxu0 0.0
      %1793 = vmatprep.subr.mxu0 0.0
      %1794 = vmatpush1.msra.mxu0 0.0
      %1795 = vmatprep.subr.mxu0 0.0
      %1796 = vmatpush1.msra.mxu0 0.0
      %1797 = vmatprep.subr.mxu0 0.0
      %1798 = vmatpush1.msra.mxu0 0.0
      %1799 = vmatprep.subr.mxu0 0.0
      %1800 = vmatpush1.msra.mxu0 0.0
      %1801 = vmatprep.subr.mxu0 0.0
      %1802 = vmatpush1.msra.mxu0 0.0
      %1803 = vmatprep.subr.mxu0 0.0
      %1804 = vmatpush1.msra.mxu0 0.0
      %1805 = vmatprep.subr.mxu0 0.0
      %1806 = vmatpush1.msra.mxu0 0.0
      %1807 = vmatprep.subr.mxu0 0.0
      %1808 = vmatpush1.msra.mxu0 0.0
      %1809 = vmatprep.subr.mxu0 0.0
      %1810 = vmatpush1.msra.mxu0 0.0
      %1811 = vmatprep.subr.mxu0 0.0
      %1812 = vmatpush1.msra.mxu0 0.0
      %1813 = vmatprep.subr.mxu0 0.0
      %1814 = vmatpush1.msra.mxu0 0.0
      %1815 = vmatprep.subr.mxu0 0.0
      %1816 = vmatpush1.msra.mxu0 0.0
      %1817 = vmatprep.subr.mxu0 0.0
      %1818 = vmatpush1.msra.mxu0 0.0
      %1819 = vmatprep.subr.mxu0 0.0
      %1820 = vmatpush1.msra.mxu0 0.0
      %1821 = vmatprep.mubr.f32.mxu0 0.0
      %1822 = vmatmul.mubr.f32.gmra.mrb[0].mxu0 %v1708
      %v1823 = vpop.f32.mrb[0].mxu0
      %v1824 = vadd.f32 0.0, %v1823
      %v1825 = vpop.f32.mrb[0].mxu0
      %1826 = vmatprep.mubr.f32.mxu0 0.0
      %1827 = vmatmul.mubr.f32.gmra.mrb[0].mxu0 %v1709
      %v1828 = vpop.f32.mrb[0].mxu0
      %v1829 = vadd.f32 0.0, %v1828
      %v1830 = vpop.f32.mrb[0].mxu0
      %1831 = vmatprep.mubr.f32.mxu0 0.0
      %1832 = vmatmul.mubr.f32.gmra.mrb[0].mxu0 %v1710
      %v1833 = vpop.f32.mrb[0].mxu0
      %v1834 = vadd.f32 0.0, %v1833
      %v1835 = vpop.f32.mrb[0].mxu0
      %1836 = vmatprep.mubr.f32.mxu0 0.0
      %1837 = vmatmul.mubr.f32.gmra.mrb[0].mxu0 %v1711
      %v1838 = vpop.f32.mrb[0].mxu0
      %v1839 = vadd.f32 0.0, %v1838
      %v1840 = vpop.f32.mrb[0].mxu0
      %1841 = vmatprep.mubr.f32.mxu0 0.0
      %1842 = vmatmul.mubr.f32.gmra.mrb[0].mxu0 %v1712
      %v1843 = vpop.f32.mrb[0].mxu0
      %v1844 = vadd.f32 0.0, %v1843
      %v1845 = vpop.f32.mrb[0].mxu0
      %1846 = vmatprep.mubr.f32.mxu0 0.0
      %1847 = vmatmul.mubr.f32.gmra.mrb[0].mxu0 %v1713
      %v1848 = vpop.f32.mrb[0].mxu0
      %v1849 = vadd.f32 0.0, %v1848
      %v1850 = vpop.f32.mrb[0].mxu0
      %1851 = vmatprep.mubr.f32.mxu0 0.0
      %1852 = vmatmul.mubr.f32.gmra.mrb[0].mxu0 %v1714
      %v1853 = vpop.f32.mrb[0].mxu0
      %v1854 = vadd.f32 0.0, %v1853
      %v1855 = vpop.f32.mrb[0].mxu0
      %1856 = vmatprep.mubr.f32.mxu0 0.0
      %1857 = vmatmul.mubr.f32.gmra.mrb[0].mxu0 %v1715
      %v1858 = vpop.f32.mrb[0].mxu0
      %v1859 = vadd.f32 0.0, %v1858
      %v1860 = vpop.f32.mrb[0].mxu0
      %1861 = vmatprep.mubr.f32.mxu0 0.0
      %1862 = vmatmul.mubr.f32.gmra.mrb[0].mxu0 %v1716
      %v1863 = vpop.f32.mrb[0].mxu0
      %v1864 = vadd.f32 0.0, %v1863
      %v1865 = vpop.f32.mrb[0].mxu0
      %1866 = vmatprep.mubr.f32.mxu0 0.0
      %1867 = vmatmul.mubr.f32.gmra.mrb[0].mxu0 %v1717
      %v1868 = vpop.f32.mrb[0].mxu0
      %v1869 = vadd.f32 0.0, %v1868
      %v1870 = vpop.f32.mrb[0].mxu0
      %1871 = vmatprep.mubr.f32.mxu0 0.0
      %1872 = vmatmul.mubr.f32.gmra.mrb[0].mxu0 %v1718
      %v1873 = vpop.f32.mrb[0].mxu0
      %v1874 = vadd.f32 0.0, %v1873
      %v1875 = vpop.f32.mrb[0].mxu0
      %1876 = vmatprep.mubr.f32.mxu0 0.0
      %1877 = vmatmul.mubr.f32.gmra.mrb[0].mxu0 %v1719
      %v1878 = vpop.f32.mrb[0].mxu0
      %v1879 = vadd.f32 0.0, %v1878
      %v1880 = vpop.f32.mrb[0].mxu0
      %1881 = vmatprep.mubr.f32.mxu0 0.0
      %1882 = vmatmul.mubr.f32.gmra.mrb[0].mxu0 %v1720
      %v1883 = vpop.f32.mrb[0].mxu0
      %v1884 = vadd.f32 0.0, %v1883
      %v1885 = vpop.f32.mrb[0].mxu0
      %1886 = vmatprep.mubr.f32.mxu0 0.0
      %1887 = vmatmul.mubr.f32.gmra.mrb[0].mxu0 %v1721
      %v1888 = vpop.f32.mrb[0].mxu0
      %v1889 = vadd.f32 0.0, %v1888
      %v1890 = vpop.f32.mrb[0].mxu0
      %1891 = vmatprep.mubr.f32.mxu0 0.0
      %1892 = vmatmul.mubr.f32.gmra.mrb[0].mxu0 %v1722
      %v1893 = vpop.f32.mrb[0].mxu0
      %v1894 = vadd.f32 0.0, %v1893
      %v1895 = vpop.f32.mrb[0].mxu0
      %1896 = vmatprep.mubr.f32.mxu0 0.0
      %1897 = vmatmul.mubr.f32.gmra.mrb[0].mxu0 %v1723
      %v1898 = vpop.f32.mrb[0].mxu0
      %v1899 = vadd.f32 0.0, %v1898
      %v1900 = vpop.f32.mrb[0].mxu0
      %1901 = vmatprep.mubr.f32.mxu0 0.0
      %1902 = vmatmul.mubr.f32.gmra.mrb[0].mxu0 %v1724
      %v1903 = vpop.f32.mrb[0].mxu0
      %v1904 = vadd.f32 0.0, %v1903
      %v1905 = vpop.f32.mrb[0].mxu0
      %1906 = vmatprep.mubr.f32.mxu0 0.0
      %1907 = vmatmul.mubr.f32.gmra.mrb[0].mxu0 %v1725
      %v1908 = vpop.f32.mrb[0].mxu0
      %v1909 = vadd.f32 0.0, %v1908
      %v1910 = vpop.f32.mrb[0].mxu0
      %1911 = vmatprep.mubr.f32.mxu0 0.0
      %1912 = vmatmul.mubr.f32.gmra.mrb[0].mxu0 %v1726
      %v1913 = vpop.f32.mrb[0].mxu0
      %v1914 = vadd.f32 0.0, %v1913
      %v1915 = vpop.f32.mrb[0].mxu0
      %1916 = vmatprep.mubr.f32.mxu0 0.0
      %1917 = vmatmul.mubr.f32.gmra.mrb[0].mxu0 %v1727
      %v1918 = vpop.f32.mrb[0].mxu0
      %v1919 = vadd.f32 0.0, %v1918
      %v1920 = vpop.f32.mrb[0].mxu0
      %1921 = vmatprep.mubr.f32.mxu0 0.0
      %1922 = vmatmul.mubr.f32.gmra.mrb[0].mxu0 %v1728
      %v1923 = vpop.f32.mrb[0].mxu0
      %v1924 = vadd.f32 0.0, %v1923
      %v1925 = vpop.f32.mrb[0].mxu0
      %1926 = vmatprep.mubr.f32.mxu0 0.0
      %1927 = vmatmul.mubr.f32.gmra.mrb[0].mxu0 %v1729
      %v1928 = vpop.f32.mrb[0].mxu0
      %v1929 = vadd.f32 0.0, %v1928
      %v1930 = vpop.f32.mrb[0].mxu0
      %1931 = vmatprep.mubr.f32.mxu0 0.0
      %1932 = vmatmul.mubr.f32.gmra.mrb[0].mxu0 %v1730
      %v1933 = vpop.f32.mrb[0].mxu0
      %v1934 = vadd.f32 0.0, %v1933
      %v1935 = vpop.f32.mrb[0].mxu0
      %1936 = vmatprep.mubr.f32.mxu0 0.0
      %1937 = vmatmul.mubr.f32.gmra.mrb[0].mxu0 %v1731
      %v1938 = vpop.f32.mrb[0].mxu0
      %v1939 = vadd.f32 0.0, %v1938
      %v1940 = vpop.f32.mrb[0].mxu0
      %1941 = vmatprep.mubr.f32.mxu0 0.0
      %1942 = vmatmul.mubr.f32.gmra.mrb[0].mxu0 %v1732
      %v1943 = vpop.f32.mrb[0].mxu0
      %v1944 = vadd.f32 0.0, %v1943
      %v1945 = vpop.f32.mrb[0].mxu0
      %1946 = vmatprep.mubr.f32.mxu0 0.0
      %1947 = vmatmul.mubr.f32.gmra.mrb[0].mxu0 %v1733
      %v1948 = vpop.f32.mrb[0].mxu0
      %v1949 = vadd.f32 0.0, %v1948
      %v1950 = vpop.f32.mrb[0].mxu0
      %1951 = vmatprep.mubr.f32.mxu0 0.0
      %1952 = vmatmul.mubr.f32.gmra.mrb[0].mxu0 %v1734
      %v1953 = vpop.f32.mrb[0].mxu0
      %v1954 = vadd.f32 0.0, %v1953
      %v1955 = vpop.f32.mrb[0].mxu0
      %1956 = vmatprep.mubr.f32.mxu0 0.0
      %1957 = vmatmul.mubr.f32.gmra.mrb[0].mxu0 %v1735
      %v1958 = vpop.f32.mrb[0].mxu0
      %v1959 = vadd.f32 0.0, %v1958
      %v1960 = vpop.f32.mrb[0].mxu0
      %1961 = vmatprep.mubr.f32.mxu0 0.0
      %1962 = vmatmul.mubr.f32.gmra.mrb[0].mxu0 %v1736
      %v1963 = vpop.f32.mrb[0].mxu0
      %v1964 = vadd.f32 0.0, %v1963
      %v1965 = vpop.f32.mrb[0].mxu0
      %1966 = vmatprep.mubr.f32.mxu0 0.0
      %1967 = vmatmul.mubr.f32.gmra.mrb[0].mxu0 %v1737
      %v1968 = vpop.f32.mrb[0].mxu0
      %v1969 = vadd.f32 0.0, %v1968
      %v1970 = vpop.f32.mrb[0].mxu0
      %1971 = vmatprep.mubr.f32.mxu0 0.0
      %1972 = vmatmul.mubr.f32.gmra.mrb[0].mxu0 %v1738
      %v1973 = vpop.f32.mrb[0].mxu0
      %v1974 = vadd.f32 0.0, %v1973
      %v1975 = vpop.f32.mrb[0].mxu0
      %1976 = vmatprep.mubr.f32.mxu0 0.0
      %1977 = vmatmul.mubr.f32.gmra.mrb[0].mxu0 %v1739
      %v1978 = vpop.f32.mrb[0].mxu0
      %v1979 = vadd.f32 0.0, %v1978
      %v1980 = vpop.f32.mrb[0].mxu0
      %1981 = vdwg.mxu0
      %v1982 = vadd.f32 %v1676, %v1824
      %v1983 = vadd.f32 %v1677, %v1829
      %v1984 = vadd.f32 %v1678, %v1834
      %v1985 = vadd.f32 %v1679, %v1839
      %v1986 = vadd.f32 %v1680, %v1844
      %v1987 = vadd.f32 %v1681, %v1849
      %v1988 = vadd.f32 %v1682, %v1854
      %v1989 = vadd.f32 %v1683, %v1859
      %v1990 = vadd.f32 %v1684, %v1864
      %v1991 = vadd.f32 %v1685, %v1869
      %v1992 = vadd.f32 %v1686, %v1874
      %v1993 = vadd.f32 %v1687, %v1879
      %v1994 = vadd.f32 %v1688, %v1884
      %v1995 = vadd.f32 %v1689, %v1889
      %v1996 = vadd.f32 %v1690, %v1894
      %v1997 = vadd.f32 %v1691, %v1899
      %v1998 = vadd.f32 %v1692, %v1904
      %v1999 = vadd.f32 %v1693, %v1909
      %v2000 = vadd.f32 %v1694, %v1914
      %v2001 = vadd.f32 %v1695, %v1919
      %v2002 = vadd.f32 %v1696, %v1924
      %v2003 = vadd.f32 %v1697, %v1929
      %v2004 = vadd.f32 %v1698, %v1934
      %v2005 = vadd.f32 %v1699, %v1939
      %v2006 = vadd.f32 %v1700, %v1944
      %v2007 = vadd.f32 %v1701, %v1949
      %v2008 = vadd.f32 %v1702, %v1954
      %v2009 = vadd.f32 %v1703, %v1959
      %v2010 = vadd.f32 %v1704, %v1964
      %v2011 = vadd.f32 %v1705, %v1969
      %v2012 = vadd.f32 %v1706, %v1974
      %v2013 = vadd.f32 %v1707, %v1979
      %s2014 = scalar_lea.vmem %s165, 48
      %v2015 = vld [vmem:[%s2014] sm:$0xff]
      %v2016 = vld [vmem:[%s2014 + $0x8] sm:$0xff]
      %v2017 = vld [vmem:[%s2014 + $0x18] sm:$0xff]
      %v2018 = vld [vmem:[%s2014 + $0x20] sm:$0xff]
      %v2019 = vld [vmem:[%s2014 + $0x30] sm:$0xff]
      %v2020 = vld [vmem:[%s2014 + $0x38] sm:$0xff]
      %v2021 = vld [vmem:[%s2014 + $0x48] sm:$0xff]
      %v2022 = vld [vmem:[%s2014 + $0x50] sm:$0xff]
      %v2023 = vld [vmem:[%s2014 + $0x60] sm:$0xff]
      %v2024 = vld [vmem:[%s2014 + $0x68] sm:$0xff]
      %v2025 = vld [vmem:[%s2014 + $0x78] sm:$0xff]
      %v2026 = vld [vmem:[%s2014 + $0x80] sm:$0xff]
      %v2027 = vld [vmem:[%s2014 + $0x90] sm:$0xff]
      %v2028 = vld [vmem:[%s2014 + $0x98] sm:$0xff]
      %v2029 = vld [vmem:[%s2014 + $0xa8] sm:$0xff]
      %v2030 = vld [vmem:[%s2014 + $0xb0] sm:$0xff]
      %v2031 = vld [vmem:[%s2014 + $0xc0] sm:$0xff]
      %v2032 = vld [vmem:[%s2014 + $0xc8] sm:$0xff]
      %v2033 = vld [vmem:[%s2014 + $0xd8] sm:$0xff]
      %v2034 = vld [vmem:[%s2014 + $0xe0] sm:$0xff]
      %v2035 = vld [vmem:[%s2014 + $0xf0] sm:$0xff]
      %v2036 = vld [vmem:[%s2014 + $0xf8] sm:$0xff]
      %v2037 = vld [vmem:[%s2014 + $0x108] sm:$0xff]
      %v2038 = vld [vmem:[%s2014 + $0x110] sm:$0xff]
      %v2039 = vld [vmem:[%s2014 + $0x120] sm:$0xff]
      %v2040 = vld [vmem:[%s2014 + $0x128] sm:$0xff]
      %v2041 = vld [vmem:[%s2014 + $0x138] sm:$0xff]
      %v2042 = vld [vmem:[%s2014 + $0x140] sm:$0xff]
      %v2043 = vld [vmem:[%s2014 + $0x150] sm:$0xff]
      %v2044 = vld [vmem:[%s2014 + $0x158] sm:$0xff]
      %v2045 = vld [vmem:[%s2014 + $0x168] sm:$0xff]
      %v2046 = vld [vmem:[%s2014 + $0x170] sm:$0xff]
      %s2047 = scalar_lea.vmem %s1, 768
      %v2048 = vld [vmem:[%s2047] sm:$0xff]
      %v2049 = vld [vmem:[%s2047 + $0x8] sm:$0xff]
      %v2050 = vld [vmem:[%s2047 + $0x10] sm:$0xff]
      %v2051 = vld [vmem:[%s2047 + $0x18] sm:$0xff]
      %v2052 = vld [vmem:[%s2047 + $0x20] sm:$0xff]
      %v2053 = vld [vmem:[%s2047 + $0x28] sm:$0xff]
      %v2054 = vld [vmem:[%s2047 + $0x30] sm:$0xff]
      %v2055 = vld [vmem:[%s2047 + $0x38] sm:$0xff]
      %v2056 = vld [vmem:[%s2047 + $0x40] sm:$0xff]
      %v2057 = vld [vmem:[%s2047 + $0x48] sm:$0xff]
      %v2058 = vld [vmem:[%s2047 + $0x50] sm:$0xff]
      %v2059 = vld [vmem:[%s2047 + $0x58] sm:$0xff]
      %v2060 = vld [vmem:[%s2047 + $0x60] sm:$0xff]
      %v2061 = vld [vmem:[%s2047 + $0x68] sm:$0xff]
      %v2062 = vld [vmem:[%s2047 + $0x70] sm:$0xff]
      %v2063 = vld [vmem:[%s2047 + $0x78] sm:$0xff]
      %2064 = vmatprep.subr.mxu0 0.0
      %2065 = vmatpush1.msra.mxu0 %v2048
      %2066 = vmatprep.subr.mxu0 0.0
      %2067 = vmatpush1.msra.mxu0 %v2049
      %2068 = vmatprep.subr.mxu0 0.0
      %2069 = vmatpush1.msra.mxu0 %v2050
      %2070 = vmatprep.subr.mxu0 0.0
      %2071 = vmatpush1.msra.mxu0 %v2051
      %2072 = vmatprep.subr.mxu0 0.0
      %2073 = vmatpush1.msra.mxu0 %v2052
      %2074 = vmatprep.subr.mxu0 0.0
      %2075 = vmatpush1.msra.mxu0 %v2053
      %2076 = vmatprep.subr.mxu0 0.0
      %2077 = vmatpush1.msra.mxu0 %v2054
      %2078 = vmatprep.subr.mxu0 0.0
      %2079 = vmatpush1.msra.mxu0 %v2055
      %2080 = vmatprep.subr.mxu0 0.0
      %2081 = vmatpush1.msra.mxu0 %v2056
      %2082 = vmatprep.subr.mxu0 0.0
      %2083 = vmatpush1.msra.mxu0 %v2057
      %2084 = vmatprep.subr.mxu0 0.0
      %2085 = vmatpush1.msra.mxu0 %v2058
      %2086 = vmatprep.subr.mxu0 0.0
      %2087 = vmatpush1.msra.mxu0 %v2059
      %2088 = vmatprep.subr.mxu0 0.0
      %2089 = vmatpush1.msra.mxu0 %v2060
      %2090 = vmatprep.subr.mxu0 0.0
      %2091 = vmatpush1.msra.mxu0 %v2061
      %2092 = vmatprep.subr.mxu0 0.0
      %2093 = vmatpush1.msra.mxu0 %v2062
      %2094 = vmatprep.subr.mxu0 0.0
      %2095 = vmatpush1.msra.mxu0 %v2063
      %2096 = vmatprep.subr.mxu0 0.0
      %2097 = vmatpush1.msra.mxu0 0.0
      %2098 = vmatprep.subr.mxu0 0.0
      %2099 = vmatpush1.msra.mxu0 0.0
      %2100 = vmatprep.subr.mxu0 0.0
      %2101 = vmatpush1.msra.mxu0 0.0
      %2102 = vmatprep.subr.mxu0 0.0
      %2103 = vmatpush1.msra.mxu0 0.0
      %2104 = vmatprep.subr.mxu0 0.0
      %2105 = vmatpush1.msra.mxu0 0.0
      %2106 = vmatprep.subr.mxu0 0.0
      %2107 = vmatpush1.msra.mxu0 0.0
      %2108 = vmatprep.subr.mxu0 0.0
      %2109 = vmatpush1.msra.mxu0 0.0
      %2110 = vmatprep.subr.mxu0 0.0
      %2111 = vmatpush1.msra.mxu0 0.0
      %2112 = vmatprep.subr.mxu0 0.0
      %2113 = vmatpush1.msra.mxu0 0.0
      %2114 = vmatprep.subr.mxu0 0.0
      %2115 = vmatpush1.msra.mxu0 0.0
      %2116 = vmatprep.subr.mxu0 0.0
      %2117 = vmatpush1.msra.mxu0 0.0
      %2118 = vmatprep.subr.mxu0 0.0
      %2119 = vmatpush1.msra.mxu0 0.0
      %2120 = vmatprep.subr.mxu0 0.0
      %2121 = vmatpush1.msra.mxu0 0.0
      %2122 = vmatprep.subr.mxu0 0.0
      %2123 = vmatpush1.msra.mxu0 0.0
      %2124 = vmatprep.subr.mxu0 0.0
      %2125 = vmatpush1.msra.mxu0 0.0
      %2126 = vmatprep.subr.mxu0 0.0
      %2127 = vmatpush1.msra.mxu0 0.0
      %2128 = vmatprep.mubr.f32.mxu0 0.0
      %2129 = vmatmul.mubr.f32.gmra.mrb[0].mxu0 %v2015
      %v2130 = vpop.f32.mrb[0].mxu0
      %v2131 = vadd.f32 0.0, %v2130
      %v2132 = vpop.f32.mrb[0].mxu0
      %2133 = vmatprep.mubr.f32.mxu0 0.0
      %2134 = vmatmul.mubr.f32.gmra.mrb[0].mxu0 %v2016
      %v2135 = vpop.f32.mrb[0].mxu0
      %v2136 = vadd.f32 0.0, %v2135
      %v2137 = vpop.f32.mrb[0].mxu0
      %2138 = vmatprep.mubr.f32.mxu0 0.0
      %2139 = vmatmul.mubr.f32.gmra.mrb[0].mxu0 %v2017
      %v2140 = vpop.f32.mrb[0].mxu0
      %v2141 = vadd.f32 0.0, %v2140
      %v2142 = vpop.f32.mrb[0].mxu0
      %2143 = vmatprep.mubr.f32.mxu0 0.0
      %2144 = vmatmul.mubr.f32.gmra.mrb[0].mxu0 %v2018
      %v2145 = vpop.f32.mrb[0].mxu0
      %v2146 = vadd.f32 0.0, %v2145
      %v2147 = vpop.f32.mrb[0].mxu0
      %2148 = vmatprep.mubr.f32.mxu0 0.0
      %2149 = vmatmul.mubr.f32.gmra.mrb[0].mxu0 %v2019
      %v2150 = vpop.f32.mrb[0].mxu0
      %v2151 = vadd.f32 0.0, %v2150
      %v2152 = vpop.f32.mrb[0].mxu0
      %2153 = vmatprep.mubr.f32.mxu0 0.0
      %2154 = vmatmul.mubr.f32.gmra.mrb[0].mxu0 %v2020
      %v2155 = vpop.f32.mrb[0].mxu0
      %v2156 = vadd.f32 0.0, %v2155
      %v2157 = vpop.f32.mrb[0].mxu0
      %2158 = vmatprep.mubr.f32.mxu0 0.0
      %2159 = vmatmul.mubr.f32.gmra.mrb[0].mxu0 %v2021
      %v2160 = vpop.f32.mrb[0].mxu0
      %v2161 = vadd.f32 0.0, %v2160
      %v2162 = vpop.f32.mrb[0].mxu0
      %2163 = vmatprep.mubr.f32.mxu0 0.0
      %2164 = vmatmul.mubr.f32.gmra.mrb[0].mxu0 %v2022
      %v2165 = vpop.f32.mrb[0].mxu0
      %v2166 = vadd.f32 0.0, %v2165
      %v2167 = vpop.f32.mrb[0].mxu0
      %2168 = vmatprep.mubr.f32.mxu0 0.0
      %2169 = vmatmul.mubr.f32.gmra.mrb[0].mxu0 %v2023
      %v2170 = vpop.f32.mrb[0].mxu0
      %v2171 = vadd.f32 0.0, %v2170
      %v2172 = vpop.f32.mrb[0].mxu0
      %2173 = vmatprep.mubr.f32.mxu0 0.0
      %2174 = vmatmul.mubr.f32.gmra.mrb[0].mxu0 %v2024
      %v2175 = vpop.f32.mrb[0].mxu0
      %v2176 = vadd.f32 0.0, %v2175
      %v2177 = vpop.f32.mrb[0].mxu0
      %2178 = vmatprep.mubr.f32.mxu0 0.0
      %2179 = vmatmul.mubr.f32.gmra.mrb[0].mxu0 %v2025
      %v2180 = vpop.f32.mrb[0].mxu0
      %v2181 = vadd.f32 0.0, %v2180
      %v2182 = vpop.f32.mrb[0].mxu0
      %2183 = vmatprep.mubr.f32.mxu0 0.0
      %2184 = vmatmul.mubr.f32.gmra.mrb[0].mxu0 %v2026
      %v2185 = vpop.f32.mrb[0].mxu0
      %v2186 = vadd.f32 0.0, %v2185
      %v2187 = vpop.f32.mrb[0].mxu0
      %2188 = vmatprep.mubr.f32.mxu0 0.0
      %2189 = vmatmul.mubr.f32.gmra.mrb[0].mxu0 %v2027
      %v2190 = vpop.f32.mrb[0].mxu0
      %v2191 = vadd.f32 0.0, %v2190
      %v2192 = vpop.f32.mrb[0].mxu0
      %2193 = vmatprep.mubr.f32.mxu0 0.0
      %2194 = vmatmul.mubr.f32.gmra.mrb[0].mxu0 %v2028
      %v2195 = vpop.f32.mrb[0].mxu0
      %v2196 = vadd.f32 0.0, %v2195
      %v2197 = vpop.f32.mrb[0].mxu0
      %2198 = vmatprep.mubr.f32.mxu0 0.0
      %2199 = vmatmul.mubr.f32.gmra.mrb[0].mxu0 %v2029
      %v2200 = vpop.f32.mrb[0].mxu0
      %v2201 = vadd.f32 0.0, %v2200
      %v2202 = vpop.f32.mrb[0].mxu0
      %2203 = vmatprep.mubr.f32.mxu0 0.0
      %2204 = vmatmul.mubr.f32.gmra.mrb[0].mxu0 %v2030
      %v2205 = vpop.f32.mrb[0].mxu0
      %v2206 = vadd.f32 0.0, %v2205
      %v2207 = vpop.f32.mrb[0].mxu0
      %2208 = vmatprep.mubr.f32.mxu0 0.0
      %2209 = vmatmul.mubr.f32.gmra.mrb[0].mxu0 %v2031
      %v2210 = vpop.f32.mrb[0].mxu0
      %v2211 = vadd.f32 0.0, %v2210
      %v2212 = vpop.f32.mrb[0].mxu0
      %2213 = vmatprep.mubr.f32.mxu0 0.0
      %2214 = vmatmul.mubr.f32.gmra.mrb[0].mxu0 %v2032
      %v2215 = vpop.f32.mrb[0].mxu0
      %v2216 = vadd.f32 0.0, %v2215
      %v2217 = vpop.f32.mrb[0].mxu0
      %2218 = vmatprep.mubr.f32.mxu0 0.0
      %2219 = vmatmul.mubr.f32.gmra.mrb[0].mxu0 %v2033
      %v2220 = vpop.f32.mrb[0].mxu0
      %v2221 = vadd.f32 0.0, %v2220
      %v2222 = vpop.f32.mrb[0].mxu0
      %2223 = vmatprep.mubr.f32.mxu0 0.0
      %2224 = vmatmul.mubr.f32.gmra.mrb[0].mxu0 %v2034
      %v2225 = vpop.f32.mrb[0].mxu0
      %v2226 = vadd.f32 0.0, %v2225
      %v2227 = vpop.f32.mrb[0].mxu0
      %2228 = vmatprep.mubr.f32.mxu0 0.0
      %2229 = vmatmul.mubr.f32.gmra.mrb[0].mxu0 %v2035
      %v2230 = vpop.f32.mrb[0].mxu0
      %v2231 = vadd.f32 0.0, %v2230
      %v2232 = vpop.f32.mrb[0].mxu0
      %2233 = vmatprep.mubr.f32.mxu0 0.0
      %2234 = vmatmul.mubr.f32.gmra.mrb[0].mxu0 %v2036
      %v2235 = vpop.f32.mrb[0].mxu0
      %v2236 = vadd.f32 0.0, %v2235
      %v2237 = vpop.f32.mrb[0].mxu0
      %2238 = vmatprep.mubr.f32.mxu0 0.0
      %2239 = vmatmul.mubr.f32.gmra.mrb[0].mxu0 %v2037
      %v2240 = vpop.f32.mrb[0].mxu0
      %v2241 = vadd.f32 0.0, %v2240
      %v2242 = vpop.f32.mrb[0].mxu0
      %2243 = vmatprep.mubr.f32.mxu0 0.0
      %2244 = vmatmul.mubr.f32.gmra.mrb[0].mxu0 %v2038
      %v2245 = vpop.f32.mrb[0].mxu0
      %v2246 = vadd.f32 0.0, %v2245
      %v2247 = vpop.f32.mrb[0].mxu0
      %2248 = vmatprep.mubr.f32.mxu0 0.0
      %2249 = vmatmul.mubr.f32.gmra.mrb[0].mxu0 %v2039
      %v2250 = vpop.f32.mrb[0].mxu0
      %v2251 = vadd.f32 0.0, %v2250
      %v2252 = vpop.f32.mrb[0].mxu0
      %2253 = vmatprep.mubr.f32.mxu0 0.0
      %2254 = vmatmul.mubr.f32.gmra.mrb[0].mxu0 %v2040
      %v2255 = vpop.f32.mrb[0].mxu0
      %v2256 = vadd.f32 0.0, %v2255
      %v2257 = vpop.f32.mrb[0].mxu0
      %2258 = vmatprep.mubr.f32.mxu0 0.0
      %2259 = vmatmul.mubr.f32.gmra.mrb[0].mxu0 %v2041
      %v2260 = vpop.f32.mrb[0].mxu0
      %v2261 = vadd.f32 0.0, %v2260
      %v2262 = vpop.f32.mrb[0].mxu0
      %2263 = vmatprep.mubr.f32.mxu0 0.0
      %2264 = vmatmul.mubr.f32.gmra.mrb[0].mxu0 %v2042
      %v2265 = vpop.f32.mrb[0].mxu0
      %v2266 = vadd.f32 0.0, %v2265
      %v2267 = vpop.f32.mrb[0].mxu0
      %2268 = vmatprep.mubr.f32.mxu0 0.0
      %2269 = vmatmul.mubr.f32.gmra.mrb[0].mxu0 %v2043
      %v2270 = vpop.f32.mrb[0].mxu0
      %v2271 = vadd.f32 0.0, %v2270
      %v2272 = vpop.f32.mrb[0].mxu0
      %2273 = vmatprep.mubr.f32.mxu0 0.0
      %2274 = vmatmul.mubr.f32.gmra.mrb[0].mxu0 %v2044
      %v2275 = vpop.f32.mrb[0].mxu0
      %v2276 = vadd.f32 0.0, %v2275
      %v2277 = vpop.f32.mrb[0].mxu0
      %2278 = vmatprep.mubr.f32.mxu0 0.0
      %2279 = vmatmul.mubr.f32.gmra.mrb[0].mxu0 %v2045
      %v2280 = vpop.f32.mrb[0].mxu0
      %v2281 = vadd.f32 0.0, %v2280
      %v2282 = vpop.f32.mrb[0].mxu0
      %2283 = vmatprep.mubr.f32.mxu0 0.0
      %2284 = vmatmul.mubr.f32.gmra.mrb[0].mxu0 %v2046
      %v2285 = vpop.f32.mrb[0].mxu0
      %v2286 = vadd.f32 0.0, %v2285
      %v2287 = vpop.f32.mrb[0].mxu0
      %2288 = vdwg.mxu0
      %v2289 = vadd.f32 %v1982, %v2131
      %v2290 = vadd.f32 %v1983, %v2136
      %v2291 = vadd.f32 %v1984, %v2141
      %v2292 = vadd.f32 %v1985, %v2146
      %v2293 = vadd.f32 %v1986, %v2151
      %v2294 = vadd.f32 %v1987, %v2156
      %v2295 = vadd.f32 %v1988, %v2161
      %v2296 = vadd.f32 %v1989, %v2166
      %v2297 = vadd.f32 %v1990, %v2171
      %v2298 = vadd.f32 %v1991, %v2176
      %v2299 = vadd.f32 %v1992, %v2181
      %v2300 = vadd.f32 %v1993, %v2186
      %v2301 = vadd.f32 %v1994, %v2191
      %v2302 = vadd.f32 %v1995, %v2196
      %v2303 = vadd.f32 %v1996, %v2201
      %v2304 = vadd.f32 %v1997, %v2206
      %v2305 = vadd.f32 %v1998, %v2211
      %v2306 = vadd.f32 %v1999, %v2216
      %v2307 = vadd.f32 %v2000, %v2221
      %v2308 = vadd.f32 %v2001, %v2226
      %v2309 = vadd.f32 %v2002, %v2231
      %v2310 = vadd.f32 %v2003, %v2236
      %v2311 = vadd.f32 %v2004, %v2241
      %v2312 = vadd.f32 %v2005, %v2246
      %v2313 = vadd.f32 %v2006, %v2251
      %v2314 = vadd.f32 %v2007, %v2256
      %v2315 = vadd.f32 %v2008, %v2261
      %v2316 = vadd.f32 %v2009, %v2266
      %v2317 = vadd.f32 %v2010, %v2271
      %v2318 = vadd.f32 %v2011, %v2276
      %v2319 = vadd.f32 %v2012, %v2281
      %v2320 = vadd.f32 %v2013, %v2286
      %v2321 = vld [vmem:[%s2014 + $0x1] sm:$0xff]
      %v2322 = vld [vmem:[%s2014 + $0x9] sm:$0xff]
      %v2323 = vld [vmem:[%s2014 + $0x19] sm:$0xff]
      %v2324 = vld [vmem:[%s2014 + $0x21] sm:$0xff]
      %v2325 = vld [vmem:[%s2014 + $0x31] sm:$0xff]
      %v2326 = vld [vmem:[%s2014 + $0x39] sm:$0xff]
      %v2327 = vld [vmem:[%s2014 + $0x49] sm:$0xff]
      %v2328 = vld [vmem:[%s2014 + $0x51] sm:$0xff]
      %v2329 = vld [vmem:[%s2014 + $0x61] sm:$0xff]
      %v2330 = vld [vmem:[%s2014 + $0x69] sm:$0xff]
      %v2331 = vld [vmem:[%s2014 + $0x79] sm:$0xff]
      %v2332 = vld [vmem:[%s2014 + $0x81] sm:$0xff]
      %v2333 = vld [vmem:[%s2014 + $0x91] sm:$0xff]
      %v2334 = vld [vmem:[%s2014 + $0x99] sm:$0xff]
      %v2335 = vld [vmem:[%s2014 + $0xa9] sm:$0xff]
      %v2336 = vld [vmem:[%s2014 + $0xb1] sm:$0xff]
      %v2337 = vld [vmem:[%s2014 + $0xc1] sm:$0xff]
      %v2338 = vld [vmem:[%s2014 + $0xc9] sm:$0xff]
      %v2339 = vld [vmem:[%s2014 + $0xd9] sm:$0xff]
      %v2340 = vld [vmem:[%s2014 + $0xe1] sm:$0xff]
      %v2341 = vld [vmem:[%s2014 + $0xf1] sm:$0xff]
      %v2342 = vld [vmem:[%s2014 + $0xf9] sm:$0xff]
      %v2343 = vld [vmem:[%s2014 + $0x109] sm:$0xff]
      %v2344 = vld [vmem:[%s2014 + $0x111] sm:$0xff]
      %v2345 = vld [vmem:[%s2014 + $0x121] sm:$0xff]
      %v2346 = vld [vmem:[%s2014 + $0x129] sm:$0xff]
      %v2347 = vld [vmem:[%s2014 + $0x139] sm:$0xff]
      %v2348 = vld [vmem:[%s2014 + $0x141] sm:$0xff]
      %v2349 = vld [vmem:[%s2014 + $0x151] sm:$0xff]
      %v2350 = vld [vmem:[%s2014 + $0x159] sm:$0xff]
      %v2351 = vld [vmem:[%s2014 + $0x169] sm:$0xff]
      %v2352 = vld [vmem:[%s2014 + $0x171] sm:$0xff]
      %s2353 = scalar_lea.vmem %s1, 896
      %v2354 = vld [vmem:[%s2353] sm:$0xff]
      %v2355 = vld [vmem:[%s2353 + $0x8] sm:$0xff]
      %v2356 = vld [vmem:[%s2353 + $0x10] sm:$0xff]
      %v2357 = vld [vmem:[%s2353 + $0x18] sm:$0xff]
      %v2358 = vld [vmem:[%s2353 + $0x20] sm:$0xff]
      %v2359 = vld [vmem:[%s2353 + $0x28] sm:$0xff]
      %v2360 = vld [vmem:[%s2353 + $0x30] sm:$0xff]
      %v2361 = vld [vmem:[%s2353 + $0x38] sm:$0xff]
      %v2362 = vld [vmem:[%s2353 + $0x40] sm:$0xff]
      %v2363 = vld [vmem:[%s2353 + $0x48] sm:$0xff]
      %v2364 = vld [vmem:[%s2353 + $0x50] sm:$0xff]
      %v2365 = vld [vmem:[%s2353 + $0x58] sm:$0xff]
      %v2366 = vld [vmem:[%s2353 + $0x60] sm:$0xff]
      %v2367 = vld [vmem:[%s2353 + $0x68] sm:$0xff]
      %v2368 = vld [vmem:[%s2353 + $0x70] sm:$0xff]
      %v2369 = vld [vmem:[%s2353 + $0x78] sm:$0xff]
      %2370 = vmatprep.subr.mxu0 0.0
      %2371 = vmatpush1.msra.mxu0 %v2354
      %2372 = vmatprep.subr.mxu0 0.0
      %2373 = vmatpush1.msra.mxu0 %v2355
      %2374 = vmatprep.subr.mxu0 0.0
      %2375 = vmatpush1.msra.mxu0 %v2356
      %2376 = vmatprep.subr.mxu0 0.0
      %2377 = vmatpush1.msra.mxu0 %v2357
      %2378 = vmatprep.subr.mxu0 0.0
      %2379 = vmatpush1.msra.mxu0 %v2358
      %2380 = vmatprep.subr.mxu0 0.0
      %2381 = vmatpush1.msra.mxu0 %v2359
      %2382 = vmatprep.subr.mxu0 0.0
      %2383 = vmatpush1.msra.mxu0 %v2360
      %2384 = vmatprep.subr.mxu0 0.0
      %2385 = vmatpush1.msra.mxu0 %v2361
      %2386 = vmatprep.subr.mxu0 0.0
      %2387 = vmatpush1.msra.mxu0 %v2362
      %2388 = vmatprep.subr.mxu0 0.0
      %2389 = vmatpush1.msra.mxu0 %v2363
      %2390 = vmatprep.subr.mxu0 0.0
      %2391 = vmatpush1.msra.mxu0 %v2364
      %2392 = vmatprep.subr.mxu0 0.0
      %2393 = vmatpush1.msra.mxu0 %v2365
      %2394 = vmatprep.subr.mxu0 0.0
      %2395 = vmatpush1.msra.mxu0 %v2366
      %2396 = vmatprep.subr.mxu0 0.0
      %2397 = vmatpush1.msra.mxu0 %v2367
      %2398 = vmatprep.subr.mxu0 0.0
      %2399 = vmatpush1.msra.mxu0 %v2368
      %2400 = vmatprep.subr.mxu0 0.0
      %2401 = vmatpush1.msra.mxu0 %v2369
      %2402 = vmatprep.subr.mxu0 0.0
      %2403 = vmatpush1.msra.mxu0 0.0
      %2404 = vmatprep.subr.mxu0 0.0
      %2405 = vmatpush1.msra.mxu0 0.0
      %2406 = vmatprep.subr.mxu0 0.0
      %2407 = vmatpush1.msra.mxu0 0.0
      %2408 = vmatprep.subr.mxu0 0.0
      %2409 = vmatpush1.msra.mxu0 0.0
      %2410 = vmatprep.subr.mxu0 0.0
      %2411 = vmatpush1.msra.mxu0 0.0
      %2412 = vmatprep.subr.mxu0 0.0
      %2413 = vmatpush1.msra.mxu0 0.0
      %2414 = vmatprep.subr.mxu0 0.0
      %2415 = vmatpush1.msra.mxu0 0.0
      %2416 = vmatprep.subr.mxu0 0.0
      %2417 = vmatpush1.msra.mxu0 0.0
      %2418 = vmatprep.subr.mxu0 0.0
      %2419 = vmatpush1.msra.mxu0 0.0
      %2420 = vmatprep.subr.mxu0 0.0
      %2421 = vmatpush1.msra.mxu0 0.0
      %2422 = vmatprep.subr.mxu0 0.0
      %2423 = vmatpush1.msra.mxu0 0.0
      %2424 = vmatprep.subr.mxu0 0.0
      %2425 = vmatpush1.msra.mxu0 0.0
      %2426 = vmatprep.subr.mxu0 0.0
      %2427 = vmatpush1.msra.mxu0 0.0
      %2428 = vmatprep.subr.mxu0 0.0
      %2429 = vmatpush1.msra.mxu0 0.0
      %2430 = vmatprep.subr.mxu0 0.0
      %2431 = vmatpush1.msra.mxu0 0.0
      %2432 = vmatprep.subr.mxu0 0.0
      %2433 = vmatpush1.msra.mxu0 0.0
      %2434 = vmatprep.mubr.f32.mxu0 0.0
      %2435 = vmatmul.mubr.f32.gmra.mrb[0].mxu0 %v2321
      %v2436 = vpop.f32.mrb[0].mxu0
      %v2437 = vadd.f32 0.0, %v2436
      %v2438 = vpop.f32.mrb[0].mxu0
      %2439 = vmatprep.mubr.f32.mxu0 0.0
      %2440 = vmatmul.mubr.f32.gmra.mrb[0].mxu0 %v2322
      %v2441 = vpop.f32.mrb[0].mxu0
      %v2442 = vadd.f32 0.0, %v2441
      %v2443 = vpop.f32.mrb[0].mxu0
      %2444 = vmatprep.mubr.f32.mxu0 0.0
      %2445 = vmatmul.mubr.f32.gmra.mrb[0].mxu0 %v2323
      %v2446 = vpop.f32.mrb[0].mxu0
      %v2447 = vadd.f32 0.0, %v2446
      %v2448 = vpop.f32.mrb[0].mxu0
      %2449 = vmatprep.mubr.f32.mxu0 0.0
      %2450 = vmatmul.mubr.f32.gmra.mrb[0].mxu0 %v2324
      %v2451 = vpop.f32.mrb[0].mxu0
      %v2452 = vadd.f32 0.0, %v2451
      %v2453 = vpop.f32.mrb[0].mxu0
      %2454 = vmatprep.mubr.f32.mxu0 0.0
      %2455 = vmatmul.mubr.f32.gmra.mrb[0].mxu0 %v2325
      %v2456 = vpop.f32.mrb[0].mxu0
      %v2457 = vadd.f32 0.0, %v2456
      %v2458 = vpop.f32.mrb[0].mxu0
      %2459 = vmatprep.mubr.f32.mxu0 0.0
      %2460 = vmatmul.mubr.f32.gmra.mrb[0].mxu0 %v2326
      %v2461 = vpop.f32.mrb[0].mxu0
      %v2462 = vadd.f32 0.0, %v2461
      %v2463 = vpop.f32.mrb[0].mxu0
      %2464 = vmatprep.mubr.f32.mxu0 0.0
      %2465 = vmatmul.mubr.f32.gmra.mrb[0].mxu0 %v2327
      %v2466 = vpop.f32.mrb[0].mxu0
      %v2467 = vadd.f32 0.0, %v2466
      %v2468 = vpop.f32.mrb[0].mxu0
      %2469 = vmatprep.mubr.f32.mxu0 0.0
      %2470 = vmatmul.mubr.f32.gmra.mrb[0].mxu0 %v2328
      %v2471 = vpop.f32.mrb[0].mxu0
      %v2472 = vadd.f32 0.0, %v2471
      %v2473 = vpop.f32.mrb[0].mxu0
      %2474 = vmatprep.mubr.f32.mxu0 0.0
      %2475 = vmatmul.mubr.f32.gmra.mrb[0].mxu0 %v2329
      %v2476 = vpop.f32.mrb[0].mxu0
      %v2477 = vadd.f32 0.0, %v2476
      %v2478 = vpop.f32.mrb[0].mxu0
      %2479 = vmatprep.mubr.f32.mxu0 0.0
      %2480 = vmatmul.mubr.f32.gmra.mrb[0].mxu0 %v2330
      %v2481 = vpop.f32.mrb[0].mxu0
      %v2482 = vadd.f32 0.0, %v2481
      %v2483 = vpop.f32.mrb[0].mxu0
      %2484 = vmatprep.mubr.f32.mxu0 0.0
      %2485 = vmatmul.mubr.f32.gmra.mrb[0].mxu0 %v2331
      %v2486 = vpop.f32.mrb[0].mxu0
      %v2487 = vadd.f32 0.0, %v2486
      %v2488 = vpop.f32.mrb[0].mxu0
      %2489 = vmatprep.mubr.f32.mxu0 0.0
      %2490 = vmatmul.mubr.f32.gmra.mrb[0].mxu0 %v2332
      %v2491 = vpop.f32.mrb[0].mxu0
      %v2492 = vadd.f32 0.0, %v2491
      %v2493 = vpop.f32.mrb[0].mxu0
      %2494 = vmatprep.mubr.f32.mxu0 0.0
      %2495 = vmatmul.mubr.f32.gmra.mrb[0].mxu0 %v2333
      %v2496 = vpop.f32.mrb[0].mxu0
      %v2497 = vadd.f32 0.0, %v2496
      %v2498 = vpop.f32.mrb[0].mxu0
      %2499 = vmatprep.mubr.f32.mxu0 0.0
      %2500 = vmatmul.mubr.f32.gmra.mrb[0].mxu0 %v2334
      %v2501 = vpop.f32.mrb[0].mxu0
      %v2502 = vadd.f32 0.0, %v2501
      %v2503 = vpop.f32.mrb[0].mxu0
      %2504 = vmatprep.mubr.f32.mxu0 0.0
      %2505 = vmatmul.mubr.f32.gmra.mrb[0].mxu0 %v2335
      %v2506 = vpop.f32.mrb[0].mxu0
      %v2507 = vadd.f32 0.0, %v2506
      %v2508 = vpop.f32.mrb[0].mxu0
      %2509 = vmatprep.mubr.f32.mxu0 0.0
      %2510 = vmatmul.mubr.f32.gmra.mrb[0].mxu0 %v2336
      %v2511 = vpop.f32.mrb[0].mxu0
      %v2512 = vadd.f32 0.0, %v2511
      %v2513 = vpop.f32.mrb[0].mxu0
      %2514 = vmatprep.mubr.f32.mxu0 0.0
      %2515 = vmatmul.mubr.f32.gmra.mrb[0].mxu0 %v2337
      %v2516 = vpop.f32.mrb[0].mxu0
      %v2517 = vadd.f32 0.0, %v2516
      %v2518 = vpop.f32.mrb[0].mxu0
      %2519 = vmatprep.mubr.f32.mxu0 0.0
      %2520 = vmatmul.mubr.f32.gmra.mrb[0].mxu0 %v2338
      %v2521 = vpop.f32.mrb[0].mxu0
      %v2522 = vadd.f32 0.0, %v2521
      %v2523 = vpop.f32.mrb[0].mxu0
      %2524 = vmatprep.mubr.f32.mxu0 0.0
      %2525 = vmatmul.mubr.f32.gmra.mrb[0].mxu0 %v2339
      %v2526 = vpop.f32.mrb[0].mxu0
      %v2527 = vadd.f32 0.0, %v2526
      %v2528 = vpop.f32.mrb[0].mxu0
      %2529 = vmatprep.mubr.f32.mxu0 0.0
      %2530 = vmatmul.mubr.f32.gmra.mrb[0].mxu0 %v2340
      %v2531 = vpop.f32.mrb[0].mxu0
      %v2532 = vadd.f32 0.0, %v2531
      %v2533 = vpop.f32.mrb[0].mxu0
      %2534 = vmatprep.mubr.f32.mxu0 0.0
      %2535 = vmatmul.mubr.f32.gmra.mrb[0].mxu0 %v2341
      %v2536 = vpop.f32.mrb[0].mxu0
      %v2537 = vadd.f32 0.0, %v2536
      %v2538 = vpop.f32.mrb[0].mxu0
      %2539 = vmatprep.mubr.f32.mxu0 0.0
      %2540 = vmatmul.mubr.f32.gmra.mrb[0].mxu0 %v2342
      %v2541 = vpop.f32.mrb[0].mxu0
      %v2542 = vadd.f32 0.0, %v2541
      %v2543 = vpop.f32.mrb[0].mxu0
      %2544 = vmatprep.mubr.f32.mxu0 0.0
      %2545 = vmatmul.mubr.f32.gmra.mrb[0].mxu0 %v2343
      %v2546 = vpop.f32.mrb[0].mxu0
      %v2547 = vadd.f32 0.0, %v2546
      %v2548 = vpop.f32.mrb[0].mxu0
      %2549 = vmatprep.mubr.f32.mxu0 0.0
      %2550 = vmatmul.mubr.f32.gmra.mrb[0].mxu0 %v2344
      %v2551 = vpop.f32.mrb[0].mxu0
      %v2552 = vadd.f32 0.0, %v2551
      %v2553 = vpop.f32.mrb[0].mxu0
      %2554 = vmatprep.mubr.f32.mxu0 0.0
      %2555 = vmatmul.mubr.f32.gmra.mrb[0].mxu0 %v2345
      %v2556 = vpop.f32.mrb[0].mxu0
      %v2557 = vadd.f32 0.0, %v2556
      %v2558 = vpop.f32.mrb[0].mxu0
      %2559 = vmatprep.mubr.f32.mxu0 0.0
      %2560 = vmatmul.mubr.f32.gmra.mrb[0].mxu0 %v2346
      %v2561 = vpop.f32.mrb[0].mxu0
      %v2562 = vadd.f32 0.0, %v2561
      %v2563 = vpop.f32.mrb[0].mxu0
      %2564 = vmatprep.mubr.f32.mxu0 0.0
      %2565 = vmatmul.mubr.f32.gmra.mrb[0].mxu0 %v2347
      %v2566 = vpop.f32.mrb[0].mxu0
      %v2567 = vadd.f32 0.0, %v2566
      %v2568 = vpop.f32.mrb[0].mxu0
      %2569 = vmatprep.mubr.f32.mxu0 0.0
      %2570 = vmatmul.mubr.f32.gmra.mrb[0].mxu0 %v2348
      %v2571 = vpop.f32.mrb[0].mxu0
      %v2572 = vadd.f32 0.0, %v2571
      %v2573 = vpop.f32.mrb[0].mxu0
      %2574 = vmatprep.mubr.f32.mxu0 0.0
      %2575 = vmatmul.mubr.f32.gmra.mrb[0].mxu0 %v2349
      %v2576 = vpop.f32.mrb[0].mxu0
      %v2577 = vadd.f32 0.0, %v2576
      %v2578 = vpop.f32.mrb[0].mxu0
      %2579 = vmatprep.mubr.f32.mxu0 0.0
      %2580 = vmatmul.mubr.f32.gmra.mrb[0].mxu0 %v2350
      %v2581 = vpop.f32.mrb[0].mxu0
      %v2582 = vadd.f32 0.0, %v2581
      %v2583 = vpop.f32.mrb[0].mxu0
      %2584 = vmatprep.mubr.f32.mxu0 0.0
      %2585 = vmatmul.mubr.f32.gmra.mrb[0].mxu0 %v2351
      %v2586 = vpop.f32.mrb[0].mxu0
      %v2587 = vadd.f32 0.0, %v2586
      %v2588 = vpop.f32.mrb[0].mxu0
      %2589 = vmatprep.mubr.f32.mxu0 0.0
      %2590 = vmatmul.mubr.f32.gmra.mrb[0].mxu0 %v2352
      %v2591 = vpop.f32.mrb[0].mxu0
      %v2592 = vadd.f32 0.0, %v2591
      %v2593 = vpop.f32.mrb[0].mxu0
      %2594 = vdwg.mxu0
      %v2595 = vadd.f32 %v2289, %v2437
      %v2596 = vadd.f32 %v2290, %v2442
      %v2597 = vadd.f32 %v2291, %v2447
      %v2598 = vadd.f32 %v2292, %v2452
      %v2599 = vadd.f32 %v2293, %v2457
      %v2600 = vadd.f32 %v2294, %v2462
      %v2601 = vadd.f32 %v2295, %v2467
      %v2602 = vadd.f32 %v2296, %v2472
      %v2603 = vadd.f32 %v2297, %v2477
      %v2604 = vadd.f32 %v2298, %v2482
      %v2605 = vadd.f32 %v2299, %v2487
      %v2606 = vadd.f32 %v2300, %v2492
      %v2607 = vadd.f32 %v2301, %v2497
      %v2608 = vadd.f32 %v2302, %v2502
      %v2609 = vadd.f32 %v2303, %v2507
      %v2610 = vadd.f32 %v2304, %v2512
      %v2611 = vadd.f32 %v2305, %v2517
      %v2612 = vadd.f32 %v2306, %v2522
      %v2613 = vadd.f32 %v2307, %v2527
      %v2614 = vadd.f32 %v2308, %v2532
      %v2615 = vadd.f32 %v2309, %v2537
      %v2616 = vadd.f32 %v2310, %v2542
      %v2617 = vadd.f32 %v2311, %v2547
      %v2618 = vadd.f32 %v2312, %v2552
      %v2619 = vadd.f32 %v2313, %v2557
      %v2620 = vadd.f32 %v2314, %v2562
      %v2621 = vadd.f32 %v2315, %v2567
      %v2622 = vadd.f32 %v2316, %v2572
      %v2623 = vadd.f32 %v2317, %v2577
      %v2624 = vadd.f32 %v2318, %v2582
      %v2625 = vadd.f32 %v2319, %v2587
      %v2626 = vadd.f32 %v2320, %v2592
      %v2627 = vld [vmem:[%s2014 + $0x2] sm:$0xff]
      %v2628 = vld [vmem:[%s2014 + $0xa] sm:$0xff]
      %v2629 = vld [vmem:[%s2014 + $0x1a] sm:$0xff]
      %v2630 = vld [vmem:[%s2014 + $0x22] sm:$0xff]
      %v2631 = vld [vmem:[%s2014 + $0x32] sm:$0xff]
      %v2632 = vld [vmem:[%s2014 + $0x3a] sm:$0xff]
      %v2633 = vld [vmem:[%s2014 + $0x4a] sm:$0xff]
      %v2634 = vld [vmem:[%s2014 + $0x52] sm:$0xff]
      %v2635 = vld [vmem:[%s2014 + $0x62] sm:$0xff]
      %v2636 = vld [vmem:[%s2014 + $0x6a] sm:$0xff]
      %v2637 = vld [vmem:[%s2014 + $0x7a] sm:$0xff]
      %v2638 = vld [vmem:[%s2014 + $0x82] sm:$0xff]
      %v2639 = vld [vmem:[%s2014 + $0x92] sm:$0xff]
      %v2640 = vld [vmem:[%s2014 + $0x9a] sm:$0xff]
      %v2641 = vld [vmem:[%s2014 + $0xaa] sm:$0xff]
      %v2642 = vld [vmem:[%s2014 + $0xb2] sm:$0xff]
      %v2643 = vld [vmem:[%s2014 + $0xc2] sm:$0xff]
      %v2644 = vld [vmem:[%s2014 + $0xca] sm:$0xff]
      %v2645 = vld [vmem:[%s2014 + $0xda] sm:$0xff]
      %v2646 = vld [vmem:[%s2014 + $0xe2] sm:$0xff]
      %v2647 = vld [vmem:[%s2014 + $0xf2] sm:$0xff]
      %v2648 = vld [vmem:[%s2014 + $0xfa] sm:$0xff]
      %v2649 = vld [vmem:[%s2014 + $0x10a] sm:$0xff]
      %v2650 = vld [vmem:[%s2014 + $0x112] sm:$0xff]
      %v2651 = vld [vmem:[%s2014 + $0x122] sm:$0xff]
      %v2652 = vld [vmem:[%s2014 + $0x12a] sm:$0xff]
      %v2653 = vld [vmem:[%s2014 + $0x13a] sm:$0xff]
      %v2654 = vld [vmem:[%s2014 + $0x142] sm:$0xff]
      %v2655 = vld [vmem:[%s2014 + $0x152] sm:$0xff]
      %v2656 = vld [vmem:[%s2014 + $0x15a] sm:$0xff]
      %v2657 = vld [vmem:[%s2014 + $0x16a] sm:$0xff]
      %v2658 = vld [vmem:[%s2014 + $0x172] sm:$0xff]
      %s2659 = scalar_lea.vmem %s1, 1024
      %v2660 = vld [vmem:[%s2659] sm:$0xff]
      %v2661 = vld [vmem:[%s2659 + $0x8] sm:$0xff]
      %v2662 = vld [vmem:[%s2659 + $0x10] sm:$0xff]
      %v2663 = vld [vmem:[%s2659 + $0x18] sm:$0xff]
      %v2664 = vld [vmem:[%s2659 + $0x20] sm:$0xff]
      %v2665 = vld [vmem:[%s2659 + $0x28] sm:$0xff]
      %v2666 = vld [vmem:[%s2659 + $0x30] sm:$0xff]
      %v2667 = vld [vmem:[%s2659 + $0x38] sm:$0xff]
      %v2668 = vld [vmem:[%s2659 + $0x40] sm:$0xff]
      %v2669 = vld [vmem:[%s2659 + $0x48] sm:$0xff]
      %v2670 = vld [vmem:[%s2659 + $0x50] sm:$0xff]
      %v2671 = vld [vmem:[%s2659 + $0x58] sm:$0xff]
      %v2672 = vld [vmem:[%s2659 + $0x60] sm:$0xff]
      %v2673 = vld [vmem:[%s2659 + $0x68] sm:$0xff]
      %v2674 = vld [vmem:[%s2659 + $0x70] sm:$0xff]
      %v2675 = vld [vmem:[%s2659 + $0x78] sm:$0xff]
      %2676 = vmatprep.subr.mxu0 0.0
      %2677 = vmatpush1.msra.mxu0 %v2660
      %2678 = vmatprep.subr.mxu0 0.0
      %2679 = vmatpush1.msra.mxu0 %v2661
      %2680 = vmatprep.subr.mxu0 0.0
      %2681 = vmatpush1.msra.mxu0 %v2662
      %2682 = vmatprep.subr.mxu0 0.0
      %2683 = vmatpush1.msra.mxu0 %v2663
      %2684 = vmatprep.subr.mxu0 0.0
      %2685 = vmatpush1.msra.mxu0 %v2664
      %2686 = vmatprep.subr.mxu0 0.0
      %2687 = vmatpush1.msra.mxu0 %v2665
      %2688 = vmatprep.subr.mxu0 0.0
      %2689 = vmatpush1.msra.mxu0 %v2666
      %2690 = vmatprep.subr.mxu0 0.0
      %2691 = vmatpush1.msra.mxu0 %v2667
      %2692 = vmatprep.subr.mxu0 0.0
      %2693 = vmatpush1.msra.mxu0 %v2668
      %2694 = vmatprep.subr.mxu0 0.0
      %2695 = vmatpush1.msra.mxu0 %v2669
      %2696 = vmatprep.subr.mxu0 0.0
      %2697 = vmatpush1.msra.mxu0 %v2670
      %2698 = vmatprep.subr.mxu0 0.0
      %2699 = vmatpush1.msra.mxu0 %v2671
      %2700 = vmatprep.subr.mxu0 0.0
      %2701 = vmatpush1.msra.mxu0 %v2672
      %2702 = vmatprep.subr.mxu0 0.0
      %2703 = vmatpush1.msra.mxu0 %v2673
      %2704 = vmatprep.subr.mxu0 0.0
      %2705 = vmatpush1.msra.mxu0 %v2674
      %2706 = vmatprep.subr.mxu0 0.0
      %2707 = vmatpush1.msra.mxu0 %v2675
      %2708 = vmatprep.subr.mxu0 0.0
      %2709 = vmatpush1.msra.mxu0 0.0
      %2710 = vmatprep.subr.mxu0 0.0
      %2711 = vmatpush1.msra.mxu0 0.0
      %2712 = vmatprep.subr.mxu0 0.0
      %2713 = vmatpush1.msra.mxu0 0.0
      %2714 = vmatprep.subr.mxu0 0.0
      %2715 = vmatpush1.msra.mxu0 0.0
      %2716 = vmatprep.subr.mxu0 0.0
      %2717 = vmatpush1.msra.mxu0 0.0
      %2718 = vmatprep.subr.mxu0 0.0
      %2719 = vmatpush1.msra.mxu0 0.0
      %2720 = vmatprep.subr.mxu0 0.0
      %2721 = vmatpush1.msra.mxu0 0.0
      %2722 = vmatprep.subr.mxu0 0.0
      %2723 = vmatpush1.msra.mxu0 0.0
      %2724 = vmatprep.subr.mxu0 0.0
      %2725 = vmatpush1.msra.mxu0 0.0
      %2726 = vmatprep.subr.mxu0 0.0
      %2727 = vmatpush1.msra.mxu0 0.0
      %2728 = vmatprep.subr.mxu0 0.0
      %2729 = vmatpush1.msra.mxu0 0.0
      %2730 = vmatprep.subr.mxu0 0.0
      %2731 = vmatpush1.msra.mxu0 0.0
      %2732 = vmatprep.subr.mxu0 0.0
      %2733 = vmatpush1.msra.mxu0 0.0
      %2734 = vmatprep.subr.mxu0 0.0
      %2735 = vmatpush1.msra.mxu0 0.0
      %2736 = vmatprep.subr.mxu0 0.0
      %2737 = vmatpush1.msra.mxu0 0.0
      %2738 = vmatprep.subr.mxu0 0.0
      %2739 = vmatpush1.msra.mxu0 0.0
      %2740 = vmatprep.mubr.f32.mxu0 0.0
      %2741 = vmatmul.mubr.f32.gmra.mrb[0].mxu0 %v2627
      %v2742 = vpop.f32.mrb[0].mxu0
      %v2743 = vadd.f32 0.0, %v2742
      %v2744 = vpop.f32.mrb[0].mxu0
      %2745 = vmatprep.mubr.f32.mxu0 0.0
      %2746 = vmatmul.mubr.f32.gmra.mrb[0].mxu0 %v2628
      %v2747 = vpop.f32.mrb[0].mxu0
      %v2748 = vadd.f32 0.0, %v2747
      %v2749 = vpop.f32.mrb[0].mxu0
      %2750 = vmatprep.mubr.f32.mxu0 0.0
      %2751 = vmatmul.mubr.f32.gmra.mrb[0].mxu0 %v2629
      %v2752 = vpop.f32.mrb[0].mxu0
      %v2753 = vadd.f32 0.0, %v2752
      %v2754 = vpop.f32.mrb[0].mxu0
      %2755 = vmatprep.mubr.f32.mxu0 0.0
      %2756 = vmatmul.mubr.f32.gmra.mrb[0].mxu0 %v2630
      %v2757 = vpop.f32.mrb[0].mxu0
      %v2758 = vadd.f32 0.0, %v2757
      %v2759 = vpop.f32.mrb[0].mxu0
      %2760 = vmatprep.mubr.f32.mxu0 0.0
      %2761 = vmatmul.mubr.f32.gmra.mrb[0].mxu0 %v2631
      %v2762 = vpop.f32.mrb[0].mxu0
      %v2763 = vadd.f32 0.0, %v2762
      %v2764 = vpop.f32.mrb[0].mxu0
      %2765 = vmatprep.mubr.f32.mxu0 0.0
      %2766 = vmatmul.mubr.f32.gmra.mrb[0].mxu0 %v2632
      %v2767 = vpop.f32.mrb[0].mxu0
      %v2768 = vadd.f32 0.0, %v2767
      %v2769 = vpop.f32.mrb[0].mxu0
      %2770 = vmatprep.mubr.f32.mxu0 0.0
      %2771 = vmatmul.mubr.f32.gmra.mrb[0].mxu0 %v2633
      %v2772 = vpop.f32.mrb[0].mxu0
      %v2773 = vadd.f32 0.0, %v2772
      %v2774 = vpop.f32.mrb[0].mxu0
      %2775 = vmatprep.mubr.f32.mxu0 0.0
      %2776 = vmatmul.mubr.f32.gmra.mrb[0].mxu0 %v2634
      %v2777 = vpop.f32.mrb[0].mxu0
      %v2778 = vadd.f32 0.0, %v2777
      %v2779 = vpop.f32.mrb[0].mxu0
      %2780 = vmatprep.mubr.f32.mxu0 0.0
      %2781 = vmatmul.mubr.f32.gmra.mrb[0].mxu0 %v2635
      %v2782 = vpop.f32.mrb[0].mxu0
      %v2783 = vadd.f32 0.0, %v2782
      %v2784 = vpop.f32.mrb[0].mxu0
      %2785 = vmatprep.mubr.f32.mxu0 0.0
      %2786 = vmatmul.mubr.f32.gmra.mrb[0].mxu0 %v2636
      %v2787 = vpop.f32.mrb[0].mxu0
      %v2788 = vadd.f32 0.0, %v2787
      %v2789 = vpop.f32.mrb[0].mxu0
      %2790 = vmatprep.mubr.f32.mxu0 0.0
      %2791 = vmatmul.mubr.f32.gmra.mrb[0].mxu0 %v2637
      %v2792 = vpop.f32.mrb[0].mxu0
      %v2793 = vadd.f32 0.0, %v2792
      %v2794 = vpop.f32.mrb[0].mxu0
      %2795 = vmatprep.mubr.f32.mxu0 0.0
      %2796 = vmatmul.mubr.f32.gmra.mrb[0].mxu0 %v2638
      %v2797 = vpop.f32.mrb[0].mxu0
      %v2798 = vadd.f32 0.0, %v2797
      %v2799 = vpop.f32.mrb[0].mxu0
      %2800 = vmatprep.mubr.f32.mxu0 0.0
      %2801 = vmatmul.mubr.f32.gmra.mrb[0].mxu0 %v2639
      %v2802 = vpop.f32.mrb[0].mxu0
      %v2803 = vadd.f32 0.0, %v2802
      %v2804 = vpop.f32.mrb[0].mxu0
      %2805 = vmatprep.mubr.f32.mxu0 0.0
      %2806 = vmatmul.mubr.f32.gmra.mrb[0].mxu0 %v2640
      %v2807 = vpop.f32.mrb[0].mxu0
      %v2808 = vadd.f32 0.0, %v2807
      %v2809 = vpop.f32.mrb[0].mxu0
      %2810 = vmatprep.mubr.f32.mxu0 0.0
      %2811 = vmatmul.mubr.f32.gmra.mrb[0].mxu0 %v2641
      %v2812 = vpop.f32.mrb[0].mxu0
      %v2813 = vadd.f32 0.0, %v2812
      %v2814 = vpop.f32.mrb[0].mxu0
      %2815 = vmatprep.mubr.f32.mxu0 0.0
      %2816 = vmatmul.mubr.f32.gmra.mrb[0].mxu0 %v2642
      %v2817 = vpop.f32.mrb[0].mxu0
      %v2818 = vadd.f32 0.0, %v2817
      %v2819 = vpop.f32.mrb[0].mxu0
      %2820 = vmatprep.mubr.f32.mxu0 0.0
      %2821 = vmatmul.mubr.f32.gmra.mrb[0].mxu0 %v2643
      %v2822 = vpop.f32.mrb[0].mxu0
      %v2823 = vadd.f32 0.0, %v2822
      %v2824 = vpop.f32.mrb[0].mxu0
      %2825 = vmatprep.mubr.f32.mxu0 0.0
      %2826 = vmatmul.mubr.f32.gmra.mrb[0].mxu0 %v2644
      %v2827 = vpop.f32.mrb[0].mxu0
      %v2828 = vadd.f32 0.0, %v2827
      %v2829 = vpop.f32.mrb[0].mxu0
      %2830 = vmatprep.mubr.f32.mxu0 0.0
      %2831 = vmatmul.mubr.f32.gmra.mrb[0].mxu0 %v2645
      %v2832 = vpop.f32.mrb[0].mxu0
      %v2833 = vadd.f32 0.0, %v2832
      %v2834 = vpop.f32.mrb[0].mxu0
      %2835 = vmatprep.mubr.f32.mxu0 0.0
      %2836 = vmatmul.mubr.f32.gmra.mrb[0].mxu0 %v2646
      %v2837 = vpop.f32.mrb[0].mxu0
      %v2838 = vadd.f32 0.0, %v2837
      %v2839 = vpop.f32.mrb[0].mxu0
      %2840 = vmatprep.mubr.f32.mxu0 0.0
      %2841 = vmatmul.mubr.f32.gmra.mrb[0].mxu0 %v2647
      %v2842 = vpop.f32.mrb[0].mxu0
      %v2843 = vadd.f32 0.0, %v2842
      %v2844 = vpop.f32.mrb[0].mxu0
      %2845 = vmatprep.mubr.f32.mxu0 0.0
      %2846 = vmatmul.mubr.f32.gmra.mrb[0].mxu0 %v2648
      %v2847 = vpop.f32.mrb[0].mxu0
      %v2848 = vadd.f32 0.0, %v2847
      %v2849 = vpop.f32.mrb[0].mxu0
      %2850 = vmatprep.mubr.f32.mxu0 0.0
      %2851 = vmatmul.mubr.f32.gmra.mrb[0].mxu0 %v2649
      %v2852 = vpop.f32.mrb[0].mxu0
      %v2853 = vadd.f32 0.0, %v2852
      %v2854 = vpop.f32.mrb[0].mxu0
      %2855 = vmatprep.mubr.f32.mxu0 0.0
      %2856 = vmatmul.mubr.f32.gmra.mrb[0].mxu0 %v2650
      %v2857 = vpop.f32.mrb[0].mxu0
      %v2858 = vadd.f32 0.0, %v2857
      %v2859 = vpop.f32.mrb[0].mxu0
      %2860 = vmatprep.mubr.f32.mxu0 0.0
      %2861 = vmatmul.mubr.f32.gmra.mrb[0].mxu0 %v2651
      %v2862 = vpop.f32.mrb[0].mxu0
      %v2863 = vadd.f32 0.0, %v2862
      %v2864 = vpop.f32.mrb[0].mxu0
      %2865 = vmatprep.mubr.f32.mxu0 0.0
      %2866 = vmatmul.mubr.f32.gmra.mrb[0].mxu0 %v2652
      %v2867 = vpop.f32.mrb[0].mxu0
      %v2868 = vadd.f32 0.0, %v2867
      %v2869 = vpop.f32.mrb[0].mxu0
      %2870 = vmatprep.mubr.f32.mxu0 0.0
      %2871 = vmatmul.mubr.f32.gmra.mrb[0].mxu0 %v2653
      %v2872 = vpop.f32.mrb[0].mxu0
      %v2873 = vadd.f32 0.0, %v2872
      %v2874 = vpop.f32.mrb[0].mxu0
      %2875 = vmatprep.mubr.f32.mxu0 0.0
      %2876 = vmatmul.mubr.f32.gmra.mrb[0].mxu0 %v2654
      %v2877 = vpop.f32.mrb[0].mxu0
      %v2878 = vadd.f32 0.0, %v2877
      %v2879 = vpop.f32.mrb[0].mxu0
      %2880 = vmatprep.mubr.f32.mxu0 0.0
      %2881 = vmatmul.mubr.f32.gmra.mrb[0].mxu0 %v2655
      %v2882 = vpop.f32.mrb[0].mxu0
      %v2883 = vadd.f32 0.0, %v2882
      %v2884 = vpop.f32.mrb[0].mxu0
      %2885 = vmatprep.mubr.f32.mxu0 0.0
      %2886 = vmatmul.mubr.f32.gmra.mrb[0].mxu0 %v2656
      %v2887 = vpop.f32.mrb[0].mxu0
      %v2888 = vadd.f32 0.0, %v2887
      %v2889 = vpop.f32.mrb[0].mxu0
      %2890 = vmatprep.mubr.f32.mxu0 0.0
      %2891 = vmatmul.mubr.f32.gmra.mrb[0].mxu0 %v2657
      %v2892 = vpop.f32.mrb[0].mxu0
      %v2893 = vadd.f32 0.0, %v2892
      %v2894 = vpop.f32.mrb[0].mxu0
      %2895 = vmatprep.mubr.f32.mxu0 0.0
      %2896 = vmatmul.mubr.f32.gmra.mrb[0].mxu0 %v2658
      %v2897 = vpop.f32.mrb[0].mxu0
      %v2898 = vadd.f32 0.0, %v2897
      %v2899 = vpop.f32.mrb[0].mxu0
      %2900 = vdwg.mxu0
      %v2901 = vadd.f32 %v2595, %v2743
      %v2902 = vadd.f32 %v2596, %v2748
      %v2903 = vadd.f32 %v2597, %v2753
      %v2904 = vadd.f32 %v2598, %v2758
      %v2905 = vadd.f32 %v2599, %v2763
      %v2906 = vadd.f32 %v2600, %v2768
      %v2907 = vadd.f32 %v2601, %v2773
      %v2908 = vadd.f32 %v2602, %v2778
      %v2909 = vadd.f32 %v2603, %v2783
      %v2910 = vadd.f32 %v2604, %v2788
      %v2911 = vadd.f32 %v2605, %v2793
      %v2912 = vadd.f32 %v2606, %v2798
      %v2913 = vadd.f32 %v2607, %v2803
      %v2914 = vadd.f32 %v2608, %v2808
      %v2915 = vadd.f32 %v2609, %v2813
      %v2916 = vadd.f32 %v2610, %v2818
      %v2917 = vadd.f32 %v2611, %v2823
      %v2918 = vadd.f32 %v2612, %v2828
      %v2919 = vadd.f32 %v2613, %v2833
      %v2920 = vadd.f32 %v2614, %v2838
      %v2921 = vadd.f32 %v2615, %v2843
      %v2922 = vadd.f32 %v2616, %v2848
      %v2923 = vadd.f32 %v2617, %v2853
      %v2924 = vadd.f32 %v2618, %v2858
      %v2925 = vadd.f32 %v2619, %v2863
      %v2926 = vadd.f32 %v2620, %v2868
      %v2927 = vadd.f32 %v2621, %v2873
      %v2928 = vadd.f32 %v2622, %v2878
      %v2929 = vadd.f32 %v2623, %v2883
      %v2930 = vadd.f32 %v2624, %v2888
      %v2931 = vadd.f32 %v2625, %v2893
      %v2932 = vadd.f32 %v2626, %v2898
      %v2933 = vmax.f32 %v2901, 0.0
      %v2934 = vmax.f32 %v2902, 0.0
      %v2935 = vmax.f32 %v2903, 0.0
      %v2936 = vmax.f32 %v2904, 0.0
      %v2937 = vmax.f32 %v2905, 0.0
      %v2938 = vmax.f32 %v2906, 0.0
      %v2939 = vmax.f32 %v2907, 0.0
      %v2940 = vmax.f32 %v2908, 0.0
      %v2941 = vmax.f32 %v2909, 0.0
      %v2942 = vmax.f32 %v2910, 0.0
      %v2943 = vmax.f32 %v2911, 0.0
      %v2944 = vmax.f32 %v2912, 0.0
      %v2945 = vmax.f32 %v2913, 0.0
      %v2946 = vmax.f32 %v2914, 0.0
      %v2947 = vmax.f32 %v2915, 0.0
      %v2948 = vmax.f32 %v2916, 0.0
      %v2949 = vmax.f32 %v2917, 0.0
      %v2950 = vmax.f32 %v2918, 0.0
      %v2951 = vmax.f32 %v2919, 0.0
      %v2952 = vmax.f32 %v2920, 0.0
      %v2953 = vmax.f32 %v2921, 0.0
      %v2954 = vmax.f32 %v2922, 0.0
      %v2955 = vmax.f32 %v2923, 0.0
      %v2956 = vmax.f32 %v2924, 0.0
      %v2957 = vmax.f32 %v2925, 0.0
      %v2958 = vmax.f32 %v2926, 0.0
      %v2959 = vmax.f32 %v2927, 0.0
      %v2960 = vmax.f32 %v2928, 0.0
      %v2961 = vmax.f32 %v2929, 0.0
      %v2962 = vmax.f32 %v2930, 0.0
      %v2963 = vmax.f32 %v2931, 0.0
      %v2964 = vmax.f32 %v2932, 0.0
      %2965 = vst [vmem:[%s170] sm:$0xff] %v2933
      %2966 = vst [vmem:[%s170 + $0x8] sm:$0xff] %v2934
      %2967 = vst [vmem:[%s170 + $0x10] sm:$0xff] %v2935
      %2968 = vst [vmem:[%s170 + $0x18] sm:$0xff] %v2936
      %2969 = vst [vmem:[%s170 + $0x20] sm:$0xff] %v2937
      %2970 = vst [vmem:[%s170 + $0x28] sm:$0xff] %v2938
      %2971 = vst [vmem:[%s170 + $0x30] sm:$0xff] %v2939
      %2972 = vst [vmem:[%s170 + $0x38] sm:$0xff] %v2940
      %2973 = vst [vmem:[%s170 + $0x40] sm:$0xff] %v2941
      %2974 = vst [vmem:[%s170 + $0x48] sm:$0xff] %v2942
      %2975 = vst [vmem:[%s170 + $0x50] sm:$0xff] %v2943
      %2976 = vst [vmem:[%s170 + $0x58] sm:$0xff] %v2944
      %2977 = vst [vmem:[%s170 + $0x60] sm:$0xff] %v2945
      %2978 = vst [vmem:[%s170 + $0x68] sm:$0xff] %v2946
      %2979 = vst [vmem:[%s170 + $0x70] sm:$0xff] %v2947
      %2980 = vst [vmem:[%s170 + $0x78] sm:$0xff] %v2948
      %2981 = vst [vmem:[%s170 + $0x80] sm:$0xff] %v2949
      %2982 = vst [vmem:[%s170 + $0x88] sm:$0xff] %v2950
      %2983 = vst [vmem:[%s170 + $0x90] sm:$0xff] %v2951
      %2984 = vst [vmem:[%s170 + $0x98] sm:$0xff] %v2952
      %2985 = vst [vmem:[%s170 + $0xa0] sm:$0xff] %v2953
      %2986 = vst [vmem:[%s170 + $0xa8] sm:$0xff] %v2954
      %2987 = vst [vmem:[%s170 + $0xb0] sm:$0xff] %v2955
      %2988 = vst [vmem:[%s170 + $0xb8] sm:$0xff] %v2956
      %2989 = vst [vmem:[%s170 + $0xc0] sm:$0xff] %v2957
      %2990 = vst [vmem:[%s170 + $0xc8] sm:$0xff] %v2958
      %2991 = vst [vmem:[%s170 + $0xd0] sm:$0xff] %v2959
      %2992 = vst [vmem:[%s170 + $0xd8] sm:$0xff] %v2960
      %2993 = vst [vmem:[%s170 + $0xe0] sm:$0xff] %v2961
      %2994 = vst [vmem:[%s170 + $0xe8] sm:$0xff] %v2962
      %2995 = vst [vmem:[%s170 + $0xf0] sm:$0xff] %v2963
      %2996 = vst [vmem:[%s170 + $0xf8] sm:$0xff] %v2964
      %p2997 = scmp.lt.s32.totalorder %s14, 1
      %s2998 = scalar_select %p2997, %s14, 1
      %s2999 = smul.addr %s2998, 32
      %s3000 = smul.addr %s2999, 8
      %s3001 = scalar_lea.vmem %s3, %s3000
      // Predicated region
      $region33: #{forward_nchw.2} parent=31 // pred_check
        %p3002 = pneg %p100
      $region34: #{forward_nchw.2} parent=31 // pred_check_branch
        %3004 = sbr.rel (%p3002) target = $region36
      $region35: #{forward_nchw.2} parent=31 // pred_region
        _
      $region36: #{forward_nchw.2} parent=31 // pred_fallthru
        _
    $region32: #{forward_nchw.2} parent=5 // pred_fallthru
      _
    %p3005 = scmp.le.s32.totalorder 2, %s9
    // Predicated region
    $region37: #{forward_nchw.2} parent=5 // pred_check
      %p3006 = pneg %p3005
    $region38: #{forward_nchw.2} parent=5 // pred_check_branch
      %3008 = sbr.rel (%p3006) target = $region40
    $region39: #{forward_nchw.2} parent=5 // pred_region
      %s3009 = ssub.s32 %s9, 2
      // Predicated region
      $region41: #{forward_nchw.2} parent=39 // pred_check
        %p3010 = pneg %p106
      $region42: #{forward_nchw.2} parent=39 // pred_check_branch
        %3012 = sbr.rel (%p3010) target = $region44
      $region43: #{forward_nchw.2} parent=39 // pred_region
        %p3013 = scmp.lt.s32.totalorder %s15, 1
        %s3014 = scalar_select %p3013, %s15, 1
        %s3015 = smul.addr %s3014, 32
        %s3016 = smul.addr %s3015, 8
        %s3017 = scalar_lea.vmem %s3, %s3016
      $region44: #{forward_nchw.2} parent=39 // pred_fallthru
        _
    $region40: #{forward_nchw.2} parent=5 // pred_fallthru
      _
  $region6: #{forward_nchw.2} parent=0 // loop_footer
    %s13 = sadd.s32 1, %s9
  $region7: #{forward_nchw.2} parent=0 // loop_footer_branch
    %8 = sbr.rel target = $region3
  $region8: #{forward_nchw.2} parent=0 // loop_exit
    _

</llo_original>
